<compile_context>
chip_gen: v7x
topology: tpu7x:2x2x1
jax: 0.10.0
libtpu: 0.0.40
codegen_flags: <defaults>
</compile_context>

<pallas_src>
import functools
import math

import jax
import jax.numpy as jnp
from jax.experimental import pallas as pl
from jax.experimental.pallas import tpu as pltpu
from jax.scipy.linalg import block_diag

PHI = 3.1415926 * 0.3  # Cosine / Cosine_fMRI phase (bias=False, data_dim=-1 -> A=1)
_VMEM_LIMIT_BYTES = 32 * 1024 * 1024  # explicit scoped-VMEM budget (fits v5e..v7x)


# ----------------------------------------------------------------------------
# In-kernel math helpers (traced inside the Pallas kernel body)
# ----------------------------------------------------------------------------
def _elu(x):
    # exp(min(x,0)) keeps the unselected branch finite.
    return jnp.where(x > 0.0, x, jnp.exp(jnp.minimum(x, 0.0)) - 1.0)


def _project_logmap0_scale(sumsq, c):
    """Multiplicative scale implementing project()+logmap0() given sum-of-squares.

    TODO(synk): project/logmap0 are not defined in the provided source; this is
    the standard HGCN Poincare-ball definition (float32 projection eps = 4e-3).
    """
    min_norm = 1e-15
    sqrt_c = math.sqrt(c)
    maxnorm = (1.0 - 4e-3) / sqrt_c
    norm = jnp.maximum(jnp.sqrt(sumsq), min_norm)
    # ||proj(x)|| == clamp(||x||, ., maxnorm) -> no second norm computation.
    proj_scale = jnp.where(norm > maxnorm, maxnorm / norm, 1.0)
    p_norm = jnp.minimum(norm, maxnorm)
    z = jnp.clip(sqrt_c * p_norm, -1.0 + 1e-7, 1.0 - 1e-7)
    artanh = 0.5 * (jnp.log(1.0 + z) - jnp.log(1.0 - z))  # exact, no approx recip
    return proj_scale * artanh / (sqrt_c * p_norm)


def _masked_softmax(e, mask):
    # NOTE: fully-masked rows give uniform weights over the N in-batch columns
    # (PyTorch's block-diag formulation would be uniform over B*N columns).
    att = jnp.where(mask, e, jnp.float32(-9e15))
    att = att - jnp.max(att, axis=-1, keepdims=True)
    p = jnp.exp(att)
    return p / jnp.sum(p, axis=-1, keepdims=True)  # exact divide (numerics)


def _gat_module_body(x, adj, w_all, a1_bd, a2t_bd, wo, a1o, a2o_t, seg, seg_t,
                     *, c, a_para, alpha, nheads, fout):
    """Full Module_DTI / Module_fMRI core for one batch element.

    x: [N, Fin], adj: [N, N] -> [N, F].
    """
    n = x.shape[0]
    mask = jnp.abs(adj) > 0.0  # module applies abs() before the GAT layers

    # All heads in one wide MXU matmul: W_all = [W_0 | W_1 | W_2 | W_3].
    wh_all = jnp.dot(x, w_all, preferred_element_type=jnp.float32)        # [N, 4F]
    # Attention logit terms for all heads (block-diag packed a vectors).
    wh1 = jnp.dot(wh_all, a1_bd, preferred_element_type=jnp.float32)      # [N, H]
    wh2t = jax.lax.dot_general(a2t_bd, wh_all, (((1,), (1,)), ((), ())),
                               preferred_element_type=jnp.float32)        # [H, N]

    # Stack the per-head logits along sublanes so LeakyReLU / mask / softmax
    # (max, exp, sum, divide) each issue ONCE for all heads.
    e_stk = jnp.concatenate(
        [wh1[:, h:h + 1] + wh2t[h:h + 1, :] for h in range(nheads)], axis=0)  # [H*N, N]
    mask_stk = jnp.concatenate([mask] * nheads, axis=0)                       # [H*N, N]
    e_stk = jnp.where(e_stk > 0.0, e_stk, alpha * e_stk)                      # LeakyReLU
    att_stk = _masked_softmax(e_stk, mask_stk)                                # [H*N, N]
    # TODO(synk): attention dropout (p=0.5) implemented in eval mode (identity).

    # Per-head (att @ Wh), concatenated into one [N, 4F] slab.
    hp_cat = jnp.concatenate(
        [jnp.dot(att_stk[h * n:(h + 1) * n, :],
                 wh_all[:, h * fout:(h + 1) * fout],
                 preferred_element_type=jnp.float32)
         for h in range(nheads)], axis=1)                                     # [N, 4F]

    # FKernel (project + logmap0) for all heads at once: per-head sum-of-squares
    # via a segment-indicator matmul; per-head scale broadcast back via seg^T.
    sumsq = jnp.dot(hp_cat * hp_cat, seg, preferred_element_type=jnp.float32)  # [N, H]
    hp_cat = hp_cat * jnp.dot(_project_logmap0_scale(sumsq, c), seg_t,
                              preferred_element_type=jnp.float32)              # [N, 4F]

    # concat=True branch activation (elementwise on the whole slab).
    head_cat = _elu(hp_cat) + a_para * jnp.cos(hp_cat + PHI)
    # TODO(synk): feature dropout (p=0.5) on the concat is identity (eval mode).

    # ONE matmul onto W_out (instead of 4 accumulate matmuls).
    wh_o = jnp.dot(head_cat, wo, preferred_element_type=jnp.float32)      # [N, F]

    # out_att layer (concat=False).
    wh1o = jnp.dot(wh_o, a1o, preferred_element_type=jnp.float32)         # [N, 1]
    wh2ot = jax.lax.dot_general(a2o_t, wh_o, (((1,), (1,)), ((), ())),
                                preferred_element_type=jnp.float32)       # [1, N]
    e_o = wh1o + wh2ot
    e_o = jnp.where(e_o > 0.0, e_o, alpha * e_o)
    att_o = _masked_softmax(e_o, mask)
    x1 = jnp.dot(att_o, wh_o, preferred_element_type=jnp.float32)         # [N, F]

    # out_att's own fkernel (concat=False path) then the module-level fkernel.
    x1 = x1 * _project_logmap0_scale(jnp.sum(x1 * x1, axis=-1, keepdims=True), c)
    x1 = x1 * _project_logmap0_scale(jnp.sum(x1 * x1, axis=-1, keepdims=True), c)
    return _elu(x1) + a_para * jnp.cos(x1 + PHI)


# ----------------------------------------------------------------------------
# Fused Pallas kernel: DTI module + fMRI module + couple() per batch element.
# ----------------------------------------------------------------------------
def _coupling_kernel(
        dti_x_ref, adj_dti_ref, fmri_x_ref, adj_fmri_ref,
        wd_ref, a1d_ref, a2td_ref, wod_ref, a1od_ref, a2od_ref,
        wf_ref, a1f_ref, a2tf_ref, wof_ref, a1of_ref, a2of_ref,
        seg_ref, segt_ref,
        coupled_ref, dti_out_ref, fmri_out_ref,
        *, c, a_dti, a_fmri, alpha, nheads, fout):
    seg = seg_ref[...]
    seg_t = segt_ref[...]

    data_dti = _gat_module_body(
        dti_x_ref[0], adj_dti_ref[0], wd_ref[...], a1d_ref[...], a2td_ref[...],
        wod_ref[...], a1od_ref[...], a2od_ref[...], seg, seg_t,
        c=c, a_para=a_dti, alpha=alpha, nheads=nheads, fout=fout)

    data_fmri = _gat_module_body(
        fmri_x_ref[0], adj_fmri_ref[0], wf_ref[...], a1f_ref[...], a2tf_ref[...],
        wof_ref[...], a1of_ref[...], a2of_ref[...], seg, seg_t,
        c=c, a_para=a_fmri, alpha=alpha, nheads=nheads, fout=fout)

    # couple(): L2-normalize (PyTorch adds eps AFTER the norm) and correlate.
    eps = 1e-7
    fn = data_fmri / (jnp.sqrt(jnp.sum(data_fmri * data_fmri, axis=-1,
                                       keepdims=True)) + eps)
    dn = data_dti / (jnp.sqrt(jnp.sum(data_dti * data_dti, axis=-1,
                                      keepdims=True)) + eps)
    coupled_ref[0] = jax.lax.dot_general(fn, dn, (((1,), (1,)), ((), ())),
                                         preferred_element_type=jnp.float32)
    dti_out_ref[0] = dn
    fmri_out_ref[0] = fn


# ----------------------------------------------------------------------------
# Host-side glue
# ----------------------------------------------------------------------------
def _pack_module_params(params, fout):
    """Pack a module's GAT head weights into wide / block-diag matrices."""
    heads = params["heads"]
    w_all = jnp.concatenate([w for (w, _) in heads], axis=1)           # [Fin, H*F]
    a1_bd = block_diag(*[a[:fout, :] for (_, a) in heads])             # [H*F, H]
    a2t_bd = block_diag(*[a[fout:, :].T for (_, a) in heads])          # [H, H*F]
    w_out, a_out = params["out"]
    a1o = a_out[:fout, :]                                              # [F, 1]
    a2o_t = a_out[fout:, :].T                                          # [1, F]
    return (w_all, a1_bd, a2t_bd, w_out, a1o, a2o_t)


def preprocess_fmri(data):
    """data: [B, T, N] -> (sparse adj [B,N,N], fea [B,N,N]) as in `preprocess`."""
    def one(d):
        pc = jnp.corrcoef(d.T)
        pc = jnp.nan_to_num(pc)
        pc = jnp.abs(pc)
        flat = pc.reshape(-1)
        k = int(flat.shape[0] * 0.5)
        threshold = jnp.sort(flat)[-k]
        sparse = jnp.where(pc >= threshold, pc, 0.0)
        return sparse.astype(jnp.float32), pc.astype(jnp.float32)
    return jax.vmap(one)(data)


def coupling_forward(DTI, adj_DTI, fMRI, params, *, c, a_DTI, a_fMRI, alpha=0.1):
    B, N, fin_d = DTI.shape
    heads = params["dti"]["heads"]
    nheads = len(heads)
    F = heads[0][0].shape[1]

    # fMRI preprocessing (corrcoef + top-k threshold) stays in plain JAX.
    adj_fmri, fea_fmri = preprocess_fmri(fMRI)
    fin_f = fea_fmri.shape[-1]

    wd = _pack_module_params(params["dti"], F)
    wf = _pack_module_params(params["fmri"], F)
    seg = block_diag(*([jnp.ones((F, 1), jnp.float32)] * nheads))      # [H*F, H]
    seg_t = seg.T                                                      # [H, H*F]

    kern = functools.partial(_coupling_kernel, c=c, a_dti=a_DTI, a_fmri=a_fMRI,
                             alpha=alpha, nheads=nheads, fout=F)

    batch3 = lambda shp: pl.BlockSpec((1,) + shp, lambda b: (b, 0, 0))
    const2 = lambda shp: pl.BlockSpec(shp, lambda b: (0, 0))

    coupled, dti_n, fmri_n = pl.pallas_call(
        kern,
        out_shape=(jax.ShapeDtypeStruct((B, N, N), jnp.float32),
                   jax.ShapeDtypeStruct((B, N, F), jnp.float32),
                   jax.ShapeDtypeStruct((B, N, F), jnp.float32)),
        grid=(B,),
        in_specs=[
            batch3((N, fin_d)), batch3((N, N)),
            batch3((N, fin_f)), batch3((N, N)),
            const2(wd[0].shape), const2(wd[1].shape), const2(wd[2].shape),
            const2(wd[3].shape), const2(wd[4].shape), const2(wd[5].shape),
            const2(wf[0].shape), const2(wf[1].shape), const2(wf[2].shape),
            const2(wf[3].shape), const2(wf[4].shape), const2(wf[5].shape),
            const2(seg.shape), const2(seg_t.shape),
        ],
        out_specs=(batch3((N, N)), batch3((N, F)), batch3((N, F))),
        compiler_params=pltpu.CompilerParams(
            dimension_semantics=("parallel",),      # v7x: shard batch over 2 TCs
            vmem_limit_bytes=_VMEM_LIMIT_BYTES),
    )(DTI.astype(jnp.float32), adj_DTI.astype(jnp.float32),
      fea_fmri, adj_fmri, *wd, *wf, seg, seg_t)

    return coupled, dti_n, fmri_n, adj_DTI, adj_fmri


# ----------------------------------------------------------------------------
# Deterministic parameter init (xavier_uniform, gain=1.414 as in the module)
# ----------------------------------------------------------------------------
def xavier_uniform(key, shape, gain=1.414):
    fan_in, fan_out = shape[0], shape[1]
    bound = gain * math.sqrt(6.0 / (fan_in + fan_out))
    return jax.random.uniform(key, shape, jnp.float32, -bound, bound)


def init_gat_module_params(key, nfeat, nhid, nheads=4):
    keys = jax.random.split(key, 2 * nheads + 2)
    heads = []
    for i in range(nheads):
        W = xavier_uniform(keys[2 * i], (nfeat, nhid))
        a = xavier_uniform(keys[2 * i + 1], (2 * nhid, 1))
        heads.append((W, a))
    W_out = xavier_uniform(keys[-2], (nhid * nheads, nhid))
    a_out = xavier_uniform(keys[-1], (2 * nhid, 1))
    return {"heads": heads, "out": (W_out, a_out)}


# ----------------------------------------------------------------------------
# Main
# ----------------------------------------------------------------------------
if __name__ == "__main__":
    key = jax.random.PRNGKey(0)
    k_dti, k_fmri, k_dti_dat, k_adj, k_fmri_dat = jax.random.split(key, 5)

    # Small shapes: in_channels = N nodes = 8, feature_size = 16, B = 2, T = 16.
    B, N, T = 2, 8, 16
    in_channels = N
    feature_size = 16
    c = 1.0
    a_fMRI, a_DTI = 0.5, 0.5

    params = {
        "dti": init_gat_module_params(k_dti, in_channels * 3, feature_size),
        "fmri": init_gat_module_params(k_fmri, in_channels, feature_size),
    }

    DTI = jax.random.normal(k_dti_dat, (B, N, in_channels * 3), jnp.float32)
    adj_DTI = jax.random.normal(k_adj, (B, N, N), jnp.float32)
    fMRI = jax.random.normal(k_fmri_dat, (B, T, N), jnp.float32)

    fwd = jax.jit(functools.partial(coupling_forward, c=c, a_DTI=a_DTI, a_fMRI=a_fMRI))
    coupled, data_DTI, data_fMRI, adj_DTI_out, adj_fMRI = fwd(
        DTI, adj_DTI, fMRI, params)

    jax.block_until_ready((coupled, data_DTI, data_fMRI, adj_DTI_out, adj_fMRI))
    assert coupled.shape == (B, N, N)
    assert data_DTI.shape == (B, N, feature_size)
    assert data_fMRI.shape == (B, N, feature_size)
    assert adj_fMRI.shape == (B, N, N)
    print("KERNEL_OK")
</pallas_src>

<mosaic_0001>
module attributes {stable_mosaic.version = 11 : i64} {
  func.func @_coupling_kernel(%arg0: i32, %arg1: memref<1x8x24xf32, #tpu.memory_space<vmem>>, %arg2: memref<1x8x8xf32, #tpu.memory_space<vmem>>, %arg3: memref<1x8x8xf32, #tpu.memory_space<vmem>>, %arg4: memref<1x8x8xf32, #tpu.memory_space<vmem>>, %arg5: memref<24x64xf32, #tpu.memory_space<vmem>>, %arg6: memref<64x4xf32, #tpu.memory_space<vmem>>, %arg7: memref<4x64xf32, #tpu.memory_space<vmem>>, %arg8: memref<64x16xf32, #tpu.memory_space<vmem>>, %arg9: memref<16x1xf32, #tpu.memory_space<vmem>>, %arg10: memref<1x16xf32, #tpu.memory_space<vmem>>, %arg11: memref<8x64xf32, #tpu.memory_space<vmem>>, %arg12: memref<64x4xf32, #tpu.memory_space<vmem>>, %arg13: memref<4x64xf32, #tpu.memory_space<vmem>>, %arg14: memref<64x16xf32, #tpu.memory_space<vmem>>, %arg15: memref<16x1xf32, #tpu.memory_space<vmem>>, %arg16: memref<1x16xf32, #tpu.memory_space<vmem>>, %arg17: memref<64x4xf32, #tpu.memory_space<vmem>>, %arg18: memref<4x64xf32, #tpu.memory_space<vmem>>, %arg19: memref<1x8x8xf32, #tpu.memory_space<vmem>>, %arg20: memref<1x8x16xf32, #tpu.memory_space<vmem>>, %arg21: memref<1x8x16xf32, #tpu.memory_space<vmem>>) attributes {dimension_semantics = [#tpu.dimension_semantics<parallel>], iteration_bounds = array<i64: 2>, scalar_prefetch = 0 : i64, scratch_operands = 0 : i64, tpu.core_type = #tpu.core_type<tc>, window_params = [{transform_indices = @transform_0, window_bounds = array<i64: 1, 8, 24>}, {transform_indices = @transform_1, window_bounds = array<i64: 1, 8, 8>}, {transform_indices = @transform_2, window_bounds = array<i64: 1, 8, 8>}, {transform_indices = @transform_3, window_bounds = array<i64: 1, 8, 8>}, {pipeline_mode = #tpu.pipeline_mode<synchronous>, transform_indices = @transform_4, window_bounds = array<i64: 24, 64>}, {pipeline_mode = #tpu.pipeline_mode<synchronous>, transform_indices = @transform_5, window_bounds = array<i64: 64, 4>}, {pipeline_mode = #tpu.pipeline_mode<synchronous>, transform_indices = @transform_6, window_bounds = array<i64: 4, 64>}, {pipeline_mode = #tpu.pipeline_mode<synchronous>, transform_indices = @transform_7, window_bounds = array<i64: 64, 16>}, {pipeline_mode = #tpu.pipeline_mode<synchronous>, transform_indices = @transform_8, window_bounds = array<i64: 16, 1>}, {pipeline_mode = #tpu.pipeline_mode<synchronous>, transform_indices = @transform_9, window_bounds = array<i64: 1, 16>}, {pipeline_mode = #tpu.pipeline_mode<synchronous>, transform_indices = @transform_10, window_bounds = array<i64: 8, 64>}, {pipeline_mode = #tpu.pipeline_mode<synchronous>, transform_indices = @transform_11, window_bounds = array<i64: 64, 4>}, {pipeline_mode = #tpu.pipeline_mode<synchronous>, transform_indices = @transform_12, window_bounds = array<i64: 4, 64>}, {pipeline_mode = #tpu.pipeline_mode<synchronous>, transform_indices = @transform_13, window_bounds = array<i64: 64, 16>}, {pipeline_mode = #tpu.pipeline_mode<synchronous>, transform_indices = @transform_14, window_bounds = array<i64: 16, 1>}, {pipeline_mode = #tpu.pipeline_mode<synchronous>, transform_indices = @transform_15, window_bounds = array<i64: 1, 16>}, {pipeline_mode = #tpu.pipeline_mode<synchronous>, transform_indices = @transform_16, window_bounds = array<i64: 64, 4>}, {pipeline_mode = #tpu.pipeline_mode<synchronous>, transform_indices = @transform_17, window_bounds = array<i64: 4, 64>}, {transform_indices = @transform_18, window_bounds = array<i64: 1, 8, 8>}, {transform_indices = @transform_19, window_bounds = array<i64: 1, 8, 16>}, {transform_indices = @transform_20, window_bounds = array<i64: 1, 8, 16>}]} {
    %c0 = arith.constant 0 : index
    %c0_0 = arith.constant 0 : index
    %0 = vector.load %arg17[%c0, %c0_0] : memref<64x4xf32, #tpu.memory_space<vmem>>, vector<64x4xf32>
    %c0_1 = arith.constant 0 : index
    %c0_2 = arith.constant 0 : index
    %1 = vector.load %arg18[%c0_1, %c0_2] : memref<4x64xf32, #tpu.memory_space<vmem>>, vector<4x64xf32>
    %c0_3 = arith.constant 0 : index
    %c0_4 = arith.constant 0 : index
    %c0_5 = arith.constant 0 : index
    %2 = vector.load %arg1[%c0_3, %c0_4, %c0_5] : memref<1x8x24xf32, #tpu.memory_space<vmem>>, vector<1x8x24xf32>
    %3 = vector.shape_cast %2 : vector<1x8x24xf32> to vector<8x24xf32>
    %c0_6 = arith.constant 0 : index
    %c0_7 = arith.constant 0 : index
    %c0_8 = arith.constant 0 : index
    %4 = vector.load %arg2[%c0_6, %c0_7, %c0_8] : memref<1x8x8xf32, #tpu.memory_space<vmem>>, vector<1x8x8xf32>
    %5 = vector.shape_cast %4 : vector<1x8x8xf32> to vector<8x8xf32>
    %c0_9 = arith.constant 0 : index
    %c0_10 = arith.constant 0 : index
    %6 = vector.load %arg5[%c0_9, %c0_10] : memref<24x64xf32, #tpu.memory_space<vmem>>, vector<24x64xf32>
    %c0_11 = arith.constant 0 : index
    %c0_12 = arith.constant 0 : index
    %7 = vector.load %arg6[%c0_11, %c0_12] : memref<64x4xf32, #tpu.memory_space<vmem>>, vector<64x4xf32>
    %c0_13 = arith.constant 0 : index
    %c0_14 = arith.constant 0 : index
    %8 = vector.load %arg7[%c0_13, %c0_14] : memref<4x64xf32, #tpu.memory_space<vmem>>, vector<4x64xf32>
    %c0_15 = arith.constant 0 : index
    %c0_16 = arith.constant 0 : index
    %9 = vector.load %arg8[%c0_15, %c0_16] : memref<64x16xf32, #tpu.memory_space<vmem>>, vector<64x16xf32>
    %c0_17 = arith.constant 0 : index
    %c0_18 = arith.constant 0 : index
    %10 = vector.load %arg9[%c0_17, %c0_18] : memref<16x1xf32, #tpu.memory_space<vmem>>, vector<16x1xf32>
    %c0_19 = arith.constant 0 : index
    %c0_20 = arith.constant 0 : index
    %11 = vector.load %arg10[%c0_19, %c0_20] : memref<1x16xf32, #tpu.memory_space<vmem>>, vector<1x16xf32>
    %12 = math.absf %5 : vector<8x8xf32>
    %cst = arith.constant 0.000000e+00 : f32
    %13 = vector.broadcast %cst : f32 to vector<8x8xf32>
    %14 = arith.cmpf ogt, %12, %13 : vector<8x8xf32>
    %cst_21 = arith.constant dense<0.000000e+00> : vector<8x64xf32>
    %15 = tpu.matmul %3, %6, %cst_21 {dimension_numbers = #tpu.dot_dimension_numbers<[1], [0], [0], [1], [0, 0, 1, 1], [], []>} : vector<8x24xf32>, vector<24x64xf32>, vector<8x64xf32> -> vector<8x64xf32>
    %cst_22 = arith.constant dense<0.000000e+00> : vector<8x4xf32>
    %16 = tpu.matmul %15, %7, %cst_22 {dimension_numbers = #tpu.dot_dimension_numbers<[1], [0], [0], [1], [0, 0, 1, 1], [], []>} : vector<8x64xf32>, vector<64x4xf32>, vector<8x4xf32> -> vector<8x4xf32>
    %cst_23 = arith.constant dense<0.000000e+00> : vector<4x8xf32>
    %17 = tpu.matmul %8, %15, %cst_23 {dimension_numbers = #tpu.dot_dimension_numbers<[1], [1], [0], [0], [0, 0, 1, 0], [], []>} : vector<4x64xf32>, vector<8x64xf32>, vector<4x8xf32> -> vector<4x8xf32>
    %18 = vector.extract_strided_slice %16 {offsets = [0, 0], sizes = [8, 1], strides = [1, 1]} : vector<8x4xf32> to vector<8x1xf32>
    %19 = vector.extract_strided_slice %17 {offsets = [0, 0], sizes = [1, 8], strides = [1, 1]} : vector<4x8xf32> to vector<1x8xf32>
    %20 = vector.broadcast %18 : vector<8x1xf32> to vector<8x8xf32>
    %21 = vector.broadcast %19 : vector<1x8xf32> to vector<8x8xf32>
    %22 = arith.addf %20, %21 : vector<8x8xf32>
    %23 = vector.extract_strided_slice %16 {offsets = [0, 1], sizes = [8, 1], strides = [1, 1]} : vector<8x4xf32> to vector<8x1xf32>
    %24 = vector.extract_strided_slice %17 {offsets = [1, 0], sizes = [1, 8], strides = [1, 1]} : vector<4x8xf32> to vector<1x8xf32>
    %25 = vector.broadcast %23 : vector<8x1xf32> to vector<8x8xf32>
    %26 = vector.broadcast %24 : vector<1x8xf32> to vector<8x8xf32>
    %27 = arith.addf %25, %26 : vector<8x8xf32>
    %28 = vector.extract_strided_slice %16 {offsets = [0, 2], sizes = [8, 1], strides = [1, 1]} : vector<8x4xf32> to vector<8x1xf32>
    %29 = vector.extract_strided_slice %17 {offsets = [2, 0], sizes = [1, 8], strides = [1, 1]} : vector<4x8xf32> to vector<1x8xf32>
    %30 = vector.broadcast %28 : vector<8x1xf32> to vector<8x8xf32>
    %31 = vector.broadcast %29 : vector<1x8xf32> to vector<8x8xf32>
    %32 = arith.addf %30, %31 : vector<8x8xf32>
    %33 = vector.extract_strided_slice %16 {offsets = [0, 3], sizes = [8, 1], strides = [1, 1]} : vector<8x4xf32> to vector<8x1xf32>
    %34 = vector.extract_strided_slice %17 {offsets = [3, 0], sizes = [1, 8], strides = [1, 1]} : vector<4x8xf32> to vector<1x8xf32>
    %35 = vector.broadcast %33 : vector<8x1xf32> to vector<8x8xf32>
    %36 = vector.broadcast %34 : vector<1x8xf32> to vector<8x8xf32>
    %37 = arith.addf %35, %36 : vector<8x8xf32>
    %38 = tpu.concatenate %22, %27, %32, %37 in 0 : vector<8x8xf32>, vector<8x8xf32>, vector<8x8xf32>, vector<8x8xf32> -> vector<32x8xf32>
    %39 = tpu.concatenate %14, %14, %14, %14 in 0 : vector<8x8xi1>, vector<8x8xi1>, vector<8x8xi1>, vector<8x8xi1> -> vector<32x8xi1>
    %cst_24 = arith.constant 0.000000e+00 : f32
    %40 = vector.broadcast %cst_24 : f32 to vector<32x8xf32>
    %41 = arith.cmpf ogt, %38, %40 : vector<32x8xf32>
    %cst_25 = arith.constant 1.000000e-01 : f32
    %42 = vector.broadcast %cst_25 : f32 to vector<32x8xf32>
    %43 = arith.mulf %42, %38 : vector<32x8xf32>
    %44 = arith.select %41, %38, %43 : vector<32x8xi1>, vector<32x8xf32>
    %cst_26 = arith.constant -9.000000e+15 : f32
    %45 = vector.broadcast %cst_26 : f32 to vector<32x8xf32>
    %46 = arith.select %39, %44, %45 : vector<32x8xi1>, vector<32x8xf32>
    %cst_27 = arith.constant dense<0xFF800000> : vector<32xf32>
    %47 = vector.multi_reduction <maximumf>, %46, %cst_27 [1] : vector<32x8xf32> to vector<32xf32>
    %48 = vector.shape_cast %47 : vector<32xf32> to vector<32x1xf32>
    %49 = vector.broadcast %48 : vector<32x1xf32> to vector<32x8xf32>
    %50 = arith.subf %46, %49 : vector<32x8xf32>
    %51 = math.exp %50 : vector<32x8xf32>
    %cst_28 = arith.constant dense<0.000000e+00> : vector<32xf32>
    %52 = vector.multi_reduction <add>, %51, %cst_28 [1] : vector<32x8xf32> to vector<32xf32>
    %53 = vector.shape_cast %52 : vector<32xf32> to vector<32x1xf32>
    %54 = vector.broadcast %53 : vector<32x1xf32> to vector<32x8xf32>
    %55 = arith.divf %51, %54 : vector<32x8xf32>
    %56 = vector.extract_strided_slice %55 {offsets = [0, 0], sizes = [8, 8], strides = [1, 1]} : vector<32x8xf32> to vector<8x8xf32>
    %57 = vector.extract_strided_slice %15 {offsets = [0, 0], sizes = [8, 16], strides = [1, 1]} : vector<8x64xf32> to vector<8x16xf32>
    %cst_29 = arith.constant dense<0.000000e+00> : vector<8x16xf32>
    %58 = tpu.matmul %56, %57, %cst_29 {dimension_numbers = #tpu.dot_dimension_numbers<[1], [0], [0], [1], [0, 0, 1, 1], [], []>} : vector<8x8xf32>, vector<8x16xf32>, vector<8x16xf32> -> vector<8x16xf32>
    %59 = vector.extract_strided_slice %55 {offsets = [8, 0], sizes = [8, 8], strides = [1, 1]} : vector<32x8xf32> to vector<8x8xf32>
    %60 = vector.extract_strided_slice %15 {offsets = [0, 16], sizes = [8, 16], strides = [1, 1]} : vector<8x64xf32> to vector<8x16xf32>
    %cst_30 = arith.constant dense<0.000000e+00> : vector<8x16xf32>
    %61 = tpu.matmul %59, %60, %cst_30 {dimension_numbers = #tpu.dot_dimension_numbers<[1], [0], [0], [1], [0, 0, 1, 1], [], []>} : vector<8x8xf32>, vector<8x16xf32>, vector<8x16xf32> -> vector<8x16xf32>
    %62 = vector.extract_strided_slice %55 {offsets = [16, 0], sizes = [8, 8], strides = [1, 1]} : vector<32x8xf32> to vector<8x8xf32>
    %63 = vector.extract_strided_slice %15 {offsets = [0, 32], sizes = [8, 16], strides = [1, 1]} : vector<8x64xf32> to vector<8x16xf32>
    %cst_31 = arith.constant dense<0.000000e+00> : vector<8x16xf32>
    %64 = tpu.matmul %62, %63, %cst_31 {dimension_numbers = #tpu.dot_dimension_numbers<[1], [0], [0], [1], [0, 0, 1, 1], [], []>} : vector<8x8xf32>, vector<8x16xf32>, vector<8x16xf32> -> vector<8x16xf32>
    %65 = vector.extract_strided_slice %55 {offsets = [24, 0], sizes = [8, 8], strides = [1, 1]} : vector<32x8xf32> to vector<8x8xf32>
    %66 = vector.extract_strided_slice %15 {offsets = [0, 48], sizes = [8, 16], strides = [1, 1]} : vector<8x64xf32> to vector<8x16xf32>
    %cst_32 = arith.constant dense<0.000000e+00> : vector<8x16xf32>
    %67 = tpu.matmul %65, %66, %cst_32 {dimension_numbers = #tpu.dot_dimension_numbers<[1], [0], [0], [1], [0, 0, 1, 1], [], []>} : vector<8x8xf32>, vector<8x16xf32>, vector<8x16xf32> -> vector<8x16xf32>
    %68 = tpu.concatenate %58, %61, %64, %67 in 1 : vector<8x16xf32>, vector<8x16xf32>, vector<8x16xf32>, vector<8x16xf32> -> vector<8x64xf32>
    %69 = arith.mulf %68, %68 : vector<8x64xf32>
    %cst_33 = arith.constant dense<0.000000e+00> : vector<8x4xf32>
    %70 = tpu.matmul %69, %0, %cst_33 {dimension_numbers = #tpu.dot_dimension_numbers<[1], [0], [0], [1], [0, 0, 1, 1], [], []>} : vector<8x64xf32>, vector<64x4xf32>, vector<8x4xf32> -> vector<8x4xf32>
    %71 = math.sqrt %70 : vector<8x4xf32>
    %cst_34 = arith.constant 1.000000e-15 : f32
    %72 = vector.broadcast %cst_34 : f32 to vector<8x4xf32>
    %73 = arith.maximumf %71, %72 : vector<8x4xf32>
    %cst_35 = arith.constant 0.995999991 : f32
    %74 = vector.broadcast %cst_35 : f32 to vector<8x4xf32>
    %75 = arith.cmpf ogt, %73, %74 : vector<8x4xf32>
    %cst_36 = arith.constant 0.995999991 : f32
    %76 = vector.broadcast %cst_36 : f32 to vector<8x4xf32>
    %77 = arith.divf %76, %73 : vector<8x4xf32>
    %cst_37 = arith.constant 1.000000e+00 : f32
    %78 = vector.broadcast %cst_37 : f32 to vector<8x4xf32>
    %79 = arith.select %75, %77, %78 : vector<8x4xi1>, vector<8x4xf32>
    %cst_38 = arith.constant 0.995999991 : f32
    %80 = vector.broadcast %cst_38 : f32 to vector<8x4xf32>
    %81 = arith.minimumf %73, %80 : vector<8x4xf32>
    %cst_39 = arith.constant 1.000000e+00 : f32
    %82 = vector.broadcast %cst_39 : f32 to vector<8x4xf32>
    %83 = arith.mulf %82, %81 : vector<8x4xf32>
    %cst_40 = arith.constant -0.99999988 : f32
    %cst_41 = arith.constant 0.99999988 : f32
    %84 = vector.broadcast %cst_40 : f32 to vector<8x4xf32>
    %85 = arith.maximumf %84, %83 : vector<8x4xf32>
    %86 = vector.broadcast %cst_41 : f32 to vector<8x4xf32>
    %87 = arith.minimumf %86, %85 : vector<8x4xf32>
    %cst_42 = arith.constant 1.000000e+00 : f32
    %88 = vector.broadcast %cst_42 : f32 to vector<8x4xf32>
    %89 = arith.addf %88, %87 : vector<8x4xf32>
    %90 = math.log %89 : vector<8x4xf32>
    %cst_43 = arith.constant 1.000000e+00 : f32
    %91 = vector.broadcast %cst_43 : f32 to vector<8x4xf32>
    %92 = arith.subf %91, %87 : vector<8x4xf32>
    %93 = math.log %92 : vector<8x4xf32>
    %94 = arith.subf %90, %93 : vector<8x4xf32>
    %cst_44 = arith.constant 5.000000e-01 : f32
    %95 = vector.broadcast %cst_44 : f32 to vector<8x4xf32>
    %96 = arith.mulf %95, %94 : vector<8x4xf32>
    %97 = arith.mulf %79, %96 : vector<8x4xf32>
    %cst_45 = arith.constant 1.000000e+00 : f32
    %98 = vector.broadcast %cst_45 : f32 to vector<8x4xf32>
    %99 = arith.mulf %98, %81 : vector<8x4xf32>
    %100 = arith.divf %97, %99 : vector<8x4xf32>
    %cst_46 = arith.constant dense<0.000000e+00> : vector<8x64xf32>
    %101 = tpu.matmul %100, %1, %cst_46 {dimension_numbers = #tpu.dot_dimension_numbers<[1], [0], [0], [1], [0, 0, 1, 1], [], []>} : vector<8x4xf32>, vector<4x64xf32>, vector<8x64xf32> -> vector<8x64xf32>
    %102 = arith.mulf %68, %101 : vector<8x64xf32>
    %cst_47 = arith.constant 0.000000e+00 : f32
    %103 = vector.broadcast %cst_47 : f32 to vector<8x64xf32>
    %104 = arith.cmpf ogt, %102, %103 : vector<8x64xf32>
    %cst_48 = arith.constant 0.000000e+00 : f32
    %105 = vector.broadcast %cst_48 : f32 to vector<8x64xf32>
    %106 = arith.minimumf %102, %105 : vector<8x64xf32>
    %107 = math.exp %106 : vector<8x64xf32>
    %cst_49 = arith.constant 1.000000e+00 : f32
    %108 = vector.broadcast %cst_49 : f32 to vector<8x64xf32>
    %109 = arith.subf %107, %108 : vector<8x64xf32>
    %110 = arith.select %104, %102, %109 : vector<8x64xi1>, vector<8x64xf32>
    %cst_50 = arith.constant 0.942477762 : f32
    %111 = vector.broadcast %cst_50 : f32 to vector<8x64xf32>
    %112 = arith.addf %102, %111 : vector<8x64xf32>
    %113 = math.cos %112 : vector<8x64xf32>
    %cst_51 = arith.constant 5.000000e-01 : f32
    %114 = vector.broadcast %cst_51 : f32 to vector<8x64xf32>
    %115 = arith.mulf %114, %113 : vector<8x64xf32>
    %116 = arith.addf %110, %115 : vector<8x64xf32>
    %cst_52 = arith.constant dense<0.000000e+00> : vector<8x16xf32>
    %117 = tpu.matmul %116, %9, %cst_52 {dimension_numbers = #tpu.dot_dimension_numbers<[1], [0], [0], [1], [0, 0, 1, 1], [], []>} : vector<8x64xf32>, vector<64x16xf32>, vector<8x16xf32> -> vector<8x16xf32>
    %cst_53 = arith.constant dense<0.000000e+00> : vector<8x1xf32>
    %118 = tpu.matmul %117, %10, %cst_53 {dimension_numbers = #tpu.dot_dimension_numbers<[1], [0], [0], [1], [0, 0, 1, 1], [], []>} : vector<8x16xf32>, vector<16x1xf32>, vector<8x1xf32> -> vector<8x1xf32>
    %cst_54 = arith.constant dense<0.000000e+00> : vector<1x8xf32>
    %119 = tpu.matmul %11, %117, %cst_54 {dimension_numbers = #tpu.dot_dimension_numbers<[1], [1], [0], [0], [0, 0, 1, 0], [], []>} : vector<1x16xf32>, vector<8x16xf32>, vector<1x8xf32> -> vector<1x8xf32>
    %120 = vector.broadcast %118 : vector<8x1xf32> to vector<8x8xf32>
    %121 = vector.broadcast %119 : vector<1x8xf32> to vector<8x8xf32>
    %122 = arith.addf %120, %121 : vector<8x8xf32>
    %cst_55 = arith.constant 0.000000e+00 : f32
    %123 = vector.broadcast %cst_55 : f32 to vector<8x8xf32>
    %124 = arith.cmpf ogt, %122, %123 : vector<8x8xf32>
    %cst_56 = arith.constant 1.000000e-01 : f32
    %125 = vector.broadcast %cst_56 : f32 to vector<8x8xf32>
    %126 = arith.mulf %125, %122 : vector<8x8xf32>
    %127 = arith.select %124, %122, %126 : vector<8x8xi1>, vector<8x8xf32>
    %cst_57 = arith.constant -9.000000e+15 : f32
    %128 = vector.broadcast %cst_57 : f32 to vector<8x8xf32>
    %129 = arith.select %14, %127, %128 : vector<8x8xi1>, vector<8x8xf32>
    %cst_58 = arith.constant dense<0xFF800000> : vector<8xf32>
    %130 = vector.multi_reduction <maximumf>, %129, %cst_58 [1] : vector<8x8xf32> to vector<8xf32>
    %131 = vector.shape_cast %130 : vector<8xf32> to vector<8x1xf32>
    %132 = vector.broadcast %131 : vector<8x1xf32> to vector<8x8xf32>
    %133 = arith.subf %129, %132 : vector<8x8xf32>
    %134 = math.exp %133 : vector<8x8xf32>
    %cst_59 = arith.constant dense<0.000000e+00> : vector<8xf32>
    %135 = vector.multi_reduction <add>, %134, %cst_59 [1] : vector<8x8xf32> to vector<8xf32>
    %136 = vector.shape_cast %135 : vector<8xf32> to vector<8x1xf32>
    %137 = vector.broadcast %136 : vector<8x1xf32> to vector<8x8xf32>
    %138 = arith.divf %134, %137 : vector<8x8xf32>
    %cst_60 = arith.constant dense<0.000000e+00> : vector<8x16xf32>
    %139 = tpu.matmul %138, %117, %cst_60 {dimension_numbers = #tpu.dot_dimension_numbers<[1], [0], [0], [1], [0, 0, 1, 1], [], []>} : vector<8x8xf32>, vector<8x16xf32>, vector<8x16xf32> -> vector<8x16xf32>
    %140 = arith.mulf %139, %139 : vector<8x16xf32>
    %cst_61 = arith.constant dense<0.000000e+00> : vector<8xf32>
    %141 = vector.multi_reduction <add>, %140, %cst_61 [1] : vector<8x16xf32> to vector<8xf32>
    %142 = vector.shape_cast %141 : vector<8xf32> to vector<8x1xf32>
    %143 = math.sqrt %142 : vector<8x1xf32>
    %cst_62 = arith.constant 1.000000e-15 : f32
    %144 = vector.broadcast %cst_62 : f32 to vector<8x1xf32>
    %145 = arith.maximumf %143, %144 : vector<8x1xf32>
    %cst_63 = arith.constant 0.995999991 : f32
    %146 = vector.broadcast %cst_63 : f32 to vector<8x1xf32>
    %147 = arith.cmpf ogt, %145, %146 : vector<8x1xf32>
    %cst_64 = arith.constant 0.995999991 : f32
    %148 = vector.broadcast %cst_64 : f32 to vector<8x1xf32>
    %149 = arith.divf %148, %145 : vector<8x1xf32>
    %cst_65 = arith.constant 1.000000e+00 : f32
    %150 = vector.broadcast %cst_65 : f32 to vector<8x1xf32>
    %151 = arith.select %147, %149, %150 : vector<8x1xi1>, vector<8x1xf32>
    %cst_66 = arith.constant 0.995999991 : f32
    %152 = vector.broadcast %cst_66 : f32 to vector<8x1xf32>
    %153 = arith.minimumf %145, %152 : vector<8x1xf32>
    %cst_67 = arith.constant 1.000000e+00 : f32
    %154 = vector.broadcast %cst_67 : f32 to vector<8x1xf32>
    %155 = arith.mulf %154, %153 : vector<8x1xf32>
    %cst_68 = arith.constant -0.99999988 : f32
    %cst_69 = arith.constant 0.99999988 : f32
    %156 = vector.broadcast %cst_68 : f32 to vector<8x1xf32>
    %157 = arith.maximumf %156, %155 : vector<8x1xf32>
    %158 = vector.broadcast %cst_69 : f32 to vector<8x1xf32>
    %159 = arith.minimumf %158, %157 : vector<8x1xf32>
    %cst_70 = arith.constant 1.000000e+00 : f32
    %160 = vector.broadcast %cst_70 : f32 to vector<8x1xf32>
    %161 = arith.addf %160, %159 : vector<8x1xf32>
    %162 = math.log %161 : vector<8x1xf32>
    %cst_71 = arith.constant 1.000000e+00 : f32
    %163 = vector.broadcast %cst_71 : f32 to vector<8x1xf32>
    %164 = arith.subf %163, %159 : vector<8x1xf32>
    %165 = math.log %164 : vector<8x1xf32>
    %166 = arith.subf %162, %165 : vector<8x1xf32>
    %cst_72 = arith.constant 5.000000e-01 : f32
    %167 = vector.broadcast %cst_72 : f32 to vector<8x1xf32>
    %168 = arith.mulf %167, %166 : vector<8x1xf32>
    %169 = arith.mulf %151, %168 : vector<8x1xf32>
    %cst_73 = arith.constant 1.000000e+00 : f32
    %170 = vector.broadcast %cst_73 : f32 to vector<8x1xf32>
    %171 = arith.mulf %170, %153 : vector<8x1xf32>
    %172 = arith.divf %169, %171 : vector<8x1xf32>
    %173 = vector.broadcast %172 : vector<8x1xf32> to vector<8x16xf32>
    %174 = arith.mulf %139, %173 : vector<8x16xf32>
    %175 = arith.mulf %174, %174 : vector<8x16xf32>
    %cst_74 = arith.constant dense<0.000000e+00> : vector<8xf32>
    %176 = vector.multi_reduction <add>, %175, %cst_74 [1] : vector<8x16xf32> to vector<8xf32>
    %177 = vector.shape_cast %176 : vector<8xf32> to vector<8x1xf32>
    %178 = math.sqrt %177 : vector<8x1xf32>
    %cst_75 = arith.constant 1.000000e-15 : f32
    %179 = vector.broadcast %cst_75 : f32 to vector<8x1xf32>
    %180 = arith.maximumf %178, %179 : vector<8x1xf32>
    %cst_76 = arith.constant 0.995999991 : f32
    %181 = vector.broadcast %cst_76 : f32 to vector<8x1xf32>
    %182 = arith.cmpf ogt, %180, %181 : vector<8x1xf32>
    %cst_77 = arith.constant 0.995999991 : f32
    %183 = vector.broadcast %cst_77 : f32 to vector<8x1xf32>
    %184 = arith.divf %183, %180 : vector<8x1xf32>
    %cst_78 = arith.constant 1.000000e+00 : f32
    %185 = vector.broadcast %cst_78 : f32 to vector<8x1xf32>
    %186 = arith.select %182, %184, %185 : vector<8x1xi1>, vector<8x1xf32>
    %cst_79 = arith.constant 0.995999991 : f32
    %187 = vector.broadcast %cst_79 : f32 to vector<8x1xf32>
    %188 = arith.minimumf %180, %187 : vector<8x1xf32>
    %cst_80 = arith.constant 1.000000e+00 : f32
    %189 = vector.broadcast %cst_80 : f32 to vector<8x1xf32>
    %190 = arith.mulf %189, %188 : vector<8x1xf32>
    %cst_81 = arith.constant -0.99999988 : f32
    %cst_82 = arith.constant 0.99999988 : f32
    %191 = vector.broadcast %cst_81 : f32 to vector<8x1xf32>
    %192 = arith.maximumf %191, %190 : vector<8x1xf32>
    %193 = vector.broadcast %cst_82 : f32 to vector<8x1xf32>
    %194 = arith.minimumf %193, %192 : vector<8x1xf32>
    %cst_83 = arith.constant 1.000000e+00 : f32
    %195 = vector.broadcast %cst_83 : f32 to vector<8x1xf32>
    %196 = arith.addf %195, %194 : vector<8x1xf32>
    %197 = math.log %196 : vector<8x1xf32>
    %cst_84 = arith.constant 1.000000e+00 : f32
    %198 = vector.broadcast %cst_84 : f32 to vector<8x1xf32>
    %199 = arith.subf %198, %194 : vector<8x1xf32>
    %200 = math.log %199 : vector<8x1xf32>
    %201 = arith.subf %197, %200 : vector<8x1xf32>
    %cst_85 = arith.constant 5.000000e-01 : f32
    %202 = vector.broadcast %cst_85 : f32 to vector<8x1xf32>
    %203 = arith.mulf %202, %201 : vector<8x1xf32>
    %204 = arith.mulf %186, %203 : vector<8x1xf32>
    %cst_86 = arith.constant 1.000000e+00 : f32
    %205 = vector.broadcast %cst_86 : f32 to vector<8x1xf32>
    %206 = arith.mulf %205, %188 : vector<8x1xf32>
    %207 = arith.divf %204, %206 : vector<8x1xf32>
    %208 = vector.broadcast %207 : vector<8x1xf32> to vector<8x16xf32>
    %209 = arith.mulf %174, %208 : vector<8x16xf32>
    %cst_87 = arith.constant 0.000000e+00 : f32
    %210 = vector.broadcast %cst_87 : f32 to vector<8x16xf32>
    %211 = arith.cmpf ogt, %209, %210 : vector<8x16xf32>
    %cst_88 = arith.constant 0.000000e+00 : f32
    %212 = vector.broadcast %cst_88 : f32 to vector<8x16xf32>
    %213 = arith.minimumf %209, %212 : vector<8x16xf32>
    %214 = math.exp %213 : vector<8x16xf32>
    %cst_89 = arith.constant 1.000000e+00 : f32
    %215 = vector.broadcast %cst_89 : f32 to vector<8x16xf32>
    %216 = arith.subf %214, %215 : vector<8x16xf32>
    %217 = arith.select %211, %209, %216 : vector<8x16xi1>, vector<8x16xf32>
    %cst_90 = arith.constant 0.942477762 : f32
    %218 = vector.broadcast %cst_90 : f32 to vector<8x16xf32>
    %219 = arith.addf %209, %218 : vector<8x16xf32>
    %220 = math.cos %219 : vector<8x16xf32>
    %cst_91 = arith.constant 5.000000e-01 : f32
    %221 = vector.broadcast %cst_91 : f32 to vector<8x16xf32>
    %222 = arith.mulf %221, %220 : vector<8x16xf32>
    %223 = arith.addf %217, %222 : vector<8x16xf32>
    %c0_92 = arith.constant 0 : index
    %c0_93 = arith.constant 0 : index
    %c0_94 = arith.constant 0 : index
    %224 = vector.load %arg3[%c0_92, %c0_93, %c0_94] : memref<1x8x8xf32, #tpu.memory_space<vmem>>, vector<1x8x8xf32>
    %225 = vector.shape_cast %224 : vector<1x8x8xf32> to vector<8x8xf32>
    %c0_95 = arith.constant 0 : index
    %c0_96 = arith.constant 0 : index
    %c0_97 = arith.constant 0 : index
    %226 = vector.load %arg4[%c0_95, %c0_96, %c0_97] : memref<1x8x8xf32, #tpu.memory_space<vmem>>, vector<1x8x8xf32>
    %227 = vector.shape_cast %226 : vector<1x8x8xf32> to vector<8x8xf32>
    %c0_98 = arith.constant 0 : index
    %c0_99 = arith.constant 0 : index
    %228 = vector.load %arg11[%c0_98, %c0_99] : memref<8x64xf32, #tpu.memory_space<vmem>>, vector<8x64xf32>
    %c0_100 = arith.constant 0 : index
    %c0_101 = arith.constant 0 : index
    %229 = vector.load %arg12[%c0_100, %c0_101] : memref<64x4xf32, #tpu.memory_space<vmem>>, vector<64x4xf32>
    %c0_102 = arith.constant 0 : index
    %c0_103 = arith.constant 0 : index
    %230 = vector.load %arg13[%c0_102, %c0_103] : memref<4x64xf32, #tpu.memory_space<vmem>>, vector<4x64xf32>
    %c0_104 = arith.constant 0 : index
    %c0_105 = arith.constant 0 : index
    %231 = vector.load %arg14[%c0_104, %c0_105] : memref<64x16xf32, #tpu.memory_space<vmem>>, vector<64x16xf32>
    %c0_106 = arith.constant 0 : index
    %c0_107 = arith.constant 0 : index
    %232 = vector.load %arg15[%c0_106, %c0_107] : memref<16x1xf32, #tpu.memory_space<vmem>>, vector<16x1xf32>
    %c0_108 = arith.constant 0 : index
    %c0_109 = arith.constant 0 : index
    %233 = vector.load %arg16[%c0_108, %c0_109] : memref<1x16xf32, #tpu.memory_space<vmem>>, vector<1x16xf32>
    %234 = math.absf %227 : vector<8x8xf32>
    %cst_110 = arith.constant 0.000000e+00 : f32
    %235 = vector.broadcast %cst_110 : f32 to vector<8x8xf32>
    %236 = arith.cmpf ogt, %234, %235 : vector<8x8xf32>
    %cst_111 = arith.constant dense<0.000000e+00> : vector<8x64xf32>
    %237 = tpu.matmul %225, %228, %cst_111 {dimension_numbers = #tpu.dot_dimension_numbers<[1], [0], [0], [1], [0, 0, 1, 1], [], []>} : vector<8x8xf32>, vector<8x64xf32>, vector<8x64xf32> -> vector<8x64xf32>
    %cst_112 = arith.constant dense<0.000000e+00> : vector<8x4xf32>
    %238 = tpu.matmul %237, %229, %cst_112 {dimension_numbers = #tpu.dot_dimension_numbers<[1], [0], [0], [1], [0, 0, 1, 1], [], []>} : vector<8x64xf32>, vector<64x4xf32>, vector<8x4xf32> -> vector<8x4xf32>
    %cst_113 = arith.constant dense<0.000000e+00> : vector<4x8xf32>
    %239 = tpu.matmul %230, %237, %cst_113 {dimension_numbers = #tpu.dot_dimension_numbers<[1], [1], [0], [0], [0, 0, 1, 0], [], []>} : vector<4x64xf32>, vector<8x64xf32>, vector<4x8xf32> -> vector<4x8xf32>
    %240 = vector.extract_strided_slice %238 {offsets = [0, 0], sizes = [8, 1], strides = [1, 1]} : vector<8x4xf32> to vector<8x1xf32>
    %241 = vector.extract_strided_slice %239 {offsets = [0, 0], sizes = [1, 8], strides = [1, 1]} : vector<4x8xf32> to vector<1x8xf32>
    %242 = vector.broadcast %240 : vector<8x1xf32> to vector<8x8xf32>
    %243 = vector.broadcast %241 : vector<1x8xf32> to vector<8x8xf32>
    %244 = arith.addf %242, %243 : vector<8x8xf32>
    %245 = vector.extract_strided_slice %238 {offsets = [0, 1], sizes = [8, 1], strides = [1, 1]} : vector<8x4xf32> to vector<8x1xf32>
    %246 = vector.extract_strided_slice %239 {offsets = [1, 0], sizes = [1, 8], strides = [1, 1]} : vector<4x8xf32> to vector<1x8xf32>
    %247 = vector.broadcast %245 : vector<8x1xf32> to vector<8x8xf32>
    %248 = vector.broadcast %246 : vector<1x8xf32> to vector<8x8xf32>
    %249 = arith.addf %247, %248 : vector<8x8xf32>
    %250 = vector.extract_strided_slice %238 {offsets = [0, 2], sizes = [8, 1], strides = [1, 1]} : vector<8x4xf32> to vector<8x1xf32>
    %251 = vector.extract_strided_slice %239 {offsets = [2, 0], sizes = [1, 8], strides = [1, 1]} : vector<4x8xf32> to vector<1x8xf32>
    %252 = vector.broadcast %250 : vector<8x1xf32> to vector<8x8xf32>
    %253 = vector.broadcast %251 : vector<1x8xf32> to vector<8x8xf32>
    %254 = arith.addf %252, %253 : vector<8x8xf32>
    %255 = vector.extract_strided_slice %238 {offsets = [0, 3], sizes = [8, 1], strides = [1, 1]} : vector<8x4xf32> to vector<8x1xf32>
    %256 = vector.extract_strided_slice %239 {offsets = [3, 0], sizes = [1, 8], strides = [1, 1]} : vector<4x8xf32> to vector<1x8xf32>
    %257 = vector.broadcast %255 : vector<8x1xf32> to vector<8x8xf32>
    %258 = vector.broadcast %256 : vector<1x8xf32> to vector<8x8xf32>
    %259 = arith.addf %257, %258 : vector<8x8xf32>
    %260 = tpu.concatenate %244, %249, %254, %259 in 0 : vector<8x8xf32>, vector<8x8xf32>, vector<8x8xf32>, vector<8x8xf32> -> vector<32x8xf32>
    %261 = tpu.concatenate %236, %236, %236, %236 in 0 : vector<8x8xi1>, vector<8x8xi1>, vector<8x8xi1>, vector<8x8xi1> -> vector<32x8xi1>
    %cst_114 = arith.constant 0.000000e+00 : f32
    %262 = vector.broadcast %cst_114 : f32 to vector<32x8xf32>
    %263 = arith.cmpf ogt, %260, %262 : vector<32x8xf32>
    %cst_115 = arith.constant 1.000000e-01 : f32
    %264 = vector.broadcast %cst_115 : f32 to vector<32x8xf32>
    %265 = arith.mulf %264, %260 : vector<32x8xf32>
    %266 = arith.select %263, %260, %265 : vector<32x8xi1>, vector<32x8xf32>
    %cst_116 = arith.constant -9.000000e+15 : f32
    %267 = vector.broadcast %cst_116 : f32 to vector<32x8xf32>
    %268 = arith.select %261, %266, %267 : vector<32x8xi1>, vector<32x8xf32>
    %cst_117 = arith.constant dense<0xFF800000> : vector<32xf32>
    %269 = vector.multi_reduction <maximumf>, %268, %cst_117 [1] : vector<32x8xf32> to vector<32xf32>
    %270 = vector.shape_cast %269 : vector<32xf32> to vector<32x1xf32>
    %271 = vector.broadcast %270 : vector<32x1xf32> to vector<32x8xf32>
    %272 = arith.subf %268, %271 : vector<32x8xf32>
    %273 = math.exp %272 : vector<32x8xf32>
    %cst_118 = arith.constant dense<0.000000e+00> : vector<32xf32>
    %274 = vector.multi_reduction <add>, %273, %cst_118 [1] : vector<32x8xf32> to vector<32xf32>
    %275 = vector.shape_cast %274 : vector<32xf32> to vector<32x1xf32>
    %276 = vector.broadcast %275 : vector<32x1xf32> to vector<32x8xf32>
    %277 = arith.divf %273, %276 : vector<32x8xf32>
    %278 = vector.extract_strided_slice %277 {offsets = [0, 0], sizes = [8, 8], strides = [1, 1]} : vector<32x8xf32> to vector<8x8xf32>
    %279 = vector.extract_strided_slice %237 {offsets = [0, 0], sizes = [8, 16], strides = [1, 1]} : vector<8x64xf32> to vector<8x16xf32>
    %cst_119 = arith.constant dense<0.000000e+00> : vector<8x16xf32>
    %280 = tpu.matmul %278, %279, %cst_119 {dimension_numbers = #tpu.dot_dimension_numbers<[1], [0], [0], [1], [0, 0, 1, 1], [], []>} : vector<8x8xf32>, vector<8x16xf32>, vector<8x16xf32> -> vector<8x16xf32>
    %281 = vector.extract_strided_slice %277 {offsets = [8, 0], sizes = [8, 8], strides = [1, 1]} : vector<32x8xf32> to vector<8x8xf32>
    %282 = vector.extract_strided_slice %237 {offsets = [0, 16], sizes = [8, 16], strides = [1, 1]} : vector<8x64xf32> to vector<8x16xf32>
    %cst_120 = arith.constant dense<0.000000e+00> : vector<8x16xf32>
    %283 = tpu.matmul %281, %282, %cst_120 {dimension_numbers = #tpu.dot_dimension_numbers<[1], [0], [0], [1], [0, 0, 1, 1], [], []>} : vector<8x8xf32>, vector<8x16xf32>, vector<8x16xf32> -> vector<8x16xf32>
    %284 = vector.extract_strided_slice %277 {offsets = [16, 0], sizes = [8, 8], strides = [1, 1]} : vector<32x8xf32> to vector<8x8xf32>
    %285 = vector.extract_strided_slice %237 {offsets = [0, 32], sizes = [8, 16], strides = [1, 1]} : vector<8x64xf32> to vector<8x16xf32>
    %cst_121 = arith.constant dense<0.000000e+00> : vector<8x16xf32>
    %286 = tpu.matmul %284, %285, %cst_121 {dimension_numbers = #tpu.dot_dimension_numbers<[1], [0], [0], [1], [0, 0, 1, 1], [], []>} : vector<8x8xf32>, vector<8x16xf32>, vector<8x16xf32> -> vector<8x16xf32>
    %287 = vector.extract_strided_slice %277 {offsets = [24, 0], sizes = [8, 8], strides = [1, 1]} : vector<32x8xf32> to vector<8x8xf32>
    %288 = vector.extract_strided_slice %237 {offsets = [0, 48], sizes = [8, 16], strides = [1, 1]} : vector<8x64xf32> to vector<8x16xf32>
    %cst_122 = arith.constant dense<0.000000e+00> : vector<8x16xf32>
    %289 = tpu.matmul %287, %288, %cst_122 {dimension_numbers = #tpu.dot_dimension_numbers<[1], [0], [0], [1], [0, 0, 1, 1], [], []>} : vector<8x8xf32>, vector<8x16xf32>, vector<8x16xf32> -> vector<8x16xf32>
    %290 = tpu.concatenate %280, %283, %286, %289 in 1 : vector<8x16xf32>, vector<8x16xf32>, vector<8x16xf32>, vector<8x16xf32> -> vector<8x64xf32>
    %291 = arith.mulf %290, %290 : vector<8x64xf32>
    %cst_123 = arith.constant dense<0.000000e+00> : vector<8x4xf32>
    %292 = tpu.matmul %291, %0, %cst_123 {dimension_numbers = #tpu.dot_dimension_numbers<[1], [0], [0], [1], [0, 0, 1, 1], [], []>} : vector<8x64xf32>, vector<64x4xf32>, vector<8x4xf32> -> vector<8x4xf32>
    %293 = math.sqrt %292 : vector<8x4xf32>
    %cst_124 = arith.constant 1.000000e-15 : f32
    %294 = vector.broadcast %cst_124 : f32 to vector<8x4xf32>
    %295 = arith.maximumf %293, %294 : vector<8x4xf32>
    %cst_125 = arith.constant 0.995999991 : f32
    %296 = vector.broadcast %cst_125 : f32 to vector<8x4xf32>
    %297 = arith.cmpf ogt, %295, %296 : vector<8x4xf32>
    %cst_126 = arith.constant 0.995999991 : f32
    %298 = vector.broadcast %cst_126 : f32 to vector<8x4xf32>
    %299 = arith.divf %298, %295 : vector<8x4xf32>
    %cst_127 = arith.constant 1.000000e+00 : f32
    %300 = vector.broadcast %cst_127 : f32 to vector<8x4xf32>
    %301 = arith.select %297, %299, %300 : vector<8x4xi1>, vector<8x4xf32>
    %cst_128 = arith.constant 0.995999991 : f32
    %302 = vector.broadcast %cst_128 : f32 to vector<8x4xf32>
    %303 = arith.minimumf %295, %302 : vector<8x4xf32>
    %cst_129 = arith.constant 1.000000e+00 : f32
    %304 = vector.broadcast %cst_129 : f32 to vector<8x4xf32>
    %305 = arith.mulf %304, %303 : vector<8x4xf32>
    %cst_130 = arith.constant -0.99999988 : f32
    %cst_131 = arith.constant 0.99999988 : f32
    %306 = vector.broadcast %cst_130 : f32 to vector<8x4xf32>
    %307 = arith.maximumf %306, %305 : vector<8x4xf32>
    %308 = vector.broadcast %cst_131 : f32 to vector<8x4xf32>
    %309 = arith.minimumf %308, %307 : vector<8x4xf32>
    %cst_132 = arith.constant 1.000000e+00 : f32
    %310 = vector.broadcast %cst_132 : f32 to vector<8x4xf32>
    %311 = arith.addf %310, %309 : vector<8x4xf32>
    %312 = math.log %311 : vector<8x4xf32>
    %cst_133 = arith.constant 1.000000e+00 : f32
    %313 = vector.broadcast %cst_133 : f32 to vector<8x4xf32>
    %314 = arith.subf %313, %309 : vector<8x4xf32>
    %315 = math.log %314 : vector<8x4xf32>
    %316 = arith.subf %312, %315 : vector<8x4xf32>
    %cst_134 = arith.constant 5.000000e-01 : f32
    %317 = vector.broadcast %cst_134 : f32 to vector<8x4xf32>
    %318 = arith.mulf %317, %316 : vector<8x4xf32>
    %319 = arith.mulf %301, %318 : vector<8x4xf32>
    %cst_135 = arith.constant 1.000000e+00 : f32
    %320 = vector.broadcast %cst_135 : f32 to vector<8x4xf32>
    %321 = arith.mulf %320, %303 : vector<8x4xf32>
    %322 = arith.divf %319, %321 : vector<8x4xf32>
    %cst_136 = arith.constant dense<0.000000e+00> : vector<8x64xf32>
    %323 = tpu.matmul %322, %1, %cst_136 {dimension_numbers = #tpu.dot_dimension_numbers<[1], [0], [0], [1], [0, 0, 1, 1], [], []>} : vector<8x4xf32>, vector<4x64xf32>, vector<8x64xf32> -> vector<8x64xf32>
    %324 = arith.mulf %290, %323 : vector<8x64xf32>
    %cst_137 = arith.constant 0.000000e+00 : f32
    %325 = vector.broadcast %cst_137 : f32 to vector<8x64xf32>
    %326 = arith.cmpf ogt, %324, %325 : vector<8x64xf32>
    %cst_138 = arith.constant 0.000000e+00 : f32
    %327 = vector.broadcast %cst_138 : f32 to vector<8x64xf32>
    %328 = arith.minimumf %324, %327 : vector<8x64xf32>
    %329 = math.exp %328 : vector<8x64xf32>
    %cst_139 = arith.constant 1.000000e+00 : f32
    %330 = vector.broadcast %cst_139 : f32 to vector<8x64xf32>
    %331 = arith.subf %329, %330 : vector<8x64xf32>
    %332 = arith.select %326, %324, %331 : vector<8x64xi1>, vector<8x64xf32>
    %cst_140 = arith.constant 0.942477762 : f32
    %333 = vector.broadcast %cst_140 : f32 to vector<8x64xf32>
    %334 = arith.addf %324, %333 : vector<8x64xf32>
    %335 = math.cos %334 : vector<8x64xf32>
    %cst_141 = arith.constant 5.000000e-01 : f32
    %336 = vector.broadcast %cst_141 : f32 to vector<8x64xf32>
    %337 = arith.mulf %336, %335 : vector<8x64xf32>
    %338 = arith.addf %332, %337 : vector<8x64xf32>
    %cst_142 = arith.constant dense<0.000000e+00> : vector<8x16xf32>
    %339 = tpu.matmul %338, %231, %cst_142 {dimension_numbers = #tpu.dot_dimension_numbers<[1], [0], [0], [1], [0, 0, 1, 1], [], []>} : vector<8x64xf32>, vector<64x16xf32>, vector<8x16xf32> -> vector<8x16xf32>
    %cst_143 = arith.constant dense<0.000000e+00> : vector<8x1xf32>
    %340 = tpu.matmul %339, %232, %cst_143 {dimension_numbers = #tpu.dot_dimension_numbers<[1], [0], [0], [1], [0, 0, 1, 1], [], []>} : vector<8x16xf32>, vector<16x1xf32>, vector<8x1xf32> -> vector<8x1xf32>
    %cst_144 = arith.constant dense<0.000000e+00> : vector<1x8xf32>
    %341 = tpu.matmul %233, %339, %cst_144 {dimension_numbers = #tpu.dot_dimension_numbers<[1], [1], [0], [0], [0, 0, 1, 0], [], []>} : vector<1x16xf32>, vector<8x16xf32>, vector<1x8xf32> -> vector<1x8xf32>
    %342 = vector.broadcast %340 : vector<8x1xf32> to vector<8x8xf32>
    %343 = vector.broadcast %341 : vector<1x8xf32> to vector<8x8xf32>
    %344 = arith.addf %342, %343 : vector<8x8xf32>
    %cst_145 = arith.constant 0.000000e+00 : f32
    %345 = vector.broadcast %cst_145 : f32 to vector<8x8xf32>
    %346 = arith.cmpf ogt, %344, %345 : vector<8x8xf32>
    %cst_146 = arith.constant 1.000000e-01 : f32
    %347 = vector.broadcast %cst_146 : f32 to vector<8x8xf32>
    %348 = arith.mulf %347, %344 : vector<8x8xf32>
    %349 = arith.select %346, %344, %348 : vector<8x8xi1>, vector<8x8xf32>
    %cst_147 = arith.constant -9.000000e+15 : f32
    %350 = vector.broadcast %cst_147 : f32 to vector<8x8xf32>
    %351 = arith.select %236, %349, %350 : vector<8x8xi1>, vector<8x8xf32>
    %cst_148 = arith.constant dense<0xFF800000> : vector<8xf32>
    %352 = vector.multi_reduction <maximumf>, %351, %cst_148 [1] : vector<8x8xf32> to vector<8xf32>
    %353 = vector.shape_cast %352 : vector<8xf32> to vector<8x1xf32>
    %354 = vector.broadcast %353 : vector<8x1xf32> to vector<8x8xf32>
    %355 = arith.subf %351, %354 : vector<8x8xf32>
    %356 = math.exp %355 : vector<8x8xf32>
    %cst_149 = arith.constant dense<0.000000e+00> : vector<8xf32>
    %357 = vector.multi_reduction <add>, %356, %cst_149 [1] : vector<8x8xf32> to vector<8xf32>
    %358 = vector.shape_cast %357 : vector<8xf32> to vector<8x1xf32>
    %359 = vector.broadcast %358 : vector<8x1xf32> to vector<8x8xf32>
    %360 = arith.divf %356, %359 : vector<8x8xf32>
    %cst_150 = arith.constant dense<0.000000e+00> : vector<8x16xf32>
    %361 = tpu.matmul %360, %339, %cst_150 {dimension_numbers = #tpu.dot_dimension_numbers<[1], [0], [0], [1], [0, 0, 1, 1], [], []>} : vector<8x8xf32>, vector<8x16xf32>, vector<8x16xf32> -> vector<8x16xf32>
    %362 = arith.mulf %361, %361 : vector<8x16xf32>
    %cst_151 = arith.constant dense<0.000000e+00> : vector<8xf32>
    %363 = vector.multi_reduction <add>, %362, %cst_151 [1] : vector<8x16xf32> to vector<8xf32>
    %364 = vector.shape_cast %363 : vector<8xf32> to vector<8x1xf32>
    %365 = math.sqrt %364 : vector<8x1xf32>
    %cst_152 = arith.constant 1.000000e-15 : f32
    %366 = vector.broadcast %cst_152 : f32 to vector<8x1xf32>
    %367 = arith.maximumf %365, %366 : vector<8x1xf32>
    %cst_153 = arith.constant 0.995999991 : f32
    %368 = vector.broadcast %cst_153 : f32 to vector<8x1xf32>
    %369 = arith.cmpf ogt, %367, %368 : vector<8x1xf32>
    %cst_154 = arith.constant 0.995999991 : f32
    %370 = vector.broadcast %cst_154 : f32 to vector<8x1xf32>
    %371 = arith.divf %370, %367 : vector<8x1xf32>
    %cst_155 = arith.constant 1.000000e+00 : f32
    %372 = vector.broadcast %cst_155 : f32 to vector<8x1xf32>
    %373 = arith.select %369, %371, %372 : vector<8x1xi1>, vector<8x1xf32>
    %cst_156 = arith.constant 0.995999991 : f32
    %374 = vector.broadcast %cst_156 : f32 to vector<8x1xf32>
    %375 = arith.minimumf %367, %374 : vector<8x1xf32>
    %cst_157 = arith.constant 1.000000e+00 : f32
    %376 = vector.broadcast %cst_157 : f32 to vector<8x1xf32>
    %377 = arith.mulf %376, %375 : vector<8x1xf32>
    %cst_158 = arith.constant -0.99999988 : f32
    %cst_159 = arith.constant 0.99999988 : f32
    %378 = vector.broadcast %cst_158 : f32 to vector<8x1xf32>
    %379 = arith.maximumf %378, %377 : vector<8x1xf32>
    %380 = vector.broadcast %cst_159 : f32 to vector<8x1xf32>
    %381 = arith.minimumf %380, %379 : vector<8x1xf32>
    %cst_160 = arith.constant 1.000000e+00 : f32
    %382 = vector.broadcast %cst_160 : f32 to vector<8x1xf32>
    %383 = arith.addf %382, %381 : vector<8x1xf32>
    %384 = math.log %383 : vector<8x1xf32>
    %cst_161 = arith.constant 1.000000e+00 : f32
    %385 = vector.broadcast %cst_161 : f32 to vector<8x1xf32>
    %386 = arith.subf %385, %381 : vector<8x1xf32>
    %387 = math.log %386 : vector<8x1xf32>
    %388 = arith.subf %384, %387 : vector<8x1xf32>
    %cst_162 = arith.constant 5.000000e-01 : f32
    %389 = vector.broadcast %cst_162 : f32 to vector<8x1xf32>
    %390 = arith.mulf %389, %388 : vector<8x1xf32>
    %391 = arith.mulf %373, %390 : vector<8x1xf32>
    %cst_163 = arith.constant 1.000000e+00 : f32
    %392 = vector.broadcast %cst_163 : f32 to vector<8x1xf32>
    %393 = arith.mulf %392, %375 : vector<8x1xf32>
    %394 = arith.divf %391, %393 : vector<8x1xf32>
    %395 = vector.broadcast %394 : vector<8x1xf32> to vector<8x16xf32>
    %396 = arith.mulf %361, %395 : vector<8x16xf32>
    %397 = arith.mulf %396, %396 : vector<8x16xf32>
    %cst_164 = arith.constant dense<0.000000e+00> : vector<8xf32>
    %398 = vector.multi_reduction <add>, %397, %cst_164 [1] : vector<8x16xf32> to vector<8xf32>
    %399 = vector.shape_cast %398 : vector<8xf32> to vector<8x1xf32>
    %400 = math.sqrt %399 : vector<8x1xf32>
    %cst_165 = arith.constant 1.000000e-15 : f32
    %401 = vector.broadcast %cst_165 : f32 to vector<8x1xf32>
    %402 = arith.maximumf %400, %401 : vector<8x1xf32>
    %cst_166 = arith.constant 0.995999991 : f32
    %403 = vector.broadcast %cst_166 : f32 to vector<8x1xf32>
    %404 = arith.cmpf ogt, %402, %403 : vector<8x1xf32>
    %cst_167 = arith.constant 0.995999991 : f32
    %405 = vector.broadcast %cst_167 : f32 to vector<8x1xf32>
    %406 = arith.divf %405, %402 : vector<8x1xf32>
    %cst_168 = arith.constant 1.000000e+00 : f32
    %407 = vector.broadcast %cst_168 : f32 to vector<8x1xf32>
    %408 = arith.select %404, %406, %407 : vector<8x1xi1>, vector<8x1xf32>
    %cst_169 = arith.constant 0.995999991 : f32
    %409 = vector.broadcast %cst_169 : f32 to vector<8x1xf32>
    %410 = arith.minimumf %402, %409 : vector<8x1xf32>
    %cst_170 = arith.constant 1.000000e+00 : f32
    %411 = vector.broadcast %cst_170 : f32 to vector<8x1xf32>
    %412 = arith.mulf %411, %410 : vector<8x1xf32>
    %cst_171 = arith.constant -0.99999988 : f32
    %cst_172 = arith.constant 0.99999988 : f32
    %413 = vector.broadcast %cst_171 : f32 to vector<8x1xf32>
    %414 = arith.maximumf %413, %412 : vector<8x1xf32>
    %415 = vector.broadcast %cst_172 : f32 to vector<8x1xf32>
    %416 = arith.minimumf %415, %414 : vector<8x1xf32>
    %cst_173 = arith.constant 1.000000e+00 : f32
    %417 = vector.broadcast %cst_173 : f32 to vector<8x1xf32>
    %418 = arith.addf %417, %416 : vector<8x1xf32>
    %419 = math.log %418 : vector<8x1xf32>
    %cst_174 = arith.constant 1.000000e+00 : f32
    %420 = vector.broadcast %cst_174 : f32 to vector<8x1xf32>
    %421 = arith.subf %420, %416 : vector<8x1xf32>
    %422 = math.log %421 : vector<8x1xf32>
    %423 = arith.subf %419, %422 : vector<8x1xf32>
    %cst_175 = arith.constant 5.000000e-01 : f32
    %424 = vector.broadcast %cst_175 : f32 to vector<8x1xf32>
    %425 = arith.mulf %424, %423 : vector<8x1xf32>
    %426 = arith.mulf %408, %425 : vector<8x1xf32>
    %cst_176 = arith.constant 1.000000e+00 : f32
    %427 = vector.broadcast %cst_176 : f32 to vector<8x1xf32>
    %428 = arith.mulf %427, %410 : vector<8x1xf32>
    %429 = arith.divf %426, %428 : vector<8x1xf32>
    %430 = vector.broadcast %429 : vector<8x1xf32> to vector<8x16xf32>
    %431 = arith.mulf %396, %430 : vector<8x16xf32>
    %cst_177 = arith.constant 0.000000e+00 : f32
    %432 = vector.broadcast %cst_177 : f32 to vector<8x16xf32>
    %433 = arith.cmpf ogt, %431, %432 : vector<8x16xf32>
    %cst_178 = arith.constant 0.000000e+00 : f32
    %434 = vector.broadcast %cst_178 : f32 to vector<8x16xf32>
    %435 = arith.minimumf %431, %434 : vector<8x16xf32>
    %436 = math.exp %435 : vector<8x16xf32>
    %cst_179 = arith.constant 1.000000e+00 : f32
    %437 = vector.broadcast %cst_179 : f32 to vector<8x16xf32>
    %438 = arith.subf %436, %437 : vector<8x16xf32>
    %439 = arith.select %433, %431, %438 : vector<8x16xi1>, vector<8x16xf32>
    %cst_180 = arith.constant 0.942477762 : f32
    %440 = vector.broadcast %cst_180 : f32 to vector<8x16xf32>
    %441 = arith.addf %431, %440 : vector<8x16xf32>
    %442 = math.cos %441 : vector<8x16xf32>
    %cst_181 = arith.constant 5.000000e-01 : f32
    %443 = vector.broadcast %cst_181 : f32 to vector<8x16xf32>
    %444 = arith.mulf %443, %442 : vector<8x16xf32>
    %445 = arith.addf %439, %444 : vector<8x16xf32>
    %446 = arith.mulf %445, %445 : vector<8x16xf32>
    %cst_182 = arith.constant dense<0.000000e+00> : vector<8xf32>
    %447 = vector.multi_reduction <add>, %446, %cst_182 [1] : vector<8x16xf32> to vector<8xf32>
    %448 = vector.shape_cast %447 : vector<8xf32> to vector<8x1xf32>
    %449 = math.sqrt %448 : vector<8x1xf32>
    %cst_183 = arith.constant 1.000000e-07 : f32
    %450 = vector.broadcast %cst_183 : f32 to vector<8x1xf32>
    %451 = arith.addf %449, %450 : vector<8x1xf32>
    %452 = vector.broadcast %451 : vector<8x1xf32> to vector<8x16xf32>
    %453 = arith.divf %445, %452 : vector<8x16xf32>
    %454 = arith.mulf %223, %223 : vector<8x16xf32>
    %cst_184 = arith.constant dense<0.000000e+00> : vector<8xf32>
    %455 = vector.multi_reduction <add>, %454, %cst_184 [1] : vector<8x16xf32> to vector<8xf32>
    %456 = vector.shape_cast %455 : vector<8xf32> to vector<8x1xf32>
    %457 = math.sqrt %456 : vector<8x1xf32>
    %cst_185 = arith.constant 1.000000e-07 : f32
    %458 = vector.broadcast %cst_185 : f32 to vector<8x1xf32>
    %459 = arith.addf %457, %458 : vector<8x1xf32>
    %460 = vector.broadcast %459 : vector<8x1xf32> to vector<8x16xf32>
    %461 = arith.divf %223, %460 : vector<8x16xf32>
    %cst_186 = arith.constant dense<0.000000e+00> : vector<8x8xf32>
    %462 = tpu.matmul %453, %461, %cst_186 {dimension_numbers = #tpu.dot_dimension_numbers<[1], [1], [0], [0], [0, 0, 1, 0], [], []>} : vector<8x16xf32>, vector<8x16xf32>, vector<8x8xf32> -> vector<8x8xf32>
    %c0_187 = arith.constant 0 : index
    %c0_188 = arith.constant 0 : index
    %c0_189 = arith.constant 0 : index
    %463 = vector.load %arg19[%c0_187, %c0_188, %c0_189] : memref<1x8x8xf32, #tpu.memory_space<vmem>>, vector<1x8x8xf32>
    %464 = vector.shape_cast %463 : vector<1x8x8xf32> to vector<8x8xf32>
    %465 = vector.shape_cast %462 : vector<8x8xf32> to vector<1x8x8xf32>
    tpu.vector_store %arg19[%c0_187, %c0_188, %c0_189], %465 {strides = array<i32>} : memref<1x8x8xf32, #tpu.memory_space<vmem>>, vector<1x8x8xf32>,
    %c0_190 = arith.constant 0 : index
    %c0_191 = arith.constant 0 : index
    %c0_192 = arith.constant 0 : index
    %466 = vector.load %arg20[%c0_190, %c0_191, %c0_192] : memref<1x8x16xf32, #tpu.memory_space<vmem>>, vector<1x8x16xf32>
    %467 = vector.shape_cast %466 : vector<1x8x16xf32> to vector<8x16xf32>
    %468 = vector.shape_cast %461 : vector<8x16xf32> to vector<1x8x16xf32>
    tpu.vector_store %arg20[%c0_190, %c0_191, %c0_192], %468 {strides = array<i32>} : memref<1x8x16xf32, #tpu.memory_space<vmem>>, vector<1x8x16xf32>,
    %c0_193 = arith.constant 0 : index
    %c0_194 = arith.constant 0 : index
    %c0_195 = arith.constant 0 : index
    %469 = vector.load %arg21[%c0_193, %c0_194, %c0_195] : memref<1x8x16xf32, #tpu.memory_space<vmem>>, vector<1x8x16xf32>
    %470 = vector.shape_cast %469 : vector<1x8x16xf32> to vector<8x16xf32>
    %471 = vector.shape_cast %453 : vector<8x16xf32> to vector<1x8x16xf32>
    tpu.vector_store %arg21[%c0_193, %c0_194, %c0_195], %471 {strides = array<i32>} : memref<1x8x16xf32, #tpu.memory_space<vmem>>, vector<1x8x16xf32>,
    return
  }
  func.func @transform_0(%arg0: i32) -> (i32, i32, i32) {
    %c0_i32 = arith.constant 0 : i32
    %c0_i32_0 = arith.constant 0 : i32
    %c0_i32_1 = arith.constant 0 : i32
    return %arg0, %c0_i32, %c0_i32_0 : i32, i32, i32
  }
  func.func @transform_1(%arg0: i32) -> (i32, i32, i32) {
    %c0_i32 = arith.constant 0 : i32
    %c0_i32_0 = arith.constant 0 : i32
    %c0_i32_1 = arith.constant 0 : i32
    return %arg0, %c0_i32, %c0_i32_0 : i32, i32, i32
  }
  func.func @transform_2(%arg0: i32) -> (i32, i32, i32) {
    %c0_i32 = arith.constant 0 : i32
    %c0_i32_0 = arith.constant 0 : i32
    %c0_i32_1 = arith.constant 0 : i32
    return %arg0, %c0_i32, %c0_i32_0 : i32, i32, i32
  }
  func.func @transform_3(%arg0: i32) -> (i32, i32, i32) {
    %c0_i32 = arith.constant 0 : i32
    %c0_i32_0 = arith.constant 0 : i32
    %c0_i32_1 = arith.constant 0 : i32
    return %arg0, %c0_i32, %c0_i32_0 : i32, i32, i32
  }
  func.func @transform_4(%arg0: i32) -> (i32, i32) {
    %c0_i32 = arith.constant 0 : i32
    %c0_i32_0 = arith.constant 0 : i32
    %c0_i32_1 = arith.constant 0 : i32
    return %c0_i32, %c0_i32_0 : i32, i32
  }
  func.func @transform_5(%arg0: i32) -> (i32, i32) {
    %c0_i32 = arith.constant 0 : i32
    %c0_i32_0 = arith.constant 0 : i32
    %c0_i32_1 = arith.constant 0 : i32
    return %c0_i32, %c0_i32_0 : i32, i32
  }
  func.func @transform_6(%arg0: i32) -> (i32, i32) {
    %c0_i32 = arith.constant 0 : i32
    %c0_i32_0 = arith.constant 0 : i32
    %c0_i32_1 = arith.constant 0 : i32
    return %c0_i32, %c0_i32_0 : i32, i32
  }
  func.func @transform_7(%arg0: i32) -> (i32, i32) {
    %c0_i32 = arith.constant 0 : i32
    %c0_i32_0 = arith.constant 0 : i32
    %c0_i32_1 = arith.constant 0 : i32
    return %c0_i32, %c0_i32_0 : i32, i32
  }
  func.func @transform_8(%arg0: i32) -> (i32, i32) {
    %c0_i32 = arith.constant 0 : i32
    %c0_i32_0 = arith.constant 0 : i32
    %c0_i32_1 = arith.constant 0 : i32
    return %c0_i32, %c0_i32_0 : i32, i32
  }
  func.func @transform_9(%arg0: i32) -> (i32, i32) {
    %c0_i32 = arith.constant 0 : i32
    %c0_i32_0 = arith.constant 0 : i32
    %c0_i32_1 = arith.constant 0 : i32
    return %c0_i32, %c0_i32_0 : i32, i32
  }
  func.func @transform_10(%arg0: i32) -> (i32, i32) {
    %c0_i32 = arith.constant 0 : i32
    %c0_i32_0 = arith.constant 0 : i32
    %c0_i32_1 = arith.constant 0 : i32
    return %c0_i32, %c0_i32_0 : i32, i32
  }
  func.func @transform_11(%arg0: i32) -> (i32, i32) {
    %c0_i32 = arith.constant 0 : i32
    %c0_i32_0 = arith.constant 0 : i32
    %c0_i32_1 = arith.constant 0 : i32
    return %c0_i32, %c0_i32_0 : i32, i32
  }
  func.func @transform_12(%arg0: i32) -> (i32, i32) {
    %c0_i32 = arith.constant 0 : i32
    %c0_i32_0 = arith.constant 0 : i32
    %c0_i32_1 = arith.constant 0 : i32
    return %c0_i32, %c0_i32_0 : i32, i32
  }
  func.func @transform_13(%arg0: i32) -> (i32, i32) {
    %c0_i32 = arith.constant 0 : i32
    %c0_i32_0 = arith.constant 0 : i32
    %c0_i32_1 = arith.constant 0 : i32
    return %c0_i32, %c0_i32_0 : i32, i32
  }
  func.func @transform_14(%arg0: i32) -> (i32, i32) {
    %c0_i32 = arith.constant 0 : i32
    %c0_i32_0 = arith.constant 0 : i32
    %c0_i32_1 = arith.constant 0 : i32
    return %c0_i32, %c0_i32_0 : i32, i32
  }
  func.func @transform_15(%arg0: i32) -> (i32, i32) {
    %c0_i32 = arith.constant 0 : i32
    %c0_i32_0 = arith.constant 0 : i32
    %c0_i32_1 = arith.constant 0 : i32
    return %c0_i32, %c0_i32_0 : i32, i32
  }
  func.func @transform_16(%arg0: i32) -> (i32, i32) {
    %c0_i32 = arith.constant 0 : i32
    %c0_i32_0 = arith.constant 0 : i32
    %c0_i32_1 = arith.constant 0 : i32
    return %c0_i32, %c0_i32_0 : i32, i32
  }
  func.func @transform_17(%arg0: i32) -> (i32, i32) {
    %c0_i32 = arith.constant 0 : i32
    %c0_i32_0 = arith.constant 0 : i32
    %c0_i32_1 = arith.constant 0 : i32
    return %c0_i32, %c0_i32_0 : i32, i32
  }
  func.func @transform_18(%arg0: i32) -> (i32, i32, i32) {
    %c0_i32 = arith.constant 0 : i32
    %c0_i32_0 = arith.constant 0 : i32
    %c0_i32_1 = arith.constant 0 : i32
    return %arg0, %c0_i32, %c0_i32_0 : i32, i32, i32
  }
  func.func @transform_19(%arg0: i32) -> (i32, i32, i32) {
    %c0_i32 = arith.constant 0 : i32
    %c0_i32_0 = arith.constant 0 : i32
    %c0_i32_1 = arith.constant 0 : i32
    return %arg0, %c0_i32, %c0_i32_0 : i32, i32, i32
  }
  func.func @transform_20(%arg0: i32) -> (i32, i32, i32) {
    %c0_i32 = arith.constant 0 : i32
    %c0_i32_0 = arith.constant 0 : i32
    %c0_i32_1 = arith.constant 0 : i32
    return %arg0, %c0_i32, %c0_i32_0 : i32, i32, i32
  }
}

</mosaic_0001>

<llo_original>
// kernel: coupling_forward.1
$region0: #{coupling_forward.1}
  #allocation0 [shape = 'u32[]', space=smem, size = 0x4, offset = 0x4, fixed_abs, tag = 'smem constant byte address 0x4 - core index']
  #allocation1 [shape = 'u32[144,128]{1,0:T(1,128)}', space=vmem, size = 0x12000, scoped, tag = 'internal scratch']
  %s0 = inlined_call_operand.vmem [shape: f32[2,8,24], index: 0, kind: input, shape index: {}]
  %s1 = inlined_call_operand.vmem [shape: f32[2,8,8], index: 1, kind: input, shape index: {}]
  %s2 = inlined_call_operand.vmem [shape: f32[2,8,8], index: 2, kind: input, shape index: {}]
  %s3 = inlined_call_operand.vmem [shape: f32[2,8,8], index: 3, kind: input, shape index: {}]
  %s4 = inlined_call_operand.vmem [shape: f32[24,64], index: 4, kind: input, shape index: {}]
  %s5 = inlined_call_operand.vmem [shape: f32[64,4], index: 5, kind: input, shape index: {}]
  %s6 = inlined_call_operand.vmem [shape: f32[4,64], index: 6, kind: input, shape index: {}]
  %s7 = inlined_call_operand.vmem [shape: f32[64,16], index: 7, kind: input, shape index: {}]
  %s8 = inlined_call_operand.vmem [shape: f32[16,1], index: 8, kind: input, shape index: {}]
  %s9 = inlined_call_operand.vmem [shape: f32[1,16], index: 9, kind: input, shape index: {}]
  %s10 = inlined_call_operand.vmem [shape: f32[8,64], index: 10, kind: input, shape index: {}]
  %s11 = inlined_call_operand.vmem [shape: f32[64,4], index: 11, kind: input, shape index: {}]
  %s12 = inlined_call_operand.vmem [shape: f32[4,64], index: 12, kind: input, shape index: {}]
  %s13 = inlined_call_operand.vmem [shape: f32[64,16], index: 13, kind: input, shape index: {}]
  %s14 = inlined_call_operand.vmem [shape: f32[16,1], index: 14, kind: input, shape index: {}]
  %s15 = inlined_call_operand.vmem [shape: f32[1,16], index: 15, kind: input, shape index: {}]
  %s16 = inlined_call_operand.vmem [shape: f32[64,4], index: 16, kind: input, shape index: {}]
  %s17 = inlined_call_operand.vmem [shape: f32[4,64], index: 17, kind: input, shape index: {}]
  %s18 = inlined_call_operand.hbm [shape: f32[2,8,8], index: 18, kind: output, shape index: {0}]
  %s19 = inlined_call_operand.hbm [shape: f32[2,8,16], index: 19, kind: output, shape index: {1}]
  %s20 = inlined_call_operand.hbm [shape: f32[2,8,16], index: 20, kind: output, shape index: {2}]
  %21 = xla_tuple %s18, %s19, %s20
  %s22 = sld [smem:[#allocation0]]
  $region121: #{coupling_forward.1} parent=0
    _
  %s24 = ssub.s32 1, %s22
  %s25 = scalar_select 0, %s24, %s22
  $region1: #{coupling_forward.1} parent=0
    #allocation2 [shape = 'u8[8192]{0}', space=vmem, size = 0x2000, scoped, tag = 'output window, operand 0']
    #allocation3 [shape = 's32[2]{0}', space=sflag, size = 0x8, scoped, tag = 'scoped memory for coupling_forward.1']
    #allocation4 [shape = 'u8[8192]{0}', space=vmem, size = 0x2000, scoped, tag = 'output window, operand 1']
    #allocation5 [shape = 's32[2]{0}', space=sflag, size = 0x8, scoped, tag = 'scoped memory for coupling_forward.1']
    #allocation6 [shape = 'u8[8192]{0}', space=vmem, size = 0x2000, scoped, tag = 'output window, operand 2']
    %26 = vsyncpa [#allocation3], 0
    %s27 = scalar_lea.sflag [#allocation3], 1
    %28 = vsyncpa %s27, 0
    %29 = vsyncpa [#allocation5], 0
    %s30 = scalar_lea.sflag [#allocation5], 1
    %31 = vsyncpa %s30, 0
    loop: start=0, step=1, limit=4
    $region2: #{coupling_forward.1} parent=1 // loop_pre_header
      _
    $region3: #{coupling_forward.1} parent=1 // loop_header
      %s33 = sphi 0, %s37
      %p34 = scmp.ge.s32.totalorder %s33, 4
      %s43 = sphi 0, %s45
      %s46 = sphi 0, %s43
      %s47 = sphi 0, %s46
      %s63 = sphi 0, %s47
      %s69 = sphi 0, %s71
      %s72 = sphi 0, %s69
      %s73 = sphi 0, %s72
      %s89 = sphi 0, %s73
      %s95 = sphi 0, %s97
      %s98 = sphi 0, %s95
      %s99 = sphi 0, %s98
      %s115 = sphi 0, %s99
      %s121 = sphi 0, %s123
      %s124 = sphi 0, %s121
      %s125 = sphi 0, %s124
      %s141 = sphi 0, %s125
      %s145 = sphi 0, %s145
      %s147 = sphi 0, %s145
      %s148 = sphi 0, %s147
      %s162 = sphi 0, %s148
      %s166 = sphi 0, %s166
      %s168 = sphi 0, %s166
      %s169 = sphi 0, %s168
      %s183 = sphi 0, %s169
      %s187 = sphi 0, %s187
      %s189 = sphi 0, %s187
      %s190 = sphi 0, %s189
      %s204 = sphi 0, %s190
      %s208 = sphi 0, %s208
      %s210 = sphi 0, %s208
      %s211 = sphi 0, %s210
      %s225 = sphi 0, %s211
      %s229 = sphi 0, %s229
      %s231 = sphi 0, %s229
      %s232 = sphi 0, %s231
      %s246 = sphi 0, %s232
      %s250 = sphi 0, %s250
      %s252 = sphi 0, %s250
      %s253 = sphi 0, %s252
      %s267 = sphi 0, %s253
      %s271 = sphi 0, %s271
      %s273 = sphi 0, %s271
      %s274 = sphi 0, %s273
      %s288 = sphi 0, %s274
      %s292 = sphi 0, %s292
      %s294 = sphi 0, %s292
      %s295 = sphi 0, %s294
      %s309 = sphi 0, %s295
      %s313 = sphi 0, %s313
      %s315 = sphi 0, %s313
      %s316 = sphi 0, %s315
      %s330 = sphi 0, %s316
      %s334 = sphi 0, %s334
      %s336 = sphi 0, %s334
      %s337 = sphi 0, %s336
      %s351 = sphi 0, %s337
      %s355 = sphi 0, %s355
      %s357 = sphi 0, %s355
      %s358 = sphi 0, %s357
      %s372 = sphi 0, %s358
      %s376 = sphi 0, %s376
      %s378 = sphi 0, %s376
      %s379 = sphi 0, %s378
      %s393 = sphi 0, %s379
      %s397 = sphi 0, %s397
      %s399 = sphi 0, %s397
      %s400 = sphi 0, %s399
      %s414 = sphi 0, %s400
      %s418 = sphi 0, %s418
      %s420 = sphi 0, %s418
      %s421 = sphi 0, %s420
      %s435 = sphi 0, %s421
      %s441 = sphi 0, %s443
      %s444 = sphi 0, %s441
      %s445 = sphi 0, %s444
      %s461 = sphi 0, %s445
      %s467 = sphi 0, %s469
      %s470 = sphi 0, %s467
      %s471 = sphi 0, %s470
      %s487 = sphi 0, %s471
      %s493 = sphi 0, %s495
      %s496 = sphi 0, %s493
      %s497 = sphi 0, %s496
      %s513 = sphi 0, %s497
    $region4: #{coupling_forward.1} parent=1 // loop_header_branch
      %36 = sbr.rel (%p34) target = $region8
    $region5: #{coupling_forward.1} parent=1 // loop_body
      %s38 = ssub.s32 %s33, 1
      %s39 = ssub.s32 %s33, 2
      %s40 = sadd.s32 %s33, 1
      %s41 = ssub.s32 %s33, %s40
      %p42 = scmp.eq.s32.totalorder %s41, 0
      %s44 = sadd.s32 %s43, 1
      %s45 = scalar_select %p42, %s43, %s44
      %p48 = pneg %p42
      %p49 = scmp.eq.s32.totalorder %s33, 1
      %p50 = por %p48, %p49
      %p51 = scmp.ne.s32.totalorder %s43, %s46
      %p52 = scmp.eq.s32.totalorder %s33, 0
      %p53 = por %p51, %p52
      %p54 = scmp.ne.s32.totalorder %s43, %s46
      %p55 = scmp.eq.s32.totalorder %s38, 1
      %p56 = por %p54, %p55
      %p57 = scmp.ne.s32.totalorder %s46, %s47
      %p58 = scmp.eq.s32.totalorder %s38, 0
      %p59 = por %p57, %p58
      %p60 = scmp.ne.s32.totalorder %s46, %s47
      %p61 = scmp.eq.s32.totalorder %s39, 1
      %p62 = por %p60, %p61
      %p64 = scmp.ne.s32.totalorder %s47, %s63
      %p65 = scmp.eq.s32.totalorder %s39, 0
      %p66 = por %p64, %p65
      %s67 = ssub.s32 %s33, %s40
      %p68 = scmp.eq.s32.totalorder %s67, 0
      %s70 = sadd.s32 %s69, 1
      %s71 = scalar_select %p68, %s69, %s70
      %p74 = pneg %p68
      %p75 = scmp.eq.s32.totalorder %s33, 1
      %p76 = por %p74, %p75
      %p77 = scmp.ne.s32.totalorder %s69, %s72
      %p78 = scmp.eq.s32.totalorder %s33, 0
      %p79 = por %p77, %p78
      %p80 = scmp.ne.s32.totalorder %s69, %s72
      %p81 = scmp.eq.s32.totalorder %s38, 1
      %p82 = por %p80, %p81
      %p83 = scmp.ne.s32.totalorder %s72, %s73
      %p84 = scmp.eq.s32.totalorder %s38, 0
      %p85 = por %p83, %p84
      %p86 = scmp.ne.s32.totalorder %s72, %s73
      %p87 = scmp.eq.s32.totalorder %s39, 1
      %p88 = por %p86, %p87
      %p90 = scmp.ne.s32.totalorder %s73, %s89
      %p91 = scmp.eq.s32.totalorder %s39, 0
      %p92 = por %p90, %p91
      %s93 = ssub.s32 %s33, %s40
      %p94 = scmp.eq.s32.totalorder %s93, 0
      %s96 = sadd.s32 %s95, 1
      %s97 = scalar_select %p94, %s95, %s96
      %p100 = pneg %p94
      %p101 = scmp.eq.s32.totalorder %s33, 1
      %p102 = por %p100, %p101
      %p103 = scmp.ne.s32.totalorder %s95, %s98
      %p104 = scmp.eq.s32.totalorder %s33, 0
      %p105 = por %p103, %p104
      %p106 = scmp.ne.s32.totalorder %s95, %s98
      %p107 = scmp.eq.s32.totalorder %s38, 1
      %p108 = por %p106, %p107
      %p109 = scmp.ne.s32.totalorder %s98, %s99
      %p110 = scmp.eq.s32.totalorder %s38, 0
      %p111 = por %p109, %p110
      %p112 = scmp.ne.s32.totalorder %s98, %s99
      %p113 = scmp.eq.s32.totalorder %s39, 1
      %p114 = por %p112, %p113
      %p116 = scmp.ne.s32.totalorder %s99, %s115
      %p117 = scmp.eq.s32.totalorder %s39, 0
      %p118 = por %p116, %p117
      %s119 = ssub.s32 %s33, %s40
      %p120 = scmp.eq.s32.totalorder %s119, 0
      %s122 = sadd.s32 %s121, 1
      %s123 = scalar_select %p120, %s121, %s122
      %p126 = pneg %p120
      %p127 = scmp.eq.s32.totalorder %s33, 1
      %p128 = por %p126, %p127
      %p129 = scmp.ne.s32.totalorder %s121, %s124
      %p130 = scmp.eq.s32.totalorder %s33, 0
      %p131 = por %p129, %p130
      %p132 = scmp.ne.s32.totalorder %s121, %s124
      %p133 = scmp.eq.s32.totalorder %s38, 1
      %p134 = por %p132, %p133
      %p135 = scmp.ne.s32.totalorder %s124, %s125
      %p136 = scmp.eq.s32.totalorder %s38, 0
      %p137 = por %p135, %p136
      %p138 = scmp.ne.s32.totalorder %s124, %s125
      %p139 = scmp.eq.s32.totalorder %s39, 1
      %p140 = por %p138, %p139
      %p142 = scmp.ne.s32.totalorder %s125, %s141
      %p143 = scmp.eq.s32.totalorder %s39, 0
      %p144 = por %p142, %p143
      %s146 = sadd.s32 %s145, 1
      %p149 = scmp.eq.s32.totalorder %s33, 1
      %p150 = scmp.ne.s32.totalorder %s145, %s147
      %p151 = scmp.eq.s32.totalorder %s33, 0
      %p152 = por %p150, %p151
      %p153 = scmp.ne.s32.totalorder %s145, %s147
      %p154 = scmp.eq.s32.totalorder %s38, 1
      %p155 = por %p153, %p154
      %p156 = scmp.ne.s32.totalorder %s147, %s148
      %p157 = scmp.eq.s32.totalorder %s38, 0
      %p158 = por %p156, %p157
      %p159 = scmp.ne.s32.totalorder %s147, %s148
      %p160 = scmp.eq.s32.totalorder %s39, 1
      %p161 = por %p159, %p160
      %p163 = scmp.ne.s32.totalorder %s148, %s162
      %p164 = scmp.eq.s32.totalorder %s39, 0
      %p165 = por %p163, %p164
      %s167 = sadd.s32 %s166, 1
      %p170 = scmp.eq.s32.totalorder %s33, 1
      %p171 = scmp.ne.s32.totalorder %s166, %s168
      %p172 = scmp.eq.s32.totalorder %s33, 0
      %p173 = por %p171, %p172
      %p174 = scmp.ne.s32.totalorder %s166, %s168
      %p175 = scmp.eq.s32.totalorder %s38, 1
      %p176 = por %p174, %p175
      %p177 = scmp.ne.s32.totalorder %s168, %s169
      %p178 = scmp.eq.s32.totalorder %s38, 0
      %p179 = por %p177, %p178
      %p180 = scmp.ne.s32.totalorder %s168, %s169
      %p181 = scmp.eq.s32.totalorder %s39, 1
      %p182 = por %p180, %p181
      %p184 = scmp.ne.s32.totalorder %s169, %s183
      %p185 = scmp.eq.s32.totalorder %s39, 0
      %p186 = por %p184, %p185
      %s188 = sadd.s32 %s187, 1
      %p191 = scmp.eq.s32.totalorder %s33, 1
      %p192 = scmp.ne.s32.totalorder %s187, %s189
      %p193 = scmp.eq.s32.totalorder %s33, 0
      %p194 = por %p192, %p193
      %p195 = scmp.ne.s32.totalorder %s187, %s189
      %p196 = scmp.eq.s32.totalorder %s38, 1
      %p197 = por %p195, %p196
      %p198 = scmp.ne.s32.totalorder %s189, %s190
      %p199 = scmp.eq.s32.totalorder %s38, 0
      %p200 = por %p198, %p199
      %p201 = scmp.ne.s32.totalorder %s189, %s190
      %p202 = scmp.eq.s32.totalorder %s39, 1
      %p203 = por %p201, %p202
      %p205 = scmp.ne.s32.totalorder %s190, %s204
      %p206 = scmp.eq.s32.totalorder %s39, 0
      %p207 = por %p205, %p206
      %s209 = sadd.s32 %s208, 1
      %p212 = scmp.eq.s32.totalorder %s33, 1
      %p213 = scmp.ne.s32.totalorder %s208, %s210
      %p214 = scmp.eq.s32.totalorder %s33, 0
      %p215 = por %p213, %p214
      %p216 = scmp.ne.s32.totalorder %s208, %s210
      %p217 = scmp.eq.s32.totalorder %s38, 1
      %p218 = por %p216, %p217
      %p219 = scmp.ne.s32.totalorder %s210, %s211
      %p220 = scmp.eq.s32.totalorder %s38, 0
      %p221 = por %p219, %p220
      %p222 = scmp.ne.s32.totalorder %s210, %s211
      %p223 = scmp.eq.s32.totalorder %s39, 1
      %p224 = por %p222, %p223
      %p226 = scmp.ne.s32.totalorder %s211, %s225
      %p227 = scmp.eq.s32.totalorder %s39, 0
      %p228 = por %p226, %p227
      %s230 = sadd.s32 %s229, 1
      %p233 = scmp.eq.s32.totalorder %s33, 1
      %p234 = scmp.ne.s32.totalorder %s229, %s231
      %p235 = scmp.eq.s32.totalorder %s33, 0
      %p236 = por %p234, %p235
      %p237 = scmp.ne.s32.totalorder %s229, %s231
      %p238 = scmp.eq.s32.totalorder %s38, 1
      %p239 = por %p237, %p238
      %p240 = scmp.ne.s32.totalorder %s231, %s232
      %p241 = scmp.eq.s32.totalorder %s38, 0
      %p242 = por %p240, %p241
      %p243 = scmp.ne.s32.totalorder %s231, %s232
      %p244 = scmp.eq.s32.totalorder %s39, 1
      %p245 = por %p243, %p244
      %p247 = scmp.ne.s32.totalorder %s232, %s246
      %p248 = scmp.eq.s32.totalorder %s39, 0
      %p249 = por %p247, %p248
      %s251 = sadd.s32 %s250, 1
      %p254 = scmp.eq.s32.totalorder %s33, 1
      %p255 = scmp.ne.s32.totalorder %s250, %s252
      %p256 = scmp.eq.s32.totalorder %s33, 0
      %p257 = por %p255, %p256
      %p258 = scmp.ne.s32.totalorder %s250, %s252
      %p259 = scmp.eq.s32.totalorder %s38, 1
      %p260 = por %p258, %p259
      %p261 = scmp.ne.s32.totalorder %s252, %s253
      %p262 = scmp.eq.s32.totalorder %s38, 0
      %p263 = por %p261, %p262
      %p264 = scmp.ne.s32.totalorder %s252, %s253
      %p265 = scmp.eq.s32.totalorder %s39, 1
      %p266 = por %p264, %p265
      %p268 = scmp.ne.s32.totalorder %s253, %s267
      %p269 = scmp.eq.s32.totalorder %s39, 0
      %p270 = por %p268, %p269
      %s272 = sadd.s32 %s271, 1
      %p275 = scmp.eq.s32.totalorder %s33, 1
      %p276 = scmp.ne.s32.totalorder %s271, %s273
      %p277 = scmp.eq.s32.totalorder %s33, 0
      %p278 = por %p276, %p277
      %p279 = scmp.ne.s32.totalorder %s271, %s273
      %p280 = scmp.eq.s32.totalorder %s38, 1
      %p281 = por %p279, %p280
      %p282 = scmp.ne.s32.totalorder %s273, %s274
      %p283 = scmp.eq.s32.totalorder %s38, 0
      %p284 = por %p282, %p283
      %p285 = scmp.ne.s32.totalorder %s273, %s274
      %p286 = scmp.eq.s32.totalorder %s39, 1
      %p287 = por %p285, %p286
      %p289 = scmp.ne.s32.totalorder %s274, %s288
      %p290 = scmp.eq.s32.totalorder %s39, 0
      %p291 = por %p289, %p290
      %s293 = sadd.s32 %s292, 1
      %p296 = scmp.eq.s32.totalorder %s33, 1
      %p297 = scmp.ne.s32.totalorder %s292, %s294
      %p298 = scmp.eq.s32.totalorder %s33, 0
      %p299 = por %p297, %p298
      %p300 = scmp.ne.s32.totalorder %s292, %s294
      %p301 = scmp.eq.s32.totalorder %s38, 1
      %p302 = por %p300, %p301
      %p303 = scmp.ne.s32.totalorder %s294, %s295
      %p304 = scmp.eq.s32.totalorder %s38, 0
      %p305 = por %p303, %p304
      %p306 = scmp.ne.s32.totalorder %s294, %s295
      %p307 = scmp.eq.s32.totalorder %s39, 1
      %p308 = por %p306, %p307
      %p310 = scmp.ne.s32.totalorder %s295, %s309
      %p311 = scmp.eq.s32.totalorder %s39, 0
      %p312 = por %p310, %p311
      %s314 = sadd.s32 %s313, 1
      %p317 = scmp.eq.s32.totalorder %s33, 1
      %p318 = scmp.ne.s32.totalorder %s313, %s315
      %p319 = scmp.eq.s32.totalorder %s33, 0
      %p320 = por %p318, %p319
      %p321 = scmp.ne.s32.totalorder %s313, %s315
      %p322 = scmp.eq.s32.totalorder %s38, 1
      %p323 = por %p321, %p322
      %p324 = scmp.ne.s32.totalorder %s315, %s316
      %p325 = scmp.eq.s32.totalorder %s38, 0
      %p326 = por %p324, %p325
      %p327 = scmp.ne.s32.totalorder %s315, %s316
      %p328 = scmp.eq.s32.totalorder %s39, 1
      %p329 = por %p327, %p328
      %p331 = scmp.ne.s32.totalorder %s316, %s330
      %p332 = scmp.eq.s32.totalorder %s39, 0
      %p333 = por %p331, %p332
      %s335 = sadd.s32 %s334, 1
      %p338 = scmp.eq.s32.totalorder %s33, 1
      %p339 = scmp.ne.s32.totalorder %s334, %s336
      %p340 = scmp.eq.s32.totalorder %s33, 0
      %p341 = por %p339, %p340
      %p342 = scmp.ne.s32.totalorder %s334, %s336
      %p343 = scmp.eq.s32.totalorder %s38, 1
      %p344 = por %p342, %p343
      %p345 = scmp.ne.s32.totalorder %s336, %s337
      %p346 = scmp.eq.s32.totalorder %s38, 0
      %p347 = por %p345, %p346
      %p348 = scmp.ne.s32.totalorder %s336, %s337
      %p349 = scmp.eq.s32.totalorder %s39, 1
      %p350 = por %p348, %p349
      %p352 = scmp.ne.s32.totalorder %s337, %s351
      %p353 = scmp.eq.s32.totalorder %s39, 0
      %p354 = por %p352, %p353
      %s356 = sadd.s32 %s355, 1
      %p359 = scmp.eq.s32.totalorder %s33, 1
      %p360 = scmp.ne.s32.totalorder %s355, %s357
      %p361 = scmp.eq.s32.totalorder %s33, 0
      %p362 = por %p360, %p361
      %p363 = scmp.ne.s32.totalorder %s355, %s357
      %p364 = scmp.eq.s32.totalorder %s38, 1
      %p365 = por %p363, %p364
      %p366 = scmp.ne.s32.totalorder %s357, %s358
      %p367 = scmp.eq.s32.totalorder %s38, 0
      %p368 = por %p366, %p367
      %p369 = scmp.ne.s32.totalorder %s357, %s358
      %p370 = scmp.eq.s32.totalorder %s39, 1
      %p371 = por %p369, %p370
      %p373 = scmp.ne.s32.totalorder %s358, %s372
      %p374 = scmp.eq.s32.totalorder %s39, 0
      %p375 = por %p373, %p374
      %s377 = sadd.s32 %s376, 1
      %p380 = scmp.eq.s32.totalorder %s33, 1
      %p381 = scmp.ne.s32.totalorder %s376, %s378
      %p382 = scmp.eq.s32.totalorder %s33, 0
      %p383 = por %p381, %p382
      %p384 = scmp.ne.s32.totalorder %s376, %s378
      %p385 = scmp.eq.s32.totalorder %s38, 1
      %p386 = por %p384, %p385
      %p387 = scmp.ne.s32.totalorder %s378, %s379
      %p388 = scmp.eq.s32.totalorder %s38, 0
      %p389 = por %p387, %p388
      %p390 = scmp.ne.s32.totalorder %s378, %s379
      %p391 = scmp.eq.s32.totalorder %s39, 1
      %p392 = por %p390, %p391
      %p394 = scmp.ne.s32.totalorder %s379, %s393
      %p395 = scmp.eq.s32.totalorder %s39, 0
      %p396 = por %p394, %p395
      %s398 = sadd.s32 %s397, 1
      %p401 = scmp.eq.s32.totalorder %s33, 1
      %p402 = scmp.ne.s32.totalorder %s397, %s399
      %p403 = scmp.eq.s32.totalorder %s33, 0
      %p404 = por %p402, %p403
      %p405 = scmp.ne.s32.totalorder %s397, %s399
      %p406 = scmp.eq.s32.totalorder %s38, 1
      %p407 = por %p405, %p406
      %p408 = scmp.ne.s32.totalorder %s399, %s400
      %p409 = scmp.eq.s32.totalorder %s38, 0
      %p410 = por %p408, %p409
      %p411 = scmp.ne.s32.totalorder %s399, %s400
      %p412 = scmp.eq.s32.totalorder %s39, 1
      %p413 = por %p411, %p412
      %p415 = scmp.ne.s32.totalorder %s400, %s414
      %p416 = scmp.eq.s32.totalorder %s39, 0
      %p417 = por %p415, %p416
      %s419 = sadd.s32 %s418, 1
      %p422 = scmp.eq.s32.totalorder %s33, 1
      %p423 = scmp.ne.s32.totalorder %s418, %s420
      %p424 = scmp.eq.s32.totalorder %s33, 0
      %p425 = por %p423, %p424
      %p426 = scmp.ne.s32.totalorder %s418, %s420
      %p427 = scmp.eq.s32.totalorder %s38, 1
      %p428 = por %p426, %p427
      %p429 = scmp.ne.s32.totalorder %s420, %s421
      %p430 = scmp.eq.s32.totalorder %s38, 0
      %p431 = por %p429, %p430
      %p432 = scmp.ne.s32.totalorder %s420, %s421
      %p433 = scmp.eq.s32.totalorder %s39, 1
      %p434 = por %p432, %p433
      %p436 = scmp.ne.s32.totalorder %s421, %s435
      %p437 = scmp.eq.s32.totalorder %s39, 0
      %p438 = por %p436, %p437
      %s439 = ssub.s32 %s33, %s40
      %p440 = scmp.eq.s32.totalorder %s439, 0
      %s442 = sadd.s32 %s441, 1
      %s443 = scalar_select %p440, %s441, %s442
      %p446 = pneg %p440
      %p447 = scmp.eq.s32.totalorder %s33, 1
      %p448 = por %p446, %p447
      %p449 = scmp.ne.s32.totalorder %s441, %s444
      %p450 = scmp.eq.s32.totalorder %s33, 0
      %p451 = por %p449, %p450
      %p452 = scmp.ne.s32.totalorder %s441, %s444
      %p453 = scmp.eq.s32.totalorder %s38, 1
      %p454 = por %p452, %p453
      %p455 = scmp.ne.s32.totalorder %s444, %s445
      %p456 = scmp.eq.s32.totalorder %s38, 0
      %p457 = por %p455, %p456
      %p458 = scmp.ne.s32.totalorder %s444, %s445
      %p459 = scmp.eq.s32.totalorder %s39, 1
      %p460 = por %p458, %p459
      %p462 = scmp.ne.s32.totalorder %s445, %s461
      %p463 = scmp.eq.s32.totalorder %s39, 0
      %p464 = por %p462, %p463
      %s465 = ssub.s32 %s33, %s40
      %p466 = scmp.eq.s32.totalorder %s465, 0
      %s468 = sadd.s32 %s467, 1
      %s469 = scalar_select %p466, %s467, %s468
      %p472 = pneg %p466
      %p473 = scmp.eq.s32.totalorder %s33, 1
      %p474 = por %p472, %p473
      %p475 = scmp.ne.s32.totalorder %s467, %s470
      %p476 = scmp.eq.s32.totalorder %s33, 0
      %p477 = por %p475, %p476
      %p478 = scmp.ne.s32.totalorder %s467, %s470
      %p479 = scmp.eq.s32.totalorder %s38, 1
      %p480 = por %p478, %p479
      %p481 = scmp.ne.s32.totalorder %s470, %s471
      %p482 = scmp.eq.s32.totalorder %s38, 0
      %p483 = por %p481, %p482
      %p484 = scmp.ne.s32.totalorder %s470, %s471
      %p485 = scmp.eq.s32.totalorder %s39, 1
      %p486 = por %p484, %p485
      %p488 = scmp.ne.s32.totalorder %s471, %s487
      %p489 = scmp.eq.s32.totalorder %s39, 0
      %p490 = por %p488, %p489
      %s491 = ssub.s32 %s33, %s40
      %p492 = scmp.eq.s32.totalorder %s491, 0
      %s494 = sadd.s32 %s493, 1
      %s495 = scalar_select %p492, %s493, %s494
      %p498 = pneg %p492
      %p499 = scmp.eq.s32.totalorder %s33, 1
      %p500 = por %p498, %p499
      %p501 = scmp.ne.s32.totalorder %s493, %s496
      %p502 = scmp.eq.s32.totalorder %s33, 0
      %p503 = por %p501, %p502
      %p504 = scmp.ne.s32.totalorder %s493, %s496
      %p505 = scmp.eq.s32.totalorder %s38, 1
      %p506 = por %p504, %p505
      %p507 = scmp.ne.s32.totalorder %s496, %s497
      %p508 = scmp.eq.s32.totalorder %s38, 0
      %p509 = por %p507, %p508
      %p510 = scmp.ne.s32.totalorder %s496, %s497
      %p511 = scmp.eq.s32.totalorder %s39, 1
      %p512 = por %p510, %p511
      %p514 = scmp.ne.s32.totalorder %s497, %s513
      %p515 = scmp.eq.s32.totalorder %s39, 0
      %p516 = por %p514, %p515
      %p517 = scmp.le.s32.totalorder 1, %s33
      %p518 = scmp.lt.s32.totalorder %s33, 3
      %p519 = pnand %p517, %p518
      %p520 = pneg %p519
      // Predicated region
      $region9: #{coupling_forward.1} parent=5 // pred_check
        _
      $region10: #{coupling_forward.1} parent=5 // pred_check_branch
        %522 = sbr.rel (%p519) target = $region12
      $region11: #{coupling_forward.1} parent=5 // pred_region
        %s523 = ssub.s32 %s33, 1
        // Predicated region
        $region13: #{coupling_forward.1} parent=11 // pred_check
          %p524 = pneg %p158
        $region14: #{coupling_forward.1} parent=11 // pred_check_branch
          %526 = sbr.rel (%p524) target = $region16
        $region15: #{coupling_forward.1} parent=11 // pred_region
          _
        $region16: #{coupling_forward.1} parent=11 // pred_fallthru
          _
        // Predicated region
        $region17: #{coupling_forward.1} parent=11 // pred_check
          %p527 = pneg %p179
        $region18: #{coupling_forward.1} parent=11 // pred_check_branch
          %529 = sbr.rel (%p527) target = $region20
        $region19: #{coupling_forward.1} parent=11 // pred_region
          _
        $region20: #{coupling_forward.1} parent=11 // pred_fallthru
          _
        // Predicated region
        $region21: #{coupling_forward.1} parent=11 // pred_check
          %p530 = pneg %p200
        $region22: #{coupling_forward.1} parent=11 // pred_check_branch
          %532 = sbr.rel (%p530) target = $region24
        $region23: #{coupling_forward.1} parent=11 // pred_region
          _
        $region24: #{coupling_forward.1} parent=11 // pred_fallthru
          _
        // Predicated region
        $region25: #{coupling_forward.1} parent=11 // pred_check
          %p533 = pneg %p221
        $region26: #{coupling_forward.1} parent=11 // pred_check_branch
          %535 = sbr.rel (%p533) target = $region28
        $region27: #{coupling_forward.1} parent=11 // pred_region
          _
        $region28: #{coupling_forward.1} parent=11 // pred_fallthru
          _
        // Predicated region
        $region29: #{coupling_forward.1} parent=11 // pred_check
          %p536 = pneg %p242
        $region30: #{coupling_forward.1} parent=11 // pred_check_branch
          %538 = sbr.rel (%p536) target = $region32
        $region31: #{coupling_forward.1} parent=11 // pred_region
          _
        $region32: #{coupling_forward.1} parent=11 // pred_fallthru
          _
        // Predicated region
        $region33: #{coupling_forward.1} parent=11 // pred_check
          %p539 = pneg %p263
        $region34: #{coupling_forward.1} parent=11 // pred_check_branch
          %541 = sbr.rel (%p539) target = $region36
        $region35: #{coupling_forward.1} parent=11 // pred_region
          _
        $region36: #{coupling_forward.1} parent=11 // pred_fallthru
          _
        // Predicated region
        $region37: #{coupling_forward.1} parent=11 // pred_check
          %p542 = pneg %p284
        $region38: #{coupling_forward.1} parent=11 // pred_check_branch
          %544 = sbr.rel (%p542) target = $region40
        $region39: #{coupling_forward.1} parent=11 // pred_region
          _
        $region40: #{coupling_forward.1} parent=11 // pred_fallthru
          _
        // Predicated region
        $region41: #{coupling_forward.1} parent=11 // pred_check
          %p545 = pneg %p305
        $region42: #{coupling_forward.1} parent=11 // pred_check_branch
          %547 = sbr.rel (%p545) target = $region44
        $region43: #{coupling_forward.1} parent=11 // pred_region
          _
        $region44: #{coupling_forward.1} parent=11 // pred_fallthru
          _
        // Predicated region
        $region45: #{coupling_forward.1} parent=11 // pred_check
          %p548 = pneg %p326
        $region46: #{coupling_forward.1} parent=11 // pred_check_branch
          %550 = sbr.rel (%p548) target = $region48
        $region47: #{coupling_forward.1} parent=11 // pred_region
          _
        $region48: #{coupling_forward.1} parent=11 // pred_fallthru
          _
        // Predicated region
        $region49: #{coupling_forward.1} parent=11 // pred_check
          %p551 = pneg %p347
        $region50: #{coupling_forward.1} parent=11 // pred_check_branch
          %553 = sbr.rel (%p551) target = $region52
        $region51: #{coupling_forward.1} parent=11 // pred_region
          _
        $region52: #{coupling_forward.1} parent=11 // pred_fallthru
          _
        // Predicated region
        $region53: #{coupling_forward.1} parent=11 // pred_check
          %p554 = pneg %p368
        $region54: #{coupling_forward.1} parent=11 // pred_check_branch
          %556 = sbr.rel (%p554) target = $region56
        $region55: #{coupling_forward.1} parent=11 // pred_region
          _
        $region56: #{coupling_forward.1} parent=11 // pred_fallthru
          _
        // Predicated region
        $region57: #{coupling_forward.1} parent=11 // pred_check
          %p557 = pneg %p389
        $region58: #{coupling_forward.1} parent=11 // pred_check_branch
          %559 = sbr.rel (%p557) target = $region60
        $region59: #{coupling_forward.1} parent=11 // pred_region
          _
        $region60: #{coupling_forward.1} parent=11 // pred_fallthru
          _
        // Predicated region
        $region61: #{coupling_forward.1} parent=11 // pred_check
          %p560 = pneg %p410
        $region62: #{coupling_forward.1} parent=11 // pred_check_branch
          %562 = sbr.rel (%p560) target = $region64
        $region63: #{coupling_forward.1} parent=11 // pred_region
          _
        $region64: #{coupling_forward.1} parent=11 // pred_fallthru
          _
        // Predicated region
        $region65: #{coupling_forward.1} parent=11 // pred_check
          %p563 = pneg %p431
        $region66: #{coupling_forward.1} parent=11 // pred_check_branch
          %565 = sbr.rel (%p563) target = $region68
        $region67: #{coupling_forward.1} parent=11 // pred_region
          _
        $region68: #{coupling_forward.1} parent=11 // pred_fallthru
          _
      $region12: #{coupling_forward.1} parent=5 // pred_fallthru
        _
      %p566 = scmp.lt.s32.totalorder %s33, 2
      // Predicated region
      $region69: #{coupling_forward.1} parent=5 // pred_check
        %p567 = pneg %p566
      $region70: #{coupling_forward.1} parent=5 // pred_check_branch
        %569 = sbr.rel (%p567) target = $region72
      $region71: #{coupling_forward.1} parent=5 // pred_region
        // Predicated region
        $region73: #{coupling_forward.1} parent=71 // pred_check
          %p570 = pneg %p53
        $region74: #{coupling_forward.1} parent=71 // pred_check_branch
          %572 = sbr.rel (%p570) target = $region76
        $region75: #{coupling_forward.1} parent=71 // pred_region
          %p573 = scmp.lt.s32.totalorder %s33, 1
          %s574 = scalar_select %p573, %s33, 1
          %s575 = smul.addr %s574, 8
          %s576 = scalar_lea.vmem %s0, %s575
        $region76: #{coupling_forward.1} parent=71 // pred_fallthru
          _
        // Predicated region
        $region77: #{coupling_forward.1} parent=71 // pred_check
          %p577 = pneg %p79
        $region78: #{coupling_forward.1} parent=71 // pred_check_branch
          %579 = sbr.rel (%p577) target = $region80
        $region79: #{coupling_forward.1} parent=71 // pred_region
          %p580 = scmp.lt.s32.totalorder %s33, 1
          %s581 = scalar_select %p580, %s33, 1
          %s582 = smul.addr %s581, 8
          %s583 = scalar_lea.vmem %s1, %s582
        $region80: #{coupling_forward.1} parent=71 // pred_fallthru
          _
        // Predicated region
        $region81: #{coupling_forward.1} parent=71 // pred_check
          %p584 = pneg %p105
        $region82: #{coupling_forward.1} parent=71 // pred_check_branch
          %586 = sbr.rel (%p584) target = $region84
        $region83: #{coupling_forward.1} parent=71 // pred_region
          %p587 = scmp.lt.s32.totalorder %s33, 1
          %s588 = scalar_select %p587, %s33, 1
          %s589 = smul.addr %s588, 8
          %s590 = scalar_lea.vmem %s2, %s589
        $region84: #{coupling_forward.1} parent=71 // pred_fallthru
          _
        // Predicated region
        $region85: #{coupling_forward.1} parent=71 // pred_check
          %p591 = pneg %p131
        $region86: #{coupling_forward.1} parent=71 // pred_check_branch
          %593 = sbr.rel (%p591) target = $region88
        $region87: #{coupling_forward.1} parent=71 // pred_region
          %p594 = scmp.lt.s32.totalorder %s33, 1
          %s595 = scalar_select %p594, %s33, 1
          %s596 = smul.addr %s595, 8
          %s597 = scalar_lea.vmem %s3, %s596
        $region88: #{coupling_forward.1} parent=71 // pred_fallthru
          _
      $region72: #{coupling_forward.1} parent=5 // pred_fallthru
        _
      %p598 = scmp.le.s32.totalorder 1, %s33
      %p599 = scmp.lt.s32.totalorder %s33, 3
      %p600 = pnand %p598, %p599
      %p601 = pneg %p600
      // Predicated region
      $region89: #{coupling_forward.1} parent=5 // pred_check
        _
      $region90: #{coupling_forward.1} parent=5 // pred_check_branch
        %603 = sbr.rel (%p600) target = $region92
      $region91: #{coupling_forward.1} parent=5 // pred_region
        %s604 = ssub.s32 %s33, 1
        %p605 = scmp.lt.s32.totalorder %s38, 1
        %s606 = scalar_select %p605, %s38, 1
        %s607 = smul.addr %s606, 8
        %s608 = scalar_lea.vmem %s0, %s607
        %p609 = pneg %p59
        %p610 = pneg %p56
        %p611 = scmp.lt.s32.totalorder %s38, 1
        %s612 = scalar_select %p611, %s38, 1
        %s613 = smul.addr %s612, 8
        %s614 = scalar_lea.vmem %s1, %s613
        %p615 = pneg %p85
        %p616 = pneg %p82
        %p617 = scmp.lt.s32.totalorder %s38, 1
        %s618 = scalar_select %p617, %s38, 1
        %s619 = smul.addr %s618, 8
        %s620 = scalar_lea.vmem %s2, %s619
        %p621 = pneg %p111
        %p622 = pneg %p108
        %p623 = scmp.lt.s32.totalorder %s38, 1
        %s624 = scalar_select %p623, %s38, 1
        %s625 = smul.addr %s624, 8
        %s626 = scalar_lea.vmem %s3, %s625
        %p627 = pneg %p137
        %p628 = pneg %p134
        %p629 = pneg %p158
        %p630 = pneg %p155
        %p631 = pneg %p179
        %p632 = pneg %p176
        %p633 = pneg %p200
        %p634 = pneg %p197
        %p635 = pneg %p221
        %p636 = pneg %p218
        %p637 = pneg %p242
        %p638 = pneg %p239
        %p639 = pneg %p263
        %p640 = pneg %p260
        %p641 = pneg %p284
        %p642 = pneg %p281
        %p643 = pneg %p305
        %p644 = pneg %p302
        %p645 = pneg %p326
        %p646 = pneg %p323
        %p647 = pneg %p347
        %p648 = pneg %p344
        %p649 = pneg %p368
        %p650 = pneg %p365
        %p651 = pneg %p389
        %p652 = pneg %p386
        %p653 = pneg %p410
        %p654 = pneg %p407
        %p655 = pneg %p431
        %p656 = pneg %p428
        %p657 = pneg %p457
        %p658 = pneg %p454
        %s659 = sand.u32 %s444, 1
        %s660 = scalar_lea.sflag [#allocation3], %s659
        %s661 = sand.u32 %s444, 1
        %s662 = smul.addr %s661, 8
        %s663 = scalar_lea.vmem [#allocation2], %s662
        %p664 = pneg %p483
        %p665 = pneg %p480
        %s666 = sand.u32 %s38, 1
        %s667 = scalar_lea.sflag [#allocation5], %s666
        %s668 = sand.u32 %s470, 1
        %s669 = smul.addr %s668, 8
        %s670 = scalar_lea.vmem [#allocation4], %s669
        %p671 = pneg %p509
        %p672 = pneg %p506
        %s673 = sand.u32 %s38, 1
        %s674 = scalar_lea.sflag [#allocation5], %s673
        %s675 = sand.u32 %s496, 1
        %s676 = smul.addr %s675, 8
        %s677 = scalar_lea.vmem [#allocation6], %s676
        %p678 = scmp.lt.s32.totalorder %s38, 1
        %s679 = scalar_select %p678, %s38, 1
        %s680 = smul.addr %s679, 8
        %s681 = scalar_lea.vmem %s0, %s680
        %p682 = scmp.lt.s32.totalorder %s38, 1
        %s683 = scalar_select %p682, %s38, 1
        %s684 = smul.addr %s683, 8
        %s685 = scalar_lea.vmem %s1, %s684
        %p686 = scmp.lt.s32.totalorder %s38, 1
        %s687 = scalar_select %p686, %s38, 1
        %s688 = smul.addr %s687, 8
        %s689 = scalar_lea.vmem %s2, %s688
        %p690 = scmp.lt.s32.totalorder %s38, 1
        %s691 = scalar_select %p690, %s38, 1
        %s692 = smul.addr %s691, 8
        %s693 = scalar_lea.vmem %s3, %s692
        %v694 = vld [vmem:[%s16] sm:$0xff]
        %v695 = vld [vmem:[%s16 + $0x8] sm:$0xff]
        %v696 = vld [vmem:[%s16 + $0x10] sm:$0xff]
        %v697 = vld [vmem:[%s16 + $0x18] sm:$0xff]
        %v698 = vld [vmem:[%s16 + $0x20] sm:$0xff]
        %v699 = vld [vmem:[%s16 + $0x28] sm:$0xff]
        %v700 = vld [vmem:[%s16 + $0x30] sm:$0xff]
        %v701 = vld [vmem:[%s16 + $0x38] sm:$0xff]
        %v702 = vld [vmem:[%s17] sm:$0xf]
        %v703 = vld [vmem:[%s681] sm:$0xff]
        %v704 = vld [vmem:[%s685] sm:$0xff]
        %v705 = vld [vmem:[%s4] sm:$0xff]
        %v706 = vld [vmem:[%s4 + $0x8] sm:$0xff]
        %v707 = vld [vmem:[%s4 + $0x10] sm:$0xff]
        %v708 = vld [vmem:[%s5] sm:$0xff]
        %v709 = vld [vmem:[%s5 + $0x8] sm:$0xff]
        %v710 = vld [vmem:[%s5 + $0x10] sm:$0xff]
        %v711 = vld [vmem:[%s5 + $0x18] sm:$0xff]
        %v712 = vld [vmem:[%s5 + $0x20] sm:$0xff]
        %v713 = vld [vmem:[%s5 + $0x28] sm:$0xff]
        %v714 = vld [vmem:[%s5 + $0x30] sm:$0xff]
        %v715 = vld [vmem:[%s5 + $0x38] sm:$0xff]
        %v716 = vld [vmem:[%s6] sm:$0xf]
        %v717 = vld [vmem:[%s7] sm:$0xff]
        %v718 = vld [vmem:[%s7 + $0x8] sm:$0xff]
        %v719 = vld [vmem:[%s7 + $0x10] sm:$0xff]
        %v720 = vld [vmem:[%s7 + $0x18] sm:$0xff]
        %v721 = vld [vmem:[%s7 + $0x20] sm:$0xff]
        %v722 = vld [vmem:[%s7 + $0x28] sm:$0xff]
        %v723 = vld [vmem:[%s7 + $0x30] sm:$0xff]
        %v724 = vld [vmem:[%s7 + $0x38] sm:$0xff]
        %v725 = vld [vmem:[%s8] sm:$0xff]
        %v726 = vld [vmem:[%s8 + $0x8] sm:$0xff]
        %v727 = vld [vmem:[%s9] sm:$0x1]
        %v728 = vand.u32 2147483647, %v704
        %vm729 = vcmp.gt.f32.partialorder %v728, 0.0
        %vm730 = vcmask 195584
        %v732 = vsel %vm730, %v703, 0
        %734 = vmatprep.subr.mxu0 0.0
        %735 = vmatpush1.msra.mxu0 %v705
        %736 = vmatprep.subr.mxu0 0.0
        %737 = vmatpush1.msra.mxu0 %v706
        %738 = vmatprep.subr.mxu0 0.0
        %739 = vmatpush1.msra.mxu0 %v707
        %740 = vmatprep.subr.mxu0 0.0
        %741 = vmatpush1.msra.mxu0 0.0
        %742 = vmatprep.subr.mxu0 0.0
        %743 = vmatpush1.msra.mxu0 0.0
        %744 = vmatprep.subr.mxu0 0.0
        %745 = vmatpush1.msra.mxu0 0.0
        %746 = vmatprep.subr.mxu0 0.0
        %747 = vmatpush1.msra.mxu0 0.0
        %748 = vmatprep.subr.mxu0 0.0
        %749 = vmatpush1.msra.mxu0 0.0
        %750 = vmatprep.subr.mxu0 0.0
        %751 = vmatpush1.msra.mxu0 0.0
        %752 = vmatprep.subr.mxu0 0.0
        %753 = vmatpush1.msra.mxu0 0.0
        %754 = vmatprep.subr.mxu0 0.0
        %755 = vmatpush1.msra.mxu0 0.0
        %756 = vmatprep.subr.mxu0 0.0
        %757 = vmatpush1.msra.mxu0 0.0
        %758 = vmatprep.subr.mxu0 0.0
        %759 = vmatpush1.msra.mxu0 0.0
        %760 = vmatprep.subr.mxu0 0.0
        %761 = vmatpush1.msra.mxu0 0.0
        %762 = vmatprep.subr.mxu0 0.0
        %763 = vmatpush1.msra.mxu0 0.0
        %764 = vmatprep.subr.mxu0 0.0
        %765 = vmatpush1.msra.mxu0 0.0
        %766 = vmatprep.subr.mxu0 0.0
        %767 = vmatpush1.msra.mxu0 0.0
        %768 = vmatprep.subr.mxu0 0.0
        %769 = vmatpush1.msra.mxu0 0.0
        %770 = vmatprep.subr.mxu0 0.0
        %771 = vmatpush1.msra.mxu0 0.0
        %772 = vmatprep.subr.mxu0 0.0
        %773 = vmatpush1.msra.mxu0 0.0
        %774 = vmatprep.subr.mxu0 0.0
        %775 = vmatpush1.msra.mxu0 0.0
        %776 = vmatprep.subr.mxu0 0.0
        %777 = vmatpush1.msra.mxu0 0.0
        %778 = vmatprep.subr.mxu0 0.0
        %779 = vmatpush1.msra.mxu0 0.0
        %780 = vmatprep.subr.mxu0 0.0
        %781 = vmatpush1.msra.mxu0 0.0
        %782 = vmatprep.subr.mxu0 0.0
        %783 = vmatpush1.msra.mxu0 0.0
        %784 = vmatprep.subr.mxu0 0.0
        %785 = vmatpush1.msra.mxu0 0.0
        %786 = vmatprep.subr.mxu0 0.0
        %787 = vmatpush1.msra.mxu0 0.0
        %788 = vmatprep.subr.mxu0 0.0
        %789 = vmatpush1.msra.mxu0 0.0
        %790 = vmatprep.subr.mxu0 0.0
        %791 = vmatpush1.msra.mxu0 0.0
        %792 = vmatprep.subr.mxu0 0.0
        %793 = vmatpush1.msra.mxu0 0.0
        %794 = vmatprep.subr.mxu0 0.0
        %795 = vmatpush1.msra.mxu0 0.0
        %796 = vmatprep.subr.mxu0 0.0
        %797 = vmatpush1.msra.mxu0 0.0
        %798 = vmatprep.mubr.f32.mxu0 0.0
        %799 = vmatmul.mubr.f32.gmra.mrb[0].mxu0 %v732
        %v800 = vpop.f32.mrb[0].mxu0
        %v801 = vadd.f32 0.0, %v800
        %v802 = vpop.f32.mrb[0].mxu0
        %803 = vdwg.mxu0
        %vm804 = vcmask 523264
        %v806 = vsel %vm804, %v801, 0
        %808 = vmatprep.subr.mxu0 0.0
        %809 = vmatpush1.msra.mxu0 %v708
        %810 = vmatprep.subr.mxu0 0.0
        %811 = vmatpush1.msra.mxu0 %v709
        %812 = vmatprep.subr.mxu0 0.0
        %813 = vmatpush1.msra.mxu0 %v710
        %814 = vmatprep.subr.mxu0 0.0
        %815 = vmatpush1.msra.mxu0 %v711
        %816 = vmatprep.subr.mxu0 0.0
        %817 = vmatpush1.msra.mxu0 %v712
        %818 = vmatprep.subr.mxu0 0.0
        %819 = vmatpush1.msra.mxu0 %v713
        %820 = vmatprep.subr.mxu0 0.0
        %821 = vmatpush1.msra.mxu0 %v714
        %822 = vmatprep.subr.mxu0 0.0
        %823 = vmatpush1.msra.mxu0 %v715
        %824 = vmatprep.subr.mxu0 0.0
        %825 = vmatpush1.msra.mxu0 0.0
        %826 = vmatprep.subr.mxu0 0.0
        %827 = vmatpush1.msra.mxu0 0.0
        %828 = vmatprep.subr.mxu0 0.0
        %829 = vmatpush1.msra.mxu0 0.0
        %830 = vmatprep.subr.mxu0 0.0
        %831 = vmatpush1.msra.mxu0 0.0
        %832 = vmatprep.subr.mxu0 0.0
        %833 = vmatpush1.msra.mxu0 0.0
        %834 = vmatprep.subr.mxu0 0.0
        %835 = vmatpush1.msra.mxu0 0.0
        %836 = vmatprep.subr.mxu0 0.0
        %837 = vmatpush1.msra.mxu0 0.0
        %838 = vmatprep.subr.mxu0 0.0
        %839 = vmatpush1.msra.mxu0 0.0
        %840 = vmatprep.subr.mxu0 0.0
        %841 = vmatpush1.msra.mxu0 0.0
        %842 = vmatprep.subr.mxu0 0.0
        %843 = vmatpush1.msra.mxu0 0.0
        %844 = vmatprep.subr.mxu0 0.0
        %845 = vmatpush1.msra.mxu0 0.0
        %846 = vmatprep.subr.mxu0 0.0
        %847 = vmatpush1.msra.mxu0 0.0
        %848 = vmatprep.subr.mxu0 0.0
        %849 = vmatpush1.msra.mxu0 0.0
        %850 = vmatprep.subr.mxu0 0.0
        %851 = vmatpush1.msra.mxu0 0.0
        %852 = vmatprep.subr.mxu0 0.0
        %853 = vmatpush1.msra.mxu0 0.0
        %854 = vmatprep.subr.mxu0 0.0
        %855 = vmatpush1.msra.mxu0 0.0
        %856 = vmatprep.subr.mxu0 0.0
        %857 = vmatpush1.msra.mxu0 0.0
        %858 = vmatprep.subr.mxu0 0.0
        %859 = vmatpush1.msra.mxu0 0.0
        %860 = vmatprep.subr.mxu0 0.0
        %861 = vmatpush1.msra.mxu0 0.0
        %862 = vmatprep.subr.mxu0 0.0
        %863 = vmatpush1.msra.mxu0 0.0
        %864 = vmatprep.subr.mxu0 0.0
        %865 = vmatpush1.msra.mxu0 0.0
        %866 = vmatprep.subr.mxu0 0.0
        %867 = vmatpush1.msra.mxu0 0.0
        %868 = vmatprep.subr.mxu0 0.0
        %869 = vmatpush1.msra.mxu0 0.0
        %870 = vmatprep.subr.mxu0 0.0
        %871 = vmatpush1.msra.mxu0 0.0
        %872 = vmatprep.mubr.f32.mxu0 0.0
        %873 = vmatmul.mubr.f32.gmra.mrb[0].mxu0 %v806
        %v874 = vpop.f32.mrb[0].mxu0
        %v875 = vadd.f32 0.0, %v874
        %v876 = vpop.f32.mrb[0].mxu0
        %877 = vdwg.mxu0
        %v879 = vsel %vm804, %v716, 0
        %881 = vmatprep.subr.mxu0 0.0
        %882 = vmatpush1.xpose.msra.mxu0 %v806
        %883 = vmatprep.subr.mxu0 0.0
        %884 = vmatpush1.xpose.msra.mxu0 0.0
        %885 = vmatprep.subr.mxu0 0.0
        %886 = vmatpush1.xpose.msra.mxu0 0.0
        %887 = vmatprep.subr.mxu0 0.0
        %888 = vmatpush1.xpose.msra.mxu0 0.0
        %889 = vmatprep.subr.mxu0 0.0
        %890 = vmatpush1.xpose.msra.mxu0 0.0
        %891 = vmatprep.subr.mxu0 0.0
        %892 = vmatpush1.xpose.msra.mxu0 0.0
        %893 = vmatprep.subr.mxu0 0.0
        %894 = vmatpush1.xpose.msra.mxu0 0.0
        %895 = vmatprep.subr.mxu0 0.0
        %896 = vmatpush1.xpose.msra.mxu0 0.0
        %897 = vmatprep.subr.mxu0 0.0
        %898 = vmatpush1.xpose.msra.mxu0 0.0
        %899 = vmatprep.subr.mxu0 0.0
        %900 = vmatpush1.xpose.msra.mxu0 0.0
        %901 = vmatprep.subr.mxu0 0.0
        %902 = vmatpush1.xpose.msra.mxu0 0.0
        %903 = vmatprep.subr.mxu0 0.0
        %904 = vmatpush1.xpose.msra.mxu0 0.0
        %905 = vmatprep.subr.mxu0 0.0
        %906 = vmatpush1.xpose.msra.mxu0 0.0
        %907 = vmatprep.subr.mxu0 0.0
        %908 = vmatpush1.xpose.msra.mxu0 0.0
        %909 = vmatprep.subr.mxu0 0.0
        %910 = vmatpush1.xpose.msra.mxu0 0.0
        %911 = vmatprep.subr.mxu0 0.0
        %912 = vmatpush1.xpose.msra.mxu0 0.0
        %913 = vmatprep.subr.mxu0 0.0
        %914 = vmatpush1.xpose.msra.mxu0 0.0
        %915 = vmatprep.subr.mxu0 0.0
        %916 = vmatpush1.xpose.msra.mxu0 0.0
        %917 = vmatprep.subr.mxu0 0.0
        %918 = vmatpush1.xpose.msra.mxu0 0.0
        %919 = vmatprep.subr.mxu0 0.0
        %920 = vmatpush1.xpose.msra.mxu0 0.0
        %921 = vmatprep.subr.mxu0 0.0
        %922 = vmatpush1.xpose.msra.mxu0 0.0
        %923 = vmatprep.subr.mxu0 0.0
        %924 = vmatpush1.xpose.msra.mxu0 0.0
        %925 = vmatprep.subr.mxu0 0.0
        %926 = vmatpush1.xpose.msra.mxu0 0.0
        %927 = vmatprep.subr.mxu0 0.0
        %928 = vmatpush1.xpose.msra.mxu0 0.0
        %929 = vmatprep.subr.mxu0 0.0
        %930 = vmatpush1.xpose.msra.mxu0 0.0
        %931 = vmatprep.subr.mxu0 0.0
        %932 = vmatpush1.xpose.msra.mxu0 0.0
        %933 = vmatprep.subr.mxu0 0.0
        %934 = vmatpush1.xpose.msra.mxu0 0.0
        %935 = vmatprep.subr.mxu0 0.0
        %936 = vmatpush1.xpose.msra.mxu0 0.0
        %937 = vmatprep.subr.mxu0 0.0
        %938 = vmatpush1.xpose.msra.mxu0 0.0
        %939 = vmatprep.subr.mxu0 0.0
        %940 = vmatpush1.xpose.msra.mxu0 0.0
        %941 = vmatprep.subr.mxu0 0.0
        %942 = vmatpush1.xpose.msra.mxu0 0.0
        %943 = vmatprep.subr.mxu0 0.0
        %944 = vmatpush1.xpose.msra.mxu0 0.0
        %945 = vmatprep.mubr.f32.mxu0 0.0
        %946 = vmatmul.mubr.f32.gmra.mrb[0].mxu0 %v879
        %v947 = vpop.f32.mrb[0].mxu0
        %v948 = vadd.f32 0.0, %v947
        %v949 = vpop.f32.mrb[0].mxu0
        %950 = vdwg.mxu0
        %952 = vset.pattern.permute.xlu0 0
        %953 = vperm.xlu0 %952, %v875
        %v954 = vpop.permute.xlu0 %953
        %v956 = vlaneseq
        %v957 = vshrl.u32 %v956, 7
        %v958 = vsub.s32 0, %v957
        %v959 = vrot.slane %v948, %v958
        %v960 = vadd.f32 %v954, %v959
        %961 = vset.pattern.permute.xlu0 1
        %962 = vperm.xlu0 %961, %v875
        %v963 = vpop.permute.xlu0 %962
        %v965 = vlaneseq
        %v966 = vshrl.u32 %v965, 7
        %v967 = vsub.s32 1, %v966
        %v968 = vrot.slane %v948, %v967
        %v969 = vadd.f32 %v963, %v968
        %970 = vset.pattern.permute.xlu0 2
        %971 = vperm.xlu0 %970, %v875
        %v972 = vpop.permute.xlu0 %971
        %v974 = vlaneseq
        %v975 = vshrl.u32 %v974, 7
        %v976 = vsub.s32 2, %v975
        %v977 = vrot.slane %v948, %v976
        %v978 = vadd.f32 %v972, %v977
        %979 = vset.pattern.permute.xlu0 3
        %980 = vperm.xlu0 %979, %v875
        %v981 = vpop.permute.xlu0 %980
        %v983 = vlaneseq
        %v984 = vshrl.u32 %v983, 7
        %v985 = vsub.s32 3, %v984
        %v986 = vrot.slane %v948, %v985
        %v987 = vadd.f32 %v981, %v986
        %vm988 = vcmp.gt.f32.partialorder %v960, 0.0
        %vm989 = vcmp.gt.f32.partialorder %v969, 0.0
        %vm990 = vcmp.gt.f32.partialorder %v978, 0.0
        %vm991 = vcmp.gt.f32.partialorder %v987, 0.0
        %v992 = vmul.f32 %v960, 0.1
        %v993 = vmul.f32 %v969, 0.1
        %v994 = vmul.f32 %v978, 0.1
        %v995 = vmul.f32 %v987, 0.1
        %v996 = vsel %vm988, %v960, %v992
        %v997 = vsel %vm989, %v969, %v993
        %v998 = vsel %vm990, %v978, %v994
        %v999 = vsel %vm991, %v987, %v995
        %v1000 = vsel %vm729, %v996, -9e+15
        %v1001 = vsel %vm729, %v997, -9e+15
        %v1002 = vsel %vm729, %v998, -9e+15
        %v1003 = vsel %vm729, %v999, -9e+15
        %vm1004 = vcmask 64512
        %v1005 = vsel %vm1004, %v1000, -inf
        %1006 = vmax.xlane.f32.xlu0 %v1005
        %v1007 = vpop.xlane.xlu0 %1006
        %v1008 = vsel %vm1004, %v1001, -inf
        %1009 = vmax.xlane.f32.xlu0 %v1008
        %v1010 = vpop.xlane.xlu0 %1009
        %v1011 = vsel %vm1004, %v1002, -inf
        %1012 = vmax.xlane.f32.xlu0 %v1011
        %v1013 = vpop.xlane.xlu0 %1012
        %v1014 = vsel %vm1004, %v1003, -inf
        %1015 = vmax.xlane.f32.xlu0 %v1014
        %v1016 = vpop.xlane.xlu0 %1015
        %v1017 = vsub.f32 %v1000, %v1007
        %v1018 = vsub.f32 %v1001, %v1010
        %v1019 = vsub.f32 %v1002, %v1013
        %v1020 = vsub.f32 %v1003, %v1016
        %v1021 = vmul.f32 %v1017, 1.442695
        %v1022 = vpow.pop %v1021
        %v1023 = vmul.f32 %v1018, 1.442695
        %v1024 = vpow.pop %v1023
        %v1025 = vmul.f32 %v1019, 1.442695
        %v1026 = vpow.pop %v1025
        %v1027 = vmul.f32 %v1020, 1.442695
        %v1028 = vpow.pop %v1027
        %v1029 = vsel %vm1004, %v1022, 0.0
        %1030 = vadd.xlane.f32.xlu0 %v1029
        %v1031 = vpop.xlane.xlu0 %1030
        %v1032 = vsel %vm1004, %v1024, 0.0
        %1033 = vadd.xlane.f32.xlu0 %v1032
        %v1034 = vpop.xlane.xlu0 %1033
        %v1035 = vsel %vm1004, %v1026, 0.0
        %1036 = vadd.xlane.f32.xlu0 %v1035
        %v1037 = vpop.xlane.xlu0 %1036
        %v1038 = vsel %vm1004, %v1028, 0.0
        %1039 = vadd.xlane.f32.xlu0 %v1038
        %v1040 = vpop.xlane.xlu0 %1039
        %v1041 = vrcp.pop %v1031
        %v1042 = vmul.f32 %v1022, %v1041
        %v1043 = vrcp.pop %v1034
        %v1044 = vmul.f32 %v1024, %v1043
        %v1045 = vrcp.pop %v1037
        %v1046 = vmul.f32 %v1026, %v1045
        %v1047 = vrcp.pop %v1040
        %v1048 = vmul.f32 %v1028, %v1047
        %v1050 = vsel %vm1004, %v1042, 0
        %1052 = vmatprep.subr.mxu0 0.0
        %1053 = vmatpush1.msra.mxu0 %v801
        %1054 = vmatprep.subr.mxu0 0.0
        %1055 = vmatpush1.msra.mxu0 0.0
        %1056 = vmatprep.subr.mxu0 0.0
        %1057 = vmatpush1.msra.mxu0 0.0
        %1058 = vmatprep.subr.mxu0 0.0
        %1059 = vmatpush1.msra.mxu0 0.0
        %1060 = vmatprep.subr.mxu0 0.0
        %1061 = vmatpush1.msra.mxu0 0.0
        %1062 = vmatprep.subr.mxu0 0.0
        %1063 = vmatpush1.msra.mxu0 0.0
        %1064 = vmatprep.subr.mxu0 0.0
        %1065 = vmatpush1.msra.mxu0 0.0
        %1066 = vmatprep.subr.mxu0 0.0
        %1067 = vmatpush1.msra.mxu0 0.0
        %1068 = vmatprep.subr.mxu0 0.0
        %1069 = vmatpush1.msra.mxu0 0.0
        %1070 = vmatprep.subr.mxu0 0.0
        %1071 = vmatpush1.msra.mxu0 0.0
        %1072 = vmatprep.subr.mxu0 0.0
        %1073 = vmatpush1.msra.mxu0 0.0
        %1074 = vmatprep.subr.mxu0 0.0
        %1075 = vmatpush1.msra.mxu0 0.0
        %1076 = vmatprep.subr.mxu0 0.0
        %1077 = vmatpush1.msra.mxu0 0.0
        %1078 = vmatprep.subr.mxu0 0.0
        %1079 = vmatpush1.msra.mxu0 0.0
        %1080 = vmatprep.subr.mxu0 0.0
        %1081 = vmatpush1.msra.mxu0 0.0
        %1082 = vmatprep.subr.mxu0 0.0
        %1083 = vmatpush1.msra.mxu0 0.0
        %1084 = vmatprep.subr.mxu0 0.0
        %1085 = vmatpush1.msra.mxu0 0.0
        %1086 = vmatprep.subr.mxu0 0.0
        %1087 = vmatpush1.msra.mxu0 0.0
        %1088 = vmatprep.subr.mxu0 0.0
        %1089 = vmatpush1.msra.mxu0 0.0
        %1090 = vmatprep.subr.mxu0 0.0
        %1091 = vmatpush1.msra.mxu0 0.0
        %1092 = vmatprep.subr.mxu0 0.0
        %1093 = vmatpush1.msra.mxu0 0.0
        %1094 = vmatprep.subr.mxu0 0.0
        %1095 = vmatpush1.msra.mxu0 0.0
        %1096 = vmatprep.subr.mxu0 0.0
        %1097 = vmatpush1.msra.mxu0 0.0
        %1098 = vmatprep.subr.mxu0 0.0
        %1099 = vmatpush1.msra.mxu0 0.0
        %1100 = vmatprep.subr.mxu0 0.0
        %1101 = vmatpush1.msra.mxu0 0.0
        %1102 = vmatprep.subr.mxu0 0.0
        %1103 = vmatpush1.msra.mxu0 0.0
        %1104 = vmatprep.subr.mxu0 0.0
        %1105 = vmatpush1.msra.mxu0 0.0
        %1106 = vmatprep.subr.mxu0 0.0
        %1107 = vmatpush1.msra.mxu0 0.0
        %1108 = vmatprep.subr.mxu0 0.0
        %1109 = vmatpush1.msra.mxu0 0.0
        %1110 = vmatprep.subr.mxu0 0.0
        %1111 = vmatpush1.msra.mxu0 0.0
        %1112 = vmatprep.subr.mxu0 0.0
        %1113 = vmatpush1.msra.mxu0 0.0
        %1114 = vmatprep.subr.mxu0 0.0
        %1115 = vmatpush1.msra.mxu0 0.0
        %1116 = vmatprep.mubr.f32.mxu0 0.0
        %1117 = vmatmul.mubr.f32.gmra.mrb[0].mxu0 %v1050
        %v1118 = vpop.f32.mrb[0].mxu0
        %v1119 = vadd.f32 0.0, %v1118
        %v1120 = vpop.f32.mrb[0].mxu0
        %1121 = vdwg.mxu0
        %1122 = vrot.lane.b32.xlu0 %v801, 112
        %v1123 = vpop.permute.xlu0 %1122
        %v1126 = vsel %vm1004, %v1044, 0
        %1128 = vmatprep.subr.mxu0 0.0
        %1129 = vmatpush1.msra.mxu0 %v1123
        %1130 = vmatprep.subr.mxu0 0.0
        %1131 = vmatpush1.msra.mxu0 0.0
        %1132 = vmatprep.subr.mxu0 0.0
        %1133 = vmatpush1.msra.mxu0 0.0
        %1134 = vmatprep.subr.mxu0 0.0
        %1135 = vmatpush1.msra.mxu0 0.0
        %1136 = vmatprep.subr.mxu0 0.0
        %1137 = vmatpush1.msra.mxu0 0.0
        %1138 = vmatprep.subr.mxu0 0.0
        %1139 = vmatpush1.msra.mxu0 0.0
        %1140 = vmatprep.subr.mxu0 0.0
        %1141 = vmatpush1.msra.mxu0 0.0
        %1142 = vmatprep.subr.mxu0 0.0
        %1143 = vmatpush1.msra.mxu0 0.0
        %1144 = vmatprep.subr.mxu0 0.0
        %1145 = vmatpush1.msra.mxu0 0.0
        %1146 = vmatprep.subr.mxu0 0.0
        %1147 = vmatpush1.msra.mxu0 0.0
        %1148 = vmatprep.subr.mxu0 0.0
        %1149 = vmatpush1.msra.mxu0 0.0
        %1150 = vmatprep.subr.mxu0 0.0
        %1151 = vmatpush1.msra.mxu0 0.0
        %1152 = vmatprep.subr.mxu0 0.0
        %1153 = vmatpush1.msra.mxu0 0.0
        %1154 = vmatprep.subr.mxu0 0.0
        %1155 = vmatpush1.msra.mxu0 0.0
        %1156 = vmatprep.subr.mxu0 0.0
        %1157 = vmatpush1.msra.mxu0 0.0
        %1158 = vmatprep.subr.mxu0 0.0
        %1159 = vmatpush1.msra.mxu0 0.0
        %1160 = vmatprep.subr.mxu0 0.0
        %1161 = vmatpush1.msra.mxu0 0.0
        %1162 = vmatprep.subr.mxu0 0.0
        %1163 = vmatpush1.msra.mxu0 0.0
        %1164 = vmatprep.subr.mxu0 0.0
        %1165 = vmatpush1.msra.mxu0 0.0
        %1166 = vmatprep.subr.mxu0 0.0
        %1167 = vmatpush1.msra.mxu0 0.0
        %1168 = vmatprep.subr.mxu0 0.0
        %1169 = vmatpush1.msra.mxu0 0.0
        %1170 = vmatprep.subr.mxu0 0.0
        %1171 = vmatpush1.msra.mxu0 0.0
        %1172 = vmatprep.subr.mxu0 0.0
        %1173 = vmatpush1.msra.mxu0 0.0
        %1174 = vmatprep.subr.mxu0 0.0
        %1175 = vmatpush1.msra.mxu0 0.0
        %1176 = vmatprep.subr.mxu0 0.0
        %1177 = vmatpush1.msra.mxu0 0.0
        %1178 = vmatprep.subr.mxu0 0.0
        %1179 = vmatpush1.msra.mxu0 0.0
        %1180 = vmatprep.subr.mxu0 0.0
        %1181 = vmatpush1.msra.mxu0 0.0
        %1182 = vmatprep.subr.mxu0 0.0
        %1183 = vmatpush1.msra.mxu0 0.0
        %1184 = vmatprep.subr.mxu0 0.0
        %1185 = vmatpush1.msra.mxu0 0.0
        %1186 = vmatprep.subr.mxu0 0.0
        %1187 = vmatpush1.msra.mxu0 0.0
        %1188 = vmatprep.subr.mxu0 0.0
        %1189 = vmatpush1.msra.mxu0 0.0
        %1190 = vmatprep.subr.mxu0 0.0
        %1191 = vmatpush1.msra.mxu0 0.0
        %1192 = vmatprep.mubr.f32.mxu0 0.0
        %1193 = vmatmul.mubr.f32.gmra.mrb[0].mxu0 %v1126
        %v1194 = vpop.f32.mrb[0].mxu0
        %v1195 = vadd.f32 0.0, %v1194
        %v1196 = vpop.f32.mrb[0].mxu0
        %1197 = vdwg.mxu0
        %1198 = vrot.lane.b32.xlu0 %v801, 96
        %v1199 = vpop.permute.xlu0 %1198
        %v1202 = vsel %vm1004, %v1046, 0
        %1204 = vmatprep.subr.mxu0 0.0
        %1205 = vmatpush1.msra.mxu0 %v1199
        %1206 = vmatprep.subr.mxu0 0.0
        %1207 = vmatpush1.msra.mxu0 0.0
        %1208 = vmatprep.subr.mxu0 0.0
        %1209 = vmatpush1.msra.mxu0 0.0
        %1210 = vmatprep.subr.mxu0 0.0
        %1211 = vmatpush1.msra.mxu0 0.0
        %1212 = vmatprep.subr.mxu0 0.0
        %1213 = vmatpush1.msra.mxu0 0.0
        %1214 = vmatprep.subr.mxu0 0.0
        %1215 = vmatpush1.msra.mxu0 0.0
        %1216 = vmatprep.subr.mxu0 0.0
        %1217 = vmatpush1.msra.mxu0 0.0
        %1218 = vmatprep.subr.mxu0 0.0
        %1219 = vmatpush1.msra.mxu0 0.0
        %1220 = vmatprep.subr.mxu0 0.0
        %1221 = vmatpush1.msra.mxu0 0.0
        %1222 = vmatprep.subr.mxu0 0.0
        %1223 = vmatpush1.msra.mxu0 0.0
        %1224 = vmatprep.subr.mxu0 0.0
        %1225 = vmatpush1.msra.mxu0 0.0
        %1226 = vmatprep.subr.mxu0 0.0
        %1227 = vmatpush1.msra.mxu0 0.0
        %1228 = vmatprep.subr.mxu0 0.0
        %1229 = vmatpush1.msra.mxu0 0.0
        %1230 = vmatprep.subr.mxu0 0.0
        %1231 = vmatpush1.msra.mxu0 0.0
        %1232 = vmatprep.subr.mxu0 0.0
        %1233 = vmatpush1.msra.mxu0 0.0
        %1234 = vmatprep.subr.mxu0 0.0
        %1235 = vmatpush1.msra.mxu0 0.0
        %1236 = vmatprep.subr.mxu0 0.0
        %1237 = vmatpush1.msra.mxu0 0.0
        %1238 = vmatprep.subr.mxu0 0.0
        %1239 = vmatpush1.msra.mxu0 0.0
        %1240 = vmatprep.subr.mxu0 0.0
        %1241 = vmatpush1.msra.mxu0 0.0
        %1242 = vmatprep.subr.mxu0 0.0
        %1243 = vmatpush1.msra.mxu0 0.0
        %1244 = vmatprep.subr.mxu0 0.0
        %1245 = vmatpush1.msra.mxu0 0.0
        %1246 = vmatprep.subr.mxu0 0.0
        %1247 = vmatpush1.msra.mxu0 0.0
        %1248 = vmatprep.subr.mxu0 0.0
        %1249 = vmatpush1.msra.mxu0 0.0
        %1250 = vmatprep.subr.mxu0 0.0
        %1251 = vmatpush1.msra.mxu0 0.0
        %1252 = vmatprep.subr.mxu0 0.0
        %1253 = vmatpush1.msra.mxu0 0.0
        %1254 = vmatprep.subr.mxu0 0.0
        %1255 = vmatpush1.msra.mxu0 0.0
        %1256 = vmatprep.subr.mxu0 0.0
        %1257 = vmatpush1.msra.mxu0 0.0
        %1258 = vmatprep.subr.mxu0 0.0
        %1259 = vmatpush1.msra.mxu0 0.0
        %1260 = vmatprep.subr.mxu0 0.0
        %1261 = vmatpush1.msra.mxu0 0.0
        %1262 = vmatprep.subr.mxu0 0.0
        %1263 = vmatpush1.msra.mxu0 0.0
        %1264 = vmatprep.subr.mxu0 0.0
        %1265 = vmatpush1.msra.mxu0 0.0
        %1266 = vmatprep.subr.mxu0 0.0
        %1267 = vmatpush1.msra.mxu0 0.0
        %1268 = vmatprep.mubr.f32.mxu0 0.0
        %1269 = vmatmul.mubr.f32.gmra.mrb[0].mxu0 %v1202
        %v1270 = vpop.f32.mrb[0].mxu0
        %v1271 = vadd.f32 0.0, %v1270
        %v1272 = vpop.f32.mrb[0].mxu0
        %1273 = vdwg.mxu0
        %1274 = vrot.lane.b32.xlu0 %v801, 80
        %v1275 = vpop.permute.xlu0 %1274
        %v1278 = vsel %vm1004, %v1048, 0
        %1280 = vmatprep.subr.mxu0 0.0
        %1281 = vmatpush1.msra.mxu0 %v1275
        %1282 = vmatprep.subr.mxu0 0.0
        %1283 = vmatpush1.msra.mxu0 0.0
        %1284 = vmatprep.subr.mxu0 0.0
        %1285 = vmatpush1.msra.mxu0 0.0
        %1286 = vmatprep.subr.mxu0 0.0
        %1287 = vmatpush1.msra.mxu0 0.0
        %1288 = vmatprep.subr.mxu0 0.0
        %1289 = vmatpush1.msra.mxu0 0.0
        %1290 = vmatprep.subr.mxu0 0.0
        %1291 = vmatpush1.msra.mxu0 0.0
        %1292 = vmatprep.subr.mxu0 0.0
        %1293 = vmatpush1.msra.mxu0 0.0
        %1294 = vmatprep.subr.mxu0 0.0
        %1295 = vmatpush1.msra.mxu0 0.0
        %1296 = vmatprep.subr.mxu0 0.0
        %1297 = vmatpush1.msra.mxu0 0.0
        %1298 = vmatprep.subr.mxu0 0.0
        %1299 = vmatpush1.msra.mxu0 0.0
        %1300 = vmatprep.subr.mxu0 0.0
        %1301 = vmatpush1.msra.mxu0 0.0
        %1302 = vmatprep.subr.mxu0 0.0
        %1303 = vmatpush1.msra.mxu0 0.0
        %1304 = vmatprep.subr.mxu0 0.0
        %1305 = vmatpush1.msra.mxu0 0.0
        %1306 = vmatprep.subr.mxu0 0.0
        %1307 = vmatpush1.msra.mxu0 0.0
        %1308 = vmatprep.subr.mxu0 0.0
        %1309 = vmatpush1.msra.mxu0 0.0
        %1310 = vmatprep.subr.mxu0 0.0
        %1311 = vmatpush1.msra.mxu0 0.0
        %1312 = vmatprep.subr.mxu0 0.0
        %1313 = vmatpush1.msra.mxu0 0.0
        %1314 = vmatprep.subr.mxu0 0.0
        %1315 = vmatpush1.msra.mxu0 0.0
        %1316 = vmatprep.subr.mxu0 0.0
        %1317 = vmatpush1.msra.mxu0 0.0
        %1318 = vmatprep.subr.mxu0 0.0
        %1319 = vmatpush1.msra.mxu0 0.0
        %1320 = vmatprep.subr.mxu0 0.0
        %1321 = vmatpush1.msra.mxu0 0.0
        %1322 = vmatprep.subr.mxu0 0.0
        %1323 = vmatpush1.msra.mxu0 0.0
        %1324 = vmatprep.subr.mxu0 0.0
        %1325 = vmatpush1.msra.mxu0 0.0
        %1326 = vmatprep.subr.mxu0 0.0
        %1327 = vmatpush1.msra.mxu0 0.0
        %1328 = vmatprep.subr.mxu0 0.0
        %1329 = vmatpush1.msra.mxu0 0.0
        %1330 = vmatprep.subr.mxu0 0.0
        %1331 = vmatpush1.msra.mxu0 0.0
        %1332 = vmatprep.subr.mxu0 0.0
        %1333 = vmatpush1.msra.mxu0 0.0
        %1334 = vmatprep.subr.mxu0 0.0
        %1335 = vmatpush1.msra.mxu0 0.0
        %1336 = vmatprep.subr.mxu0 0.0
        %1337 = vmatpush1.msra.mxu0 0.0
        %1338 = vmatprep.subr.mxu0 0.0
        %1339 = vmatpush1.msra.mxu0 0.0
        %1340 = vmatprep.subr.mxu0 0.0
        %1341 = vmatpush1.msra.mxu0 0.0
        %1342 = vmatprep.subr.mxu0 0.0
        %1343 = vmatpush1.msra.mxu0 0.0
        %1344 = vmatprep.mubr.f32.mxu0 0.0
        %1345 = vmatmul.mubr.f32.gmra.mrb[0].mxu0 %v1278
        %v1346 = vpop.f32.mrb[0].mxu0
        %v1347 = vadd.f32 0.0, %v1346
        %v1348 = vpop.f32.mrb[0].mxu0
        %1349 = vdwg.mxu0
        %1351 = vrot.lane.b32.xlu0 %v1195, 16
        %v1352 = vpop.permute.xlu0 %1351
        %1355 = vrot.lane.b32.xlu0 %v1271, 32
        %v1356 = vpop.permute.xlu0 %1355
        %1359 = vrot.lane.b32.xlu0 %v1347, 48
        %v1360 = vpop.permute.xlu0 %1359
        %vm1362 = vcmask 130048
        %v1363 = vsel %vm1362, %v1119, %v1352
        %vm1364 = vcmask 261120
        %v1365 = vsel %vm1364, %v1363, %v1356
        %vm1366 = vcmask 392192
        %v1367 = vsel %vm1366, %v1365, %v1360
        %v1368 = vmul.f32 %v1367, %v1367
        %v1370 = vsel %vm804, %v1368, 0
        %1372 = vmatprep.subr.mxu0 0.0
        %1373 = vmatpush1.msra.mxu0 %v694
        %1374 = vmatprep.subr.mxu0 0.0
        %1375 = vmatpush1.msra.mxu0 %v695
        %1376 = vmatprep.subr.mxu0 0.0
        %1377 = vmatpush1.msra.mxu0 %v696
        %1378 = vmatprep.subr.mxu0 0.0
        %1379 = vmatpush1.msra.mxu0 %v697
        %1380 = vmatprep.subr.mxu0 0.0
        %1381 = vmatpush1.msra.mxu0 %v698
        %1382 = vmatprep.subr.mxu0 0.0
        %1383 = vmatpush1.msra.mxu0 %v699
        %1384 = vmatprep.subr.mxu0 0.0
        %1385 = vmatpush1.msra.mxu0 %v700
        %1386 = vmatprep.subr.mxu0 0.0
        %1387 = vmatpush1.msra.mxu0 %v701
        %1388 = vmatprep.subr.mxu0 0.0
        %1389 = vmatpush1.msra.mxu0 0.0
        %1390 = vmatprep.subr.mxu0 0.0
        %1391 = vmatpush1.msra.mxu0 0.0
        %1392 = vmatprep.subr.mxu0 0.0
        %1393 = vmatpush1.msra.mxu0 0.0
        %1394 = vmatprep.subr.mxu0 0.0
        %1395 = vmatpush1.msra.mxu0 0.0
        %1396 = vmatprep.subr.mxu0 0.0
        %1397 = vmatpush1.msra.mxu0 0.0
        %1398 = vmatprep.subr.mxu0 0.0
        %1399 = vmatpush1.msra.mxu0 0.0
        %1400 = vmatprep.subr.mxu0 0.0
        %1401 = vmatpush1.msra.mxu0 0.0
        %1402 = vmatprep.subr.mxu0 0.0
        %1403 = vmatpush1.msra.mxu0 0.0
        %1404 = vmatprep.subr.mxu0 0.0
        %1405 = vmatpush1.msra.mxu0 0.0
        %1406 = vmatprep.subr.mxu0 0.0
        %1407 = vmatpush1.msra.mxu0 0.0
        %1408 = vmatprep.subr.mxu0 0.0
        %1409 = vmatpush1.msra.mxu0 0.0
        %1410 = vmatprep.subr.mxu0 0.0
        %1411 = vmatpush1.msra.mxu0 0.0
        %1412 = vmatprep.subr.mxu0 0.0
        %1413 = vmatpush1.msra.mxu0 0.0
        %1414 = vmatprep.subr.mxu0 0.0
        %1415 = vmatpush1.msra.mxu0 0.0
        %1416 = vmatprep.subr.mxu0 0.0
        %1417 = vmatpush1.msra.mxu0 0.0
        %1418 = vmatprep.subr.mxu0 0.0
        %1419 = vmatpush1.msra.mxu0 0.0
        %1420 = vmatprep.subr.mxu0 0.0
        %1421 = vmatpush1.msra.mxu0 0.0
        %1422 = vmatprep.subr.mxu0 0.0
        %1423 = vmatpush1.msra.mxu0 0.0
        %1424 = vmatprep.subr.mxu0 0.0
        %1425 = vmatpush1.msra.mxu0 0.0
        %1426 = vmatprep.subr.mxu0 0.0
        %1427 = vmatpush1.msra.mxu0 0.0
        %1428 = vmatprep.subr.mxu0 0.0
        %1429 = vmatpush1.msra.mxu0 0.0
        %1430 = vmatprep.subr.mxu0 0.0
        %1431 = vmatpush1.msra.mxu0 0.0
        %1432 = vmatprep.subr.mxu0 0.0
        %1433 = vmatpush1.msra.mxu0 0.0
        %1434 = vmatprep.subr.mxu0 0.0
        %1435 = vmatpush1.msra.mxu0 0.0
        %1436 = vmatprep.mubr.f32.mxu0 0.0
        %1437 = vmatmul.mubr.f32.gmra.mrb[0].mxu0 %v1370
        %v1438 = vpop.f32.mrb[0].mxu0
        %v1439 = vadd.f32 0.0, %v1438
        %v1440 = vpop.f32.mrb[0].mxu0
        %1441 = vdwg.mxu0
        %v1442 = vrsqrt.pop %v1439
        %v1443 = vmul.f32 %v1439, %v1442
        %vm1444 = vcmp.eq.f32.partialorder %v1439, inf
        %v1445 = vsel %vm1444, %v1439, %v1443
        %vm1446 = vcmp.eq.f32.partialorder %v1439, 0.0
        %v1447 = vand.u32 %v1439, 2147483648
        %v1448 = vsel %vm1446, %v1447, %v1445
        %v1449 = vmax.f32 %v1448, 1e-15
        %vm1450 = vcmp.gt.f32.partialorder %v1449, 0.996
        %v1451 = vrcp.pop %v1449
        %v1452 = vmul.f32 0.996, %v1451
        %v1453 = vsel %vm1450, %v1452, 1.0
        %v1454 = vmin.f32 %v1449, 0.996
        %v1455 = vmax.f32 %v1454, -0.9999999
        %v1456 = vmin.f32 %v1455, 0.9999999
        %v1457 = vadd.f32 %v1456, 1.0
        %v1458 = vlog2.pop %v1457
        %v1459 = vmul.f32 %v1458, 0.6931472
        %v1460 = vsub.f32 1.0, %v1456
        %v1461 = vlog2.pop %v1460
        %v1462 = vmul.f32 %v1461, 0.6931472
        %v1463 = vsub.f32 %v1459, %v1462
        %v1464 = vmul.f32 %v1463, 0.5
        %v1465 = vmul.f32 %v1453, %v1464
        %v1466 = vrcp.pop %v1454
        %v1467 = vmul.f32 %v1465, %v1466
        %vm1468 = vcmask 31744
        %v1470 = vsel %vm1468, %v1467, 0
        %vm1472 = vcmask 1043456
        %v1474 = vsel %vm1472, %v702, 0
        %1476 = vmatprep.subr.mxu0 0.0
        %1477 = vmatpush1.msra.mxu0 %v1474
        %1478 = vmatprep.subr.mxu0 0.0
        %1479 = vmatpush1.msra.mxu0 0.0
        %1480 = vmatprep.subr.mxu0 0.0
        %1481 = vmatpush1.msra.mxu0 0.0
        %1482 = vmatprep.subr.mxu0 0.0
        %1483 = vmatpush1.msra.mxu0 0.0
        %1484 = vmatprep.subr.mxu0 0.0
        %1485 = vmatpush1.msra.mxu0 0.0
        %1486 = vmatprep.subr.mxu0 0.0
        %1487 = vmatpush1.msra.mxu0 0.0
        %1488 = vmatprep.subr.mxu0 0.0
        %1489 = vmatpush1.msra.mxu0 0.0
        %1490 = vmatprep.subr.mxu0 0.0
        %1491 = vmatpush1.msra.mxu0 0.0
        %1492 = vmatprep.subr.mxu0 0.0
        %1493 = vmatpush1.msra.mxu0 0.0
        %1494 = vmatprep.subr.mxu0 0.0
        %1495 = vmatpush1.msra.mxu0 0.0
        %1496 = vmatprep.subr.mxu0 0.0
        %1497 = vmatpush1.msra.mxu0 0.0
        %1498 = vmatprep.subr.mxu0 0.0
        %1499 = vmatpush1.msra.mxu0 0.0
        %1500 = vmatprep.subr.mxu0 0.0
        %1501 = vmatpush1.msra.mxu0 0.0
        %1502 = vmatprep.subr.mxu0 0.0
        %1503 = vmatpush1.msra.mxu0 0.0
        %1504 = vmatprep.subr.mxu0 0.0
        %1505 = vmatpush1.msra.mxu0 0.0
        %1506 = vmatprep.subr.mxu0 0.0
        %1507 = vmatpush1.msra.mxu0 0.0
        %1508 = vmatprep.subr.mxu0 0.0
        %1509 = vmatpush1.msra.mxu0 0.0
        %1510 = vmatprep.subr.mxu0 0.0
        %1511 = vmatpush1.msra.mxu0 0.0
        %1512 = vmatprep.subr.mxu0 0.0
        %1513 = vmatpush1.msra.mxu0 0.0
        %1514 = vmatprep.subr.mxu0 0.0
        %1515 = vmatpush1.msra.mxu0 0.0
        %1516 = vmatprep.subr.mxu0 0.0
        %1517 = vmatpush1.msra.mxu0 0.0
        %1518 = vmatprep.subr.mxu0 0.0
        %1519 = vmatpush1.msra.mxu0 0.0
        %1520 = vmatprep.subr.mxu0 0.0
        %1521 = vmatpush1.msra.mxu0 0.0
        %1522 = vmatprep.subr.mxu0 0.0
        %1523 = vmatpush1.msra.mxu0 0.0
        %1524 = vmatprep.subr.mxu0 0.0
        %1525 = vmatpush1.msra.mxu0 0.0
        %1526 = vmatprep.subr.mxu0 0.0
        %1527 = vmatpush1.msra.mxu0 0.0
        %1528 = vmatprep.subr.mxu0 0.0
        %1529 = vmatpush1.msra.mxu0 0.0
        %1530 = vmatprep.subr.mxu0 0.0
        %1531 = vmatpush1.msra.mxu0 0.0
        %1532 = vmatprep.subr.mxu0 0.0
        %1533 = vmatpush1.msra.mxu0 0.0
        %1534 = vmatprep.subr.mxu0 0.0
        %1535 = vmatpush1.msra.mxu0 0.0
        %1536 = vmatprep.subr.mxu0 0.0
        %1537 = vmatpush1.msra.mxu0 0.0
        %1538 = vmatprep.subr.mxu0 0.0
        %1539 = vmatpush1.msra.mxu0 0.0
        %1540 = vmatprep.mubr.f32.mxu0 0.0
        %1541 = vmatmul.mubr.f32.gmra.mrb[0].mxu0 %v1470
        %v1542 = vpop.f32.mrb[0].mxu0
        %v1543 = vadd.f32 0.0, %v1542
        %v1544 = vpop.f32.mrb[0].mxu0
        %1545 = vdwg.mxu0
        %v1546 = vmul.f32 %v1367, %v1543
        %vm1547 = vcmp.gt.f32.partialorder %v1546, 0.0
        %v1548 = vmin.f32 %v1546, 0.0
        %v1549 = vmul.f32 %v1548, 1.442695
        %v1550 = vpow.pop %v1549
        %v1551 = vsub.f32 %v1550, 1.0
        %v1552 = vsel %vm1547, %v1546, %v1551
        %v1553 = vadd.f32 %v1546, 0.94247776
        %v1554 = vand.u32 2147483647, %v1553
        %vm1555 = vcmp.le.f32.partialorder %v1554, 0.7853982
        %vm1556 = vcmp.lt.s32.totalorder %v1553, 0
        %v1557 = vand.u32 %v1553, 2139095040
        %v1558 = vshrl.u32 %v1557, 23
        %v1559 = vsub.s32 %v1558, 127
        %v1560 = vand.u32 2147483647, %v1553
        %v1561 = vand.u32 %v1560, 8388607
        %v1562 = vor.u32 %v1561, 8388608
        %v1563 = vsub.s32 0, %v1562
        %v1564 = vadd.s32 %v1559, 1
        %vm1565 = vcmp.gt.s32.totalorder %v1564, 0
        %v1566 = vsel %vm1565, %v1564, 0
        %v1567 = vshrl.u32 %v1566, 5
        %v1568 = vand.u32 %v1566, 31
        %v1569 = vsub.s32 32, %v1568
        %v1570 = vshrl.u32 683565275, %v1569
        %v1571 = vshll.u32 683565275, %v1568
        %v1572 = vshrl.u32 2475754826, %v1569
        %v1573 = vor.u32 %v1571, %v1572
        %v1574 = vshll.u32 2475754826, %v1568
        %v1575 = vshrl.u32 2131351028, %v1569
        %v1576 = vor.u32 %v1574, %v1575
        %v1577 = vshll.u32 2131351028, %v1568
        %v1578 = vshrl.u32 2102212464, %v1569
        %v1579 = vor.u32 %v1577, %v1578
        %v1580 = vshll.u32 2102212464, %v1568
        %v1581 = vshrl.u32 920167782, %v1569
        %v1582 = vor.u32 %v1580, %v1581
        %v1583 = vshll.u32 920167782, %v1568
        %v1584 = vshrl.u32 1326507024, %v1569
        %v1585 = vor.u32 %v1583, %v1584
        %vm1586 = vcmp.lt.s32.totalorder %v1567, 1
        %vm1587 = vcmp.lt.s32.totalorder %v1567, 2
        %vm1588 = vcmp.lt.s32.totalorder %v1567, 3
        %vm1589 = vcmp.lt.s32.totalorder %v1567, 4
        %v1590 = vsel %vm1586, %v1570, %v1573
        %v1591 = vsel %vm1589, %v1579, 2102212464
        %v1592 = vsel %vm1588, %v1576, %v1591
        %v1593 = vsel %vm1587, %v1590, %v1592
        %v1594 = vsel %vm1586, %v1573, %v1576
        %v1595 = vsel %vm1589, %v1582, 920167782
        %v1596 = vsel %vm1588, %v1579, %v1595
        %v1597 = vsel %vm1587, %v1594, %v1596
        %v1598 = vsel %vm1586, %v1576, %v1579
        %v1599 = vsel %vm1589, %v1585, 1326507024
        %v1600 = vsel %vm1588, %v1582, %v1599
        %v1601 = vsel %vm1587, %v1598, %v1600
        %v1602 = vshll.u32 %v1562, 8
        %v1603 = vmul.u32.u64.compose %v1602, %v1601
        %v1604 = vextract.low.u32 %v1603
        %v1605 = vextract.high.u32 %v1603
        %v1606 = vmul.u32.u64.compose %v1602, %v1597
        %v1607 = vextract.low.u32 %v1606
        %v1608 = vextract.high.u32 %v1606
        %v1609 = vmul.u32 %v1602, %v1593
        %v1610 = vadd.s32 %v1605, %v1607
        %vm1611 = vc.u32 %v1605, %v1607
        %v1612 = vadd.s32 %v1608, 1
        %v1613 = vsel %vm1611, %v1612, %v1608
        %v1614 = vadd.s32 %v1609, %v1613
        %v1615 = vadd.s32 %v1614, 536870912
        %v1616 = vshrl.u32 %v1615, 30
        %v1617 = vshll.u32 %v1616, 30
        %v1618 = vsub.s32 %v1614, %v1617
        %vm1619 = vcmp.lt.s32.totalorder %v1618, 0
        %v1620 = vsub.s32 0, %v1618
        %v1621 = vsel %vm1619, %v1620, %v1618
        %v1622 = vclz %v1621
        %v1623 = vsub.s32 %v1622, 2
        %vm1624 = vcmp.gt.s32.totalorder 0, %v1623
        %v1625 = vsel %vm1624, 0, %v1623
        %v1626 = vsub.s32 32, %v1625
        %v1627 = vshll.u32 %v1618, %v1625
        %v1628 = vshrl.u32 %v1610, %v1626
        %v1629 = vor.u32 %v1627, %v1628
        %v1630 = vsub.s32 4294967266, %v1625
        %v1631 = vadd.s32 %v1630, 127
        %v1632 = vshll.u32 %v1631, 23
        %v1633 = vor.u32 4788187, %v1632
        %v1634 = vand.u32 2147483647, %v1633
        %v1636 = vcvt.s32.f32 %v1629
        %v1637 = vmul.f32 %v1636, %v1634
        %v1638 = vxor.u32 %v1637, 2147483648
        %v1639 = vsel %vm1556, %v1638, %v1637
        %v1640 = vsub.s32 4, %v1616
        %v1641 = vsel %vm1556, %v1640, %v1616
        %v1642 = vsel %vm1555, %v1553, %v1639
        %v1643 = vsel %vm1555, 0, %v1641
        %v1644 = vcosq.f32.pop %v1642
        %v1645 = vsinq.f32.pop %v1642
        %vm1646 = vweird.f32 %v1553
        %v1647 = vand.u32 %v1643, 3
        %vm1648 = vcmp.lt.s32.totalorder %v1647, 2
        %vm1649 = vcmp.eq.s32.totalorder %v1647, 0
        %v1650 = vxor.u32 %v1645, 2147483648
        %v1651 = vsel %vm1649, %v1644, %v1650
        %vm1652 = vcmp.eq.s32.totalorder %v1647, 2
        %v1653 = vxor.u32 %v1644, 2147483648
        %v1654 = vsel %vm1652, %v1653, %v1645
        %v1655 = vsel %vm1648, %v1651, %v1654
        %v1656 = vsel %vm1646, nan, %v1655
        %v1657 = vmul.f32 %v1656, 0.5
        %v1658 = vadd.f32 %v1552, %v1657
        %v1660 = vsel %vm804, %v1658, 0
        %1662 = vmatprep.subr.mxu0 0.0
        %1663 = vmatpush1.msra.mxu0 %v717
        %1664 = vmatprep.subr.mxu0 0.0
        %1665 = vmatpush1.msra.mxu0 %v718
        %1666 = vmatprep.subr.mxu0 0.0
        %1667 = vmatpush1.msra.mxu0 %v719
        %1668 = vmatprep.subr.mxu0 0.0
        %1669 = vmatpush1.msra.mxu0 %v720
        %1670 = vmatprep.subr.mxu0 0.0
        %1671 = vmatpush1.msra.mxu0 %v721
        %1672 = vmatprep.subr.mxu0 0.0
        %1673 = vmatpush1.msra.mxu0 %v722
        %1674 = vmatprep.subr.mxu0 0.0
        %1675 = vmatpush1.msra.mxu0 %v723
        %1676 = vmatprep.subr.mxu0 0.0
        %1677 = vmatpush1.msra.mxu0 %v724
        %1678 = vmatprep.subr.mxu0 0.0
        %1679 = vmatpush1.msra.mxu0 0.0
        %1680 = vmatprep.subr.mxu0 0.0
        %1681 = vmatpush1.msra.mxu0 0.0
        %1682 = vmatprep.subr.mxu0 0.0
        %1683 = vmatpush1.msra.mxu0 0.0
        %1684 = vmatprep.subr.mxu0 0.0
        %1685 = vmatpush1.msra.mxu0 0.0
        %1686 = vmatprep.subr.mxu0 0.0
        %1687 = vmatpush1.msra.mxu0 0.0
        %1688 = vmatprep.subr.mxu0 0.0
        %1689 = vmatpush1.msra.mxu0 0.0
        %1690 = vmatprep.subr.mxu0 0.0
        %1691 = vmatpush1.msra.mxu0 0.0
        %1692 = vmatprep.subr.mxu0 0.0
        %1693 = vmatpush1.msra.mxu0 0.0
        %1694 = vmatprep.subr.mxu0 0.0
        %1695 = vmatpush1.msra.mxu0 0.0
        %1696 = vmatprep.subr.mxu0 0.0
        %1697 = vmatpush1.msra.mxu0 0.0
        %1698 = vmatprep.subr.mxu0 0.0
        %1699 = vmatpush1.msra.mxu0 0.0
        %1700 = vmatprep.subr.mxu0 0.0
        %1701 = vmatpush1.msra.mxu0 0.0
        %1702 = vmatprep.subr.mxu0 0.0
        %1703 = vmatpush1.msra.mxu0 0.0
        %1704 = vmatprep.subr.mxu0 0.0
        %1705 = vmatpush1.msra.mxu0 0.0
        %1706 = vmatprep.subr.mxu0 0.0
        %1707 = vmatpush1.msra.mxu0 0.0
        %1708 = vmatprep.subr.mxu0 0.0
        %1709 = vmatpush1.msra.mxu0 0.0
        %1710 = vmatprep.subr.mxu0 0.0
        %1711 = vmatpush1.msra.mxu0 0.0
        %1712 = vmatprep.subr.mxu0 0.0
        %1713 = vmatpush1.msra.mxu0 0.0
        %1714 = vmatprep.subr.mxu0 0.0
        %1715 = vmatpush1.msra.mxu0 0.0
        %1716 = vmatprep.subr.mxu0 0.0
        %1717 = vmatpush1.msra.mxu0 0.0
        %1718 = vmatprep.subr.mxu0 0.0
        %1719 = vmatpush1.msra.mxu0 0.0
        %1720 = vmatprep.subr.mxu0 0.0
        %1721 = vmatpush1.msra.mxu0 0.0
        %1722 = vmatprep.subr.mxu0 0.0
        %1723 = vmatpush1.msra.mxu0 0.0
        %1724 = vmatprep.subr.mxu0 0.0
        %1725 = vmatpush1.msra.mxu0 0.0
        %1726 = vmatprep.mubr.f32.mxu0 0.0
        %1727 = vmatmul.mubr.f32.gmra.mrb[0].mxu0 %v1660
        %v1728 = vpop.f32.mrb[0].mxu0
        %v1729 = vadd.f32 0.0, %v1728
        %v1730 = vpop.f32.mrb[0].mxu0
        %1731 = vdwg.mxu0
        %v1733 = vsel %vm1362, %v1729, 0
        %1735 = vmatprep.subr.mxu0 0.0
        %1736 = vmatpush1.msra.mxu0 %v725
        %1737 = vmatprep.subr.mxu0 0.0
        %1738 = vmatpush1.msra.mxu0 %v726
        %1739 = vmatprep.subr.mxu0 0.0
        %1740 = vmatpush1.msra.mxu0 0.0
        %1741 = vmatprep.subr.mxu0 0.0
        %1742 = vmatpush1.msra.mxu0 0.0
        %1743 = vmatprep.subr.mxu0 0.0
        %1744 = vmatpush1.msra.mxu0 0.0
        %1745 = vmatprep.subr.mxu0 0.0
        %1746 = vmatpush1.msra.mxu0 0.0
        %1747 = vmatprep.subr.mxu0 0.0
        %1748 = vmatpush1.msra.mxu0 0.0
        %1749 = vmatprep.subr.mxu0 0.0
        %1750 = vmatpush1.msra.mxu0 0.0
        %1751 = vmatprep.subr.mxu0 0.0
        %1752 = vmatpush1.msra.mxu0 0.0
        %1753 = vmatprep.subr.mxu0 0.0
        %1754 = vmatpush1.msra.mxu0 0.0
        %1755 = vmatprep.subr.mxu0 0.0
        %1756 = vmatpush1.msra.mxu0 0.0
        %1757 = vmatprep.subr.mxu0 0.0
        %1758 = vmatpush1.msra.mxu0 0.0
        %1759 = vmatprep.subr.mxu0 0.0
        %1760 = vmatpush1.msra.mxu0 0.0
        %1761 = vmatprep.subr.mxu0 0.0
        %1762 = vmatpush1.msra.mxu0 0.0
        %1763 = vmatprep.subr.mxu0 0.0
        %1764 = vmatpush1.msra.mxu0 0.0
        %1765 = vmatprep.subr.mxu0 0.0
        %1766 = vmatpush1.msra.mxu0 0.0
        %1767 = vmatprep.subr.mxu0 0.0
        %1768 = vmatpush1.msra.mxu0 0.0
        %1769 = vmatprep.subr.mxu0 0.0
        %1770 = vmatpush1.msra.mxu0 0.0
        %1771 = vmatprep.subr.mxu0 0.0
        %1772 = vmatpush1.msra.mxu0 0.0
        %1773 = vmatprep.subr.mxu0 0.0
        %1774 = vmatpush1.msra.mxu0 0.0
        %1775 = vmatprep.subr.mxu0 0.0
        %1776 = vmatpush1.msra.mxu0 0.0
        %1777 = vmatprep.subr.mxu0 0.0
        %1778 = vmatpush1.msra.mxu0 0.0
        %1779 = vmatprep.subr.mxu0 0.0
        %1780 = vmatpush1.msra.mxu0 0.0
        %1781 = vmatprep.subr.mxu0 0.0
        %1782 = vmatpush1.msra.mxu0 0.0
        %1783 = vmatprep.subr.mxu0 0.0
        %1784 = vmatpush1.msra.mxu0 0.0
        %1785 = vmatprep.subr.mxu0 0.0
        %1786 = vmatpush1.msra.mxu0 0.0
        %1787 = vmatprep.subr.mxu0 0.0
        %1788 = vmatpush1.msra.mxu0 0.0
        %1789 = vmatprep.subr.mxu0 0.0
        %1790 = vmatpush1.msra.mxu0 0.0
        %1791 = vmatprep.subr.mxu0 0.0
        %1792 = vmatpush1.msra.mxu0 0.0
        %1793 = vmatprep.subr.mxu0 0.0
        %1794 = vmatpush1.msra.mxu0 0.0
        %1795 = vmatprep.subr.mxu0 0.0
        %1796 = vmatpush1.msra.mxu0 0.0
        %1797 = vmatprep.subr.mxu0 0.0
        %1798 = vmatpush1.msra.mxu0 0.0
        %1799 = vmatprep.mubr.f32.mxu0 0.0
        %1800 = vmatmul.mubr.f32.gmra.mrb[0].mxu0 %v1733
        %v1801 = vpop.f32.mrb[0].mxu0
        %v1802 = vadd.f32 0.0, %v1801
        %v1803 = vpop.f32.mrb[0].mxu0
        %1804 = vdwg.mxu0
        %v1806 = vsel %vm1362, %v727, 0
        %1808 = vmatprep.subr.mxu0 0.0
        %1809 = vmatpush1.xpose.msra.mxu0 %v1733
        %1810 = vmatprep.subr.mxu0 0.0
        %1811 = vmatpush1.xpose.msra.mxu0 0.0
        %1812 = vmatprep.subr.mxu0 0.0
        %1813 = vmatpush1.xpose.msra.mxu0 0.0
        %1814 = vmatprep.subr.mxu0 0.0
        %1815 = vmatpush1.xpose.msra.mxu0 0.0
        %1816 = vmatprep.subr.mxu0 0.0
        %1817 = vmatpush1.xpose.msra.mxu0 0.0
        %1818 = vmatprep.subr.mxu0 0.0
        %1819 = vmatpush1.xpose.msra.mxu0 0.0
        %1820 = vmatprep.subr.mxu0 0.0
        %1821 = vmatpush1.xpose.msra.mxu0 0.0
        %1822 = vmatprep.subr.mxu0 0.0
        %1823 = vmatpush1.xpose.msra.mxu0 0.0
        %1824 = vmatprep.subr.mxu0 0.0
        %1825 = vmatpush1.xpose.msra.mxu0 0.0
        %1826 = vmatprep.subr.mxu0 0.0
        %1827 = vmatpush1.xpose.msra.mxu0 0.0
        %1828 = vmatprep.subr.mxu0 0.0
        %1829 = vmatpush1.xpose.msra.mxu0 0.0
        %1830 = vmatprep.subr.mxu0 0.0
        %1831 = vmatpush1.xpose.msra.mxu0 0.0
        %1832 = vmatprep.subr.mxu0 0.0
        %1833 = vmatpush1.xpose.msra.mxu0 0.0
        %1834 = vmatprep.subr.mxu0 0.0
        %1835 = vmatpush1.xpose.msra.mxu0 0.0
        %1836 = vmatprep.subr.mxu0 0.0
        %1837 = vmatpush1.xpose.msra.mxu0 0.0
        %1838 = vmatprep.subr.mxu0 0.0
        %1839 = vmatpush1.xpose.msra.mxu0 0.0
        %1840 = vmatprep.subr.mxu0 0.0
        %1841 = vmatpush1.xpose.msra.mxu0 0.0
        %1842 = vmatprep.subr.mxu0 0.0
        %1843 = vmatpush1.xpose.msra.mxu0 0.0
        %1844 = vmatprep.subr.mxu0 0.0
        %1845 = vmatpush1.xpose.msra.mxu0 0.0
        %1846 = vmatprep.subr.mxu0 0.0
        %1847 = vmatpush1.xpose.msra.mxu0 0.0
        %1848 = vmatprep.subr.mxu0 0.0
        %1849 = vmatpush1.xpose.msra.mxu0 0.0
        %1850 = vmatprep.subr.mxu0 0.0
        %1851 = vmatpush1.xpose.msra.mxu0 0.0
        %1852 = vmatprep.subr.mxu0 0.0
        %1853 = vmatpush1.xpose.msra.mxu0 0.0
        %1854 = vmatprep.subr.mxu0 0.0
        %1855 = vmatpush1.xpose.msra.mxu0 0.0
        %1856 = vmatprep.subr.mxu0 0.0
        %1857 = vmatpush1.xpose.msra.mxu0 0.0
        %1858 = vmatprep.subr.mxu0 0.0
        %1859 = vmatpush1.xpose.msra.mxu0 0.0
        %1860 = vmatprep.subr.mxu0 0.0
        %1861 = vmatpush1.xpose.msra.mxu0 0.0
        %1862 = vmatprep.subr.mxu0 0.0
        %1863 = vmatpush1.xpose.msra.mxu0 0.0
        %1864 = vmatprep.subr.mxu0 0.0
        %1865 = vmatpush1.xpose.msra.mxu0 0.0
        %1866 = vmatprep.subr.mxu0 0.0
        %1867 = vmatpush1.xpose.msra.mxu0 0.0
        %1868 = vmatprep.subr.mxu0 0.0
        %1869 = vmatpush1.xpose.msra.mxu0 0.0
        %1870 = vmatprep.subr.mxu0 0.0
        %1871 = vmatpush1.xpose.msra.mxu0 0.0
        %1872 = vmatprep.mubr.f32.mxu0 0.0
        %1873 = vmatmul.mubr.f32.gmra.mrb[0].mxu0 %v1806
        %v1874 = vpop.f32.mrb[0].mxu0
        %v1875 = vadd.f32 0.0, %v1874
        %v1876 = vpop.f32.mrb[0].mxu0
        %1877 = vdwg.mxu0
        %1879 = vset.pattern.permute.xlu0 0
        %1880 = vperm.xlu0 %1879, %v1802
        %v1881 = vpop.permute.xlu0 %1880
        %v1883 = vlaneseq
        %v1884 = vshrl.u32 %v1883, 7
        %v1885 = vsub.s32 0, %v1884
        %v1886 = vrot.slane %v1875, %v1885
        %v1887 = vadd.f32 %v1881, %v1886
        %vm1888 = vcmp.gt.f32.partialorder %v1887, 0.0
        %v1889 = vmul.f32 %v1887, 0.1
        %v1890 = vsel %vm1888, %v1887, %v1889
        %v1891 = vsel %vm729, %v1890, -9e+15
        %v1892 = vsel %vm1004, %v1891, -inf
        %1893 = vmax.xlane.f32.xlu0 %v1892
        %v1894 = vpop.xlane.xlu0 %1893
        %v1895 = vsub.f32 %v1891, %v1894
        %v1896 = vmul.f32 %v1895, 1.442695
        %v1897 = vpow.pop %v1896
        %v1898 = vsel %vm1004, %v1897, 0.0
        %1899 = vadd.xlane.f32.xlu0 %v1898
        %v1900 = vpop.xlane.xlu0 %1899
        %v1901 = vrcp.pop %v1900
        %v1902 = vmul.f32 %v1897, %v1901
        %v1904 = vsel %vm1004, %v1902, 0
        %1906 = vmatprep.subr.mxu0 0.0
        %1907 = vmatpush1.msra.mxu0 %v1729
        %1908 = vmatprep.subr.mxu0 0.0
        %1909 = vmatpush1.msra.mxu0 0.0
        %1910 = vmatprep.subr.mxu0 0.0
        %1911 = vmatpush1.msra.mxu0 0.0
        %1912 = vmatprep.subr.mxu0 0.0
        %1913 = vmatpush1.msra.mxu0 0.0
        %1914 = vmatprep.subr.mxu0 0.0
        %1915 = vmatpush1.msra.mxu0 0.0
        %1916 = vmatprep.subr.mxu0 0.0
        %1917 = vmatpush1.msra.mxu0 0.0
        %1918 = vmatprep.subr.mxu0 0.0
        %1919 = vmatpush1.msra.mxu0 0.0
        %1920 = vmatprep.subr.mxu0 0.0
        %1921 = vmatpush1.msra.mxu0 0.0
        %1922 = vmatprep.subr.mxu0 0.0
        %1923 = vmatpush1.msra.mxu0 0.0
        %1924 = vmatprep.subr.mxu0 0.0
        %1925 = vmatpush1.msra.mxu0 0.0
        %1926 = vmatprep.subr.mxu0 0.0
        %1927 = vmatpush1.msra.mxu0 0.0
        %1928 = vmatprep.subr.mxu0 0.0
        %1929 = vmatpush1.msra.mxu0 0.0
        %1930 = vmatprep.subr.mxu0 0.0
        %1931 = vmatpush1.msra.mxu0 0.0
        %1932 = vmatprep.subr.mxu0 0.0
        %1933 = vmatpush1.msra.mxu0 0.0
        %1934 = vmatprep.subr.mxu0 0.0
        %1935 = vmatpush1.msra.mxu0 0.0
        %1936 = vmatprep.subr.mxu0 0.0
        %1937 = vmatpush1.msra.mxu0 0.0
        %1938 = vmatprep.subr.mxu0 0.0
        %1939 = vmatpush1.msra.mxu0 0.0
        %1940 = vmatprep.subr.mxu0 0.0
        %1941 = vmatpush1.msra.mxu0 0.0
        %1942 = vmatprep.subr.mxu0 0.0
        %1943 = vmatpush1.msra.mxu0 0.0
        %1944 = vmatprep.subr.mxu0 0.0
        %1945 = vmatpush1.msra.mxu0 0.0
        %1946 = vmatprep.subr.mxu0 0.0
        %1947 = vmatpush1.msra.mxu0 0.0
        %1948 = vmatprep.subr.mxu0 0.0
        %1949 = vmatpush1.msra.mxu0 0.0
        %1950 = vmatprep.subr.mxu0 0.0
        %1951 = vmatpush1.msra.mxu0 0.0
        %1952 = vmatprep.subr.mxu0 0.0
        %1953 = vmatpush1.msra.mxu0 0.0
        %1954 = vmatprep.subr.mxu0 0.0
        %1955 = vmatpush1.msra.mxu0 0.0
        %1956 = vmatprep.subr.mxu0 0.0
        %1957 = vmatpush1.msra.mxu0 0.0
        %1958 = vmatprep.subr.mxu0 0.0
        %1959 = vmatpush1.msra.mxu0 0.0
        %1960 = vmatprep.subr.mxu0 0.0
        %1961 = vmatpush1.msra.mxu0 0.0
        %1962 = vmatprep.subr.mxu0 0.0
        %1963 = vmatpush1.msra.mxu0 0.0
        %1964 = vmatprep.subr.mxu0 0.0
        %1965 = vmatpush1.msra.mxu0 0.0
        %1966 = vmatprep.subr.mxu0 0.0
        %1967 = vmatpush1.msra.mxu0 0.0
        %1968 = vmatprep.subr.mxu0 0.0
        %1969 = vmatpush1.msra.mxu0 0.0
        %1970 = vmatprep.mubr.f32.mxu0 0.0
        %1971 = vmatmul.mubr.f32.gmra.mrb[0].mxu0 %v1904
        %v1972 = vpop.f32.mrb[0].mxu0
        %v1973 = vadd.f32 0.0, %v1972
        %v1974 = vpop.f32.mrb[0].mxu0
        %1975 = vdwg.mxu0
        %v1976 = vmul.f32 %v1973, %v1973
        %v1977 = vsel %vm1362, %v1976, 0.0
        %1978 = vadd.xlane.f32.xlu0 %v1977
        %v1979 = vpop.xlane.xlu0 %1978
        %v1980 = vrsqrt.pop %v1979
        %v1981 = vmul.f32 %v1979, %v1980
        %vm1982 = vcmp.eq.f32.partialorder %v1979, inf
        %v1983 = vsel %vm1982, %v1979, %v1981
        %vm1984 = vcmp.eq.f32.partialorder %v1979, 0.0
        %v1985 = vand.u32 %v1979, 2147483648
        %v1986 = vsel %vm1984, %v1985, %v1983
        %v1987 = vmax.f32 %v1986, 1e-15
        %vm1988 = vcmp.gt.f32.partialorder %v1987, 0.996
        %v1989 = vrcp.pop %v1987
        %v1990 = vmul.f32 0.996, %v1989
        %v1991 = vsel %vm1988, %v1990, 1.0
        %v1992 = vmin.f32 %v1987, 0.996
        %v1993 = vmax.f32 %v1992, -0.9999999
        %v1994 = vmin.f32 %v1993, 0.9999999
        %v1995 = vadd.f32 %v1994, 1.0
        %v1996 = vlog2.pop %v1995
        %v1997 = vmul.f32 %v1996, 0.6931472
        %v1998 = vsub.f32 1.0, %v1994
        %v1999 = vlog2.pop %v1998
        %v2000 = vmul.f32 %v1999, 0.6931472
        %v2001 = vsub.f32 %v1997, %v2000
        %v2002 = vmul.f32 %v2001, 0.5
        %v2003 = vmul.f32 %v1991, %v2002
        %v2004 = vrcp.pop %v1992
        %v2005 = vmul.f32 %v2003, %v2004
        %v2006 = vmul.f32 %v1973, %v2005
        %v2007 = vmul.f32 %v2006, %v2006
        %v2008 = vsel %vm1362, %v2007, 0.0
        %2009 = vadd.xlane.f32.xlu0 %v2008
        %v2010 = vpop.xlane.xlu0 %2009
        %v2011 = vrsqrt.pop %v2010
        %v2012 = vmul.f32 %v2010, %v2011
        %vm2013 = vcmp.eq.f32.partialorder %v2010, inf
        %v2014 = vsel %vm2013, %v2010, %v2012
        %vm2015 = vcmp.eq.f32.partialorder %v2010, 0.0
        %v2016 = vand.u32 %v2010, 2147483648
        %v2017 = vsel %vm2015, %v2016, %v2014
        %v2018 = vmax.f32 %v2017, 1e-15
        %vm2019 = vcmp.gt.f32.partialorder %v2018, 0.996
        %v2020 = vrcp.pop %v2018
        %v2021 = vmul.f32 0.996, %v2020
        %v2022 = vsel %vm2019, %v2021, 1.0
        %v2023 = vmin.f32 %v2018, 0.996
        %v2024 = vmax.f32 %v2023, -0.9999999
        %v2025 = vmin.f32 %v2024, 0.9999999
        %v2026 = vadd.f32 %v2025, 1.0
        %v2027 = vlog2.pop %v2026
        %v2028 = vmul.f32 %v2027, 0.6931472
        %v2029 = vsub.f32 1.0, %v2025
        %v2030 = vlog2.pop %v2029
        %v2031 = vmul.f32 %v2030, 0.6931472
        %v2032 = vsub.f32 %v2028, %v2031
        %v2033 = vmul.f32 %v2032, 0.5
        %v2034 = vmul.f32 %v2022, %v2033
        %v2035 = vrcp.pop %v2023
        %v2036 = vmul.f32 %v2034, %v2035
        %v2037 = vmul.f32 %v2006, %v2036
        %vm2038 = vcmp.gt.f32.partialorder %v2037, 0.0
        %v2039 = vmin.f32 %v2037, 0.0
        %v2040 = vmul.f32 %v2039, 1.442695
        %v2041 = vpow.pop %v2040
        %v2042 = vsub.f32 %v2041, 1.0
        %v2043 = vsel %vm2038, %v2037, %v2042
        %v2044 = vadd.f32 %v2037, 0.94247776
        %v2045 = vand.u32 2147483647, %v2044
        %vm2046 = vcmp.le.f32.partialorder %v2045, 0.7853982
        %vm2047 = vcmp.lt.s32.totalorder %v2044, 0
        %v2048 = vand.u32 %v2044, 2139095040
        %v2049 = vshrl.u32 %v2048, 23
        %v2050 = vsub.s32 %v2049, 127
        %v2051 = vand.u32 2147483647, %v2044
        %v2052 = vand.u32 %v2051, 8388607
        %v2053 = vor.u32 %v2052, 8388608
        %v2054 = vsub.s32 0, %v2053
        %v2055 = vadd.s32 %v2050, 1
        %vm2056 = vcmp.gt.s32.totalorder %v2055, 0
        %v2057 = vsel %vm2056, %v2055, 0
        %v2058 = vshrl.u32 %v2057, 5
        %v2059 = vand.u32 %v2057, 31
        %v2060 = vsub.s32 32, %v2059
        %v2061 = vshrl.u32 683565275, %v2060
        %v2062 = vshll.u32 683565275, %v2059
        %v2063 = vshrl.u32 2475754826, %v2060
        %v2064 = vor.u32 %v2062, %v2063
        %v2065 = vshll.u32 2475754826, %v2059
        %v2066 = vshrl.u32 2131351028, %v2060
        %v2067 = vor.u32 %v2065, %v2066
        %v2068 = vshll.u32 2131351028, %v2059
        %v2069 = vshrl.u32 2102212464, %v2060
        %v2070 = vor.u32 %v2068, %v2069
        %v2071 = vshll.u32 2102212464, %v2059
        %v2072 = vshrl.u32 920167782, %v2060
        %v2073 = vor.u32 %v2071, %v2072
        %v2074 = vshll.u32 920167782, %v2059
        %v2075 = vshrl.u32 1326507024, %v2060
        %v2076 = vor.u32 %v2074, %v2075
        %vm2077 = vcmp.lt.s32.totalorder %v2058, 1
        %vm2078 = vcmp.lt.s32.totalorder %v2058, 2
        %vm2079 = vcmp.lt.s32.totalorder %v2058, 3
        %vm2080 = vcmp.lt.s32.totalorder %v2058, 4
        %v2081 = vsel %vm2077, %v2061, %v2064
        %v2082 = vsel %vm2080, %v2070, 2102212464
        %v2083 = vsel %vm2079, %v2067, %v2082
        %v2084 = vsel %vm2078, %v2081, %v2083
        %v2085 = vsel %vm2077, %v2064, %v2067
        %v2086 = vsel %vm2080, %v2073, 920167782
        %v2087 = vsel %vm2079, %v2070, %v2086
        %v2088 = vsel %vm2078, %v2085, %v2087
        %v2089 = vsel %vm2077, %v2067, %v2070
        %v2090 = vsel %vm2080, %v2076, 1326507024
        %v2091 = vsel %vm2079, %v2073, %v2090
        %v2092 = vsel %vm2078, %v2089, %v2091
        %v2093 = vshll.u32 %v2053, 8
        %v2094 = vmul.u32.u64.compose %v2093, %v2092
        %v2095 = vextract.low.u32 %v2094
        %v2096 = vextract.high.u32 %v2094
        %v2097 = vmul.u32.u64.compose %v2093, %v2088
        %v2098 = vextract.low.u32 %v2097
        %v2099 = vextract.high.u32 %v2097
        %v2100 = vmul.u32 %v2093, %v2084
        %v2101 = vadd.s32 %v2096, %v2098
        %vm2102 = vc.u32 %v2096, %v2098
        %v2103 = vadd.s32 %v2099, 1
        %v2104 = vsel %vm2102, %v2103, %v2099
        %v2105 = vadd.s32 %v2100, %v2104
        %v2106 = vadd.s32 %v2105, 536870912
        %v2107 = vshrl.u32 %v2106, 30
        %v2108 = vshll.u32 %v2107, 30
        %v2109 = vsub.s32 %v2105, %v2108
        %vm2110 = vcmp.lt.s32.totalorder %v2109, 0
        %v2111 = vsub.s32 0, %v2109
        %v2112 = vsel %vm2110, %v2111, %v2109
        %v2113 = vclz %v2112
        %v2114 = vsub.s32 %v2113, 2
        %vm2115 = vcmp.gt.s32.totalorder 0, %v2114
        %v2116 = vsel %vm2115, 0, %v2114
        %v2117 = vsub.s32 32, %v2116
        %v2118 = vshll.u32 %v2109, %v2116
        %v2119 = vshrl.u32 %v2101, %v2117
        %v2120 = vor.u32 %v2118, %v2119
        %v2121 = vsub.s32 4294967266, %v2116
        %v2122 = vadd.s32 %v2121, 127
        %v2123 = vshll.u32 %v2122, 23
        %v2124 = vor.u32 4788187, %v2123
        %v2125 = vand.u32 2147483647, %v2124
        %v2127 = vcvt.s32.f32 %v2120
        %v2128 = vmul.f32 %v2127, %v2125
        %v2129 = vxor.u32 %v2128, 2147483648
        %v2130 = vsel %vm2047, %v2129, %v2128
        %v2131 = vsub.s32 4, %v2107
        %v2132 = vsel %vm2047, %v2131, %v2107
        %v2133 = vsel %vm2046, %v2044, %v2130
        %v2134 = vsel %vm2046, 0, %v2132
        %v2135 = vcosq.f32.pop %v2133
        %v2136 = vsinq.f32.pop %v2133
        %vm2137 = vweird.f32 %v2044
        %v2138 = vand.u32 %v2134, 3
        %vm2139 = vcmp.lt.s32.totalorder %v2138, 2
        %vm2140 = vcmp.eq.s32.totalorder %v2138, 0
        %v2141 = vxor.u32 %v2136, 2147483648
        %v2142 = vsel %vm2140, %v2135, %v2141
        %vm2143 = vcmp.eq.s32.totalorder %v2138, 2
        %v2144 = vxor.u32 %v2135, 2147483648
        %v2145 = vsel %vm2143, %v2144, %v2136
        %v2146 = vsel %vm2139, %v2142, %v2145
        %v2147 = vsel %vm2137, nan, %v2146
        %v2148 = vmul.f32 %v2147, 0.5
        %v2149 = vadd.f32 %v2043, %v2148
        %v2150 = vld [vmem:[%s689] sm:$0xff]
        %v2151 = vld [vmem:[%s693] sm:$0xff]
        %v2152 = vld [vmem:[%s10] sm:$0xff]
        %v2153 = vld [vmem:[%s11] sm:$0xff]
        %v2154 = vld [vmem:[%s11 + $0x8] sm:$0xff]
        %v2155 = vld [vmem:[%s11 + $0x10] sm:$0xff]
        %v2156 = vld [vmem:[%s11 + $0x18] sm:$0xff]
        %v2157 = vld [vmem:[%s11 + $0x20] sm:$0xff]
        %v2158 = vld [vmem:[%s11 + $0x28] sm:$0xff]
        %v2159 = vld [vmem:[%s11 + $0x30] sm:$0xff]
        %v2160 = vld [vmem:[%s11 + $0x38] sm:$0xff]
        %v2161 = vld [vmem:[%s12] sm:$0xf]
        %v2162 = vld [vmem:[%s13] sm:$0xff]
        %v2163 = vld [vmem:[%s13 + $0x8] sm:$0xff]
        %v2164 = vld [vmem:[%s13 + $0x10] sm:$0xff]
        %v2165 = vld [vmem:[%s13 + $0x18] sm:$0xff]
        %v2166 = vld [vmem:[%s13 + $0x20] sm:$0xff]
        %v2167 = vld [vmem:[%s13 + $0x28] sm:$0xff]
        %v2168 = vld [vmem:[%s13 + $0x30] sm:$0xff]
        %v2169 = vld [vmem:[%s13 + $0x38] sm:$0xff]
        %v2170 = vld [vmem:[%s14] sm:$0xff]
        %v2171 = vld [vmem:[%s14 + $0x8] sm:$0xff]
        %v2172 = vld [vmem:[%s15] sm:$0x1]
        %v2173 = vand.u32 2147483647, %v2151
        %vm2174 = vcmp.gt.f32.partialorder %v2173, 0.0
        %v2176 = vsel %vm1004, %v2150, 0
        %2178 = vmatprep.subr.mxu0 0.0
        %2179 = vmatpush1.msra.mxu0 %v2152
        %2180 = vmatprep.subr.mxu0 0.0
        %2181 = vmatpush1.msra.mxu0 0.0
        %2182 = vmatprep.subr.mxu0 0.0
        %2183 = vmatpush1.msra.mxu0 0.0
        %2184 = vmatprep.subr.mxu0 0.0
        %2185 = vmatpush1.msra.mxu0 0.0
        %2186 = vmatprep.subr.mxu0 0.0
        %2187 = vmatpush1.msra.mxu0 0.0
        %2188 = vmatprep.subr.mxu0 0.0
        %2189 = vmatpush1.msra.mxu0 0.0
        %2190 = vmatprep.subr.mxu0 0.0
        %2191 = vmatpush1.msra.mxu0 0.0
        %2192 = vmatprep.subr.mxu0 0.0
        %2193 = vmatpush1.msra.mxu0 0.0
        %2194 = vmatprep.subr.mxu0 0.0
        %2195 = vmatpush1.msra.mxu0 0.0
        %2196 = vmatprep.subr.mxu0 0.0
        %2197 = vmatpush1.msra.mxu0 0.0
        %2198 = vmatprep.subr.mxu0 0.0
        %2199 = vmatpush1.msra.mxu0 0.0
        %2200 = vmatprep.subr.mxu0 0.0
        %2201 = vmatpush1.msra.mxu0 0.0
        %2202 = vmatprep.subr.mxu0 0.0
        %2203 = vmatpush1.msra.mxu0 0.0
        %2204 = vmatprep.subr.mxu0 0.0
        %2205 = vmatpush1.msra.mxu0 0.0
        %2206 = vmatprep.subr.mxu0 0.0
        %2207 = vmatpush1.msra.mxu0 0.0
        %2208 = vmatprep.subr.mxu0 0.0
        %2209 = vmatpush1.msra.mxu0 0.0
        %2210 = vmatprep.subr.mxu0 0.0
        %2211 = vmatpush1.msra.mxu0 0.0
        %2212 = vmatprep.subr.mxu0 0.0
        %2213 = vmatpush1.msra.mxu0 0.0
        %2214 = vmatprep.subr.mxu0 0.0
        %2215 = vmatpush1.msra.mxu0 0.0
        %2216 = vmatprep.subr.mxu0 0.0
        %2217 = vmatpush1.msra.mxu0 0.0
        %2218 = vmatprep.subr.mxu0 0.0
        %2219 = vmatpush1.msra.mxu0 0.0
        %2220 = vmatprep.subr.mxu0 0.0
        %2221 = vmatpush1.msra.mxu0 0.0
        %2222 = vmatprep.subr.mxu0 0.0
        %2223 = vmatpush1.msra.mxu0 0.0
        %2224 = vmatprep.subr.mxu0 0.0
        %2225 = vmatpush1.msra.mxu0 0.0
        %2226 = vmatprep.subr.mxu0 0.0
        %2227 = vmatpush1.msra.mxu0 0.0
        %2228 = vmatprep.subr.mxu0 0.0
        %2229 = vmatpush1.msra.mxu0 0.0
        %2230 = vmatprep.subr.mxu0 0.0
        %2231 = vmatpush1.msra.mxu0 0.0
        %2232 = vmatprep.subr.mxu0 0.0
        %2233 = vmatpush1.msra.mxu0 0.0
        %2234 = vmatprep.subr.mxu0 0.0
        %2235 = vmatpush1.msra.mxu0 0.0
        %2236 = vmatprep.subr.mxu0 0.0
        %2237 = vmatpush1.msra.mxu0 0.0
        %2238 = vmatprep.subr.mxu0 0.0
        %2239 = vmatpush1.msra.mxu0 0.0
        %2240 = vmatprep.subr.mxu0 0.0
        %2241 = vmatpush1.msra.mxu0 0.0
        %2242 = vmatprep.mubr.f32.mxu0 0.0
        %2243 = vmatmul.mubr.f32.gmra.mrb[0].mxu0 %v2176
        %v2244 = vpop.f32.mrb[0].mxu0
        %v2245 = vadd.f32 0.0, %v2244
        %v2246 = vpop.f32.mrb[0].mxu0
        %2247 = vdwg.mxu0
        %v2249 = vsel %vm804, %v2245, 0
        %2251 = vmatprep.subr.mxu0 0.0
        %2252 = vmatpush1.msra.mxu0 %v2153
        %2253 = vmatprep.subr.mxu0 0.0
        %2254 = vmatpush1.msra.mxu0 %v2154
        %2255 = vmatprep.subr.mxu0 0.0
        %2256 = vmatpush1.msra.mxu0 %v2155
        %2257 = vmatprep.subr.mxu0 0.0
        %2258 = vmatpush1.msra.mxu0 %v2156
        %2259 = vmatprep.subr.mxu0 0.0
        %2260 = vmatpush1.msra.mxu0 %v2157
        %2261 = vmatprep.subr.mxu0 0.0
        %2262 = vmatpush1.msra.mxu0 %v2158
        %2263 = vmatprep.subr.mxu0 0.0
        %2264 = vmatpush1.msra.mxu0 %v2159
        %2265 = vmatprep.subr.mxu0 0.0
        %2266 = vmatpush1.msra.mxu0 %v2160
        %2267 = vmatprep.subr.mxu0 0.0
        %2268 = vmatpush1.msra.mxu0 0.0
        %2269 = vmatprep.subr.mxu0 0.0
        %2270 = vmatpush1.msra.mxu0 0.0
        %2271 = vmatprep.subr.mxu0 0.0
        %2272 = vmatpush1.msra.mxu0 0.0
        %2273 = vmatprep.subr.mxu0 0.0
        %2274 = vmatpush1.msra.mxu0 0.0
        %2275 = vmatprep.subr.mxu0 0.0
        %2276 = vmatpush1.msra.mxu0 0.0
        %2277 = vmatprep.subr.mxu0 0.0
        %2278 = vmatpush1.msra.mxu0 0.0
        %2279 = vmatprep.subr.mxu0 0.0
        %2280 = vmatpush1.msra.mxu0 0.0
        %2281 = vmatprep.subr.mxu0 0.0
        %2282 = vmatpush1.msra.mxu0 0.0
        %2283 = vmatprep.subr.mxu0 0.0
        %2284 = vmatpush1.msra.mxu0 0.0
        %2285 = vmatprep.subr.mxu0 0.0
        %2286 = vmatpush1.msra.mxu0 0.0
        %2287 = vmatprep.subr.mxu0 0.0
        %2288 = vmatpush1.msra.mxu0 0.0
        %2289 = vmatprep.subr.mxu0 0.0
        %2290 = vmatpush1.msra.mxu0 0.0
        %2291 = vmatprep.subr.mxu0 0.0
        %2292 = vmatpush1.msra.mxu0 0.0
        %2293 = vmatprep.subr.mxu0 0.0
        %2294 = vmatpush1.msra.mxu0 0.0
        %2295 = vmatprep.subr.mxu0 0.0
        %2296 = vmatpush1.msra.mxu0 0.0
        %2297 = vmatprep.subr.mxu0 0.0
        %2298 = vmatpush1.msra.mxu0 0.0
        %2299 = vmatprep.subr.mxu0 0.0
        %2300 = vmatpush1.msra.mxu0 0.0
        %2301 = vmatprep.subr.mxu0 0.0
        %2302 = vmatpush1.msra.mxu0 0.0
        %2303 = vmatprep.subr.mxu0 0.0
        %2304 = vmatpush1.msra.mxu0 0.0
        %2305 = vmatprep.subr.mxu0 0.0
        %2306 = vmatpush1.msra.mxu0 0.0
        %2307 = vmatprep.subr.mxu0 0.0
        %2308 = vmatpush1.msra.mxu0 0.0
        %2309 = vmatprep.subr.mxu0 0.0
        %2310 = vmatpush1.msra.mxu0 0.0
        %2311 = vmatprep.subr.mxu0 0.0
        %2312 = vmatpush1.msra.mxu0 0.0
        %2313 = vmatprep.subr.mxu0 0.0
        %2314 = vmatpush1.msra.mxu0 0.0
        %2315 = vmatprep.mubr.f32.mxu0 0.0
        %2316 = vmatmul.mubr.f32.gmra.mrb[0].mxu0 %v2249
        %v2317 = vpop.f32.mrb[0].mxu0
        %v2318 = vadd.f32 0.0, %v2317
        %v2319 = vpop.f32.mrb[0].mxu0
        %2320 = vdwg.mxu0
        %v2322 = vsel %vm804, %v2161, 0
        %2324 = vmatprep.subr.mxu0 0.0
        %2325 = vmatpush1.xpose.msra.mxu0 %v2249
        %2326 = vmatprep.subr.mxu0 0.0
        %2327 = vmatpush1.xpose.msra.mxu0 0.0
        %2328 = vmatprep.subr.mxu0 0.0
        %2329 = vmatpush1.xpose.msra.mxu0 0.0
        %2330 = vmatprep.subr.mxu0 0.0
        %2331 = vmatpush1.xpose.msra.mxu0 0.0
        %2332 = vmatprep.subr.mxu0 0.0
        %2333 = vmatpush1.xpose.msra.mxu0 0.0
        %2334 = vmatprep.subr.mxu0 0.0
        %2335 = vmatpush1.xpose.msra.mxu0 0.0
        %2336 = vmatprep.subr.mxu0 0.0
        %2337 = vmatpush1.xpose.msra.mxu0 0.0
        %2338 = vmatprep.subr.mxu0 0.0
        %2339 = vmatpush1.xpose.msra.mxu0 0.0
        %2340 = vmatprep.subr.mxu0 0.0
        %2341 = vmatpush1.xpose.msra.mxu0 0.0
        %2342 = vmatprep.subr.mxu0 0.0
        %2343 = vmatpush1.xpose.msra.mxu0 0.0
        %2344 = vmatprep.subr.mxu0 0.0
        %2345 = vmatpush1.xpose.msra.mxu0 0.0
        %2346 = vmatprep.subr.mxu0 0.0
        %2347 = vmatpush1.xpose.msra.mxu0 0.0
        %2348 = vmatprep.subr.mxu0 0.0
        %2349 = vmatpush1.xpose.msra.mxu0 0.0
        %2350 = vmatprep.subr.mxu0 0.0
        %2351 = vmatpush1.xpose.msra.mxu0 0.0
        %2352 = vmatprep.subr.mxu0 0.0
        %2353 = vmatpush1.xpose.msra.mxu0 0.0
        %2354 = vmatprep.subr.mxu0 0.0
        %2355 = vmatpush1.xpose.msra.mxu0 0.0
        %2356 = vmatprep.subr.mxu0 0.0
        %2357 = vmatpush1.xpose.msra.mxu0 0.0
        %2358 = vmatprep.subr.mxu0 0.0
        %2359 = vmatpush1.xpose.msra.mxu0 0.0
        %2360 = vmatprep.subr.mxu0 0.0
        %2361 = vmatpush1.xpose.msra.mxu0 0.0
        %2362 = vmatprep.subr.mxu0 0.0
        %2363 = vmatpush1.xpose.msra.mxu0 0.0
        %2364 = vmatprep.subr.mxu0 0.0
        %2365 = vmatpush1.xpose.msra.mxu0 0.0
        %2366 = vmatprep.subr.mxu0 0.0
        %2367 = vmatpush1.xpose.msra.mxu0 0.0
        %2368 = vmatprep.subr.mxu0 0.0
        %2369 = vmatpush1.xpose.msra.mxu0 0.0
        %2370 = vmatprep.subr.mxu0 0.0
        %2371 = vmatpush1.xpose.msra.mxu0 0.0
        %2372 = vmatprep.subr.mxu0 0.0
        %2373 = vmatpush1.xpose.msra.mxu0 0.0
        %2374 = vmatprep.subr.mxu0 0.0
        %2375 = vmatpush1.xpose.msra.mxu0 0.0
        %2376 = vmatprep.subr.mxu0 0.0
        %2377 = vmatpush1.xpose.msra.mxu0 0.0
        %2378 = vmatprep.subr.mxu0 0.0
        %2379 = vmatpush1.xpose.msra.mxu0 0.0
        %2380 = vmatprep.subr.mxu0 0.0
        %2381 = vmatpush1.xpose.msra.mxu0 0.0
        %2382 = vmatprep.subr.mxu0 0.0
        %2383 = vmatpush1.xpose.msra.mxu0 0.0
        %2384 = vmatprep.subr.mxu0 0.0
        %2385 = vmatpush1.xpose.msra.mxu0 0.0
        %2386 = vmatprep.subr.mxu0 0.0
        %2387 = vmatpush1.xpose.msra.mxu0 0.0
        %2388 = vmatprep.mubr.f32.mxu0 0.0
        %2389 = vmatmul.mubr.f32.gmra.mrb[0].mxu0 %v2322
        %v2390 = vpop.f32.mrb[0].mxu0
        %v2391 = vadd.f32 0.0, %v2390
        %v2392 = vpop.f32.mrb[0].mxu0
        %2393 = vdwg.mxu0
        %2395 = vset.pattern.permute.xlu0 0
        %2396 = vperm.xlu0 %2395, %v2318
        %v2397 = vpop.permute.xlu0 %2396
        %v2399 = vlaneseq
        %v2400 = vshrl.u32 %v2399, 7
        %v2401 = vsub.s32 0, %v2400
        %v2402 = vrot.slane %v2391, %v2401
        %v2403 = vadd.f32 %v2397, %v2402
        %2404 = vset.pattern.permute.xlu0 1
        %2405 = vperm.xlu0 %2404, %v2318
        %v2406 = vpop.permute.xlu0 %2405
        %v2408 = vlaneseq
        %v2409 = vshrl.u32 %v2408, 7
        %v2410 = vsub.s32 1, %v2409
        %v2411 = vrot.slane %v2391, %v2410
        %v2412 = vadd.f32 %v2406, %v2411
        %2413 = vset.pattern.permute.xlu0 2
        %2414 = vperm.xlu0 %2413, %v2318
        %v2415 = vpop.permute.xlu0 %2414
        %v2417 = vlaneseq
        %v2418 = vshrl.u32 %v2417, 7
        %v2419 = vsub.s32 2, %v2418
        %v2420 = vrot.slane %v2391, %v2419
        %v2421 = vadd.f32 %v2415, %v2420
        %2422 = vset.pattern.permute.xlu0 3
        %2423 = vperm.xlu0 %2422, %v2318
        %v2424 = vpop.permute.xlu0 %2423
        %v2426 = vlaneseq
        %v2427 = vshrl.u32 %v2426, 7
        %v2428 = vsub.s32 3, %v2427
        %v2429 = vrot.slane %v2391, %v2428
        %v2430 = vadd.f32 %v2424, %v2429
        %vm2431 = vcmp.gt.f32.partialorder %v2403, 0.0
        %vm2432 = vcmp.gt.f32.partialorder %v2412, 0.0
        %vm2433 = vcmp.gt.f32.partialorder %v2421, 0.0
        %vm2434 = vcmp.gt.f32.partialorder %v2430, 0.0
        %v2435 = vmul.f32 %v2403, 0.1
        %v2436 = vmul.f32 %v2412, 0.1
        %v2437 = vmul.f32 %v2421, 0.1
        %v2438 = vmul.f32 %v2430, 0.1
        %v2439 = vsel %vm2431, %v2403, %v2435
        %v2440 = vsel %vm2432, %v2412, %v2436
        %v2441 = vsel %vm2433, %v2421, %v2437
        %v2442 = vsel %vm2434, %v2430, %v2438
        %v2443 = vsel %vm2174, %v2439, -9e+15
        %v2444 = vsel %vm2174, %v2440, -9e+15
        %v2445 = vsel %vm2174, %v2441, -9e+15
        %v2446 = vsel %vm2174, %v2442, -9e+15
        %v2447 = vsel %vm1004, %v2443, -inf
        %2448 = vmax.xlane.f32.xlu0 %v2447
        %v2449 = vpop.xlane.xlu0 %2448
        %v2450 = vsel %vm1004, %v2444, -inf
        %2451 = vmax.xlane.f32.xlu0 %v2450
        %v2452 = vpop.xlane.xlu0 %2451
        %v2453 = vsel %vm1004, %v2445, -inf
        %2454 = vmax.xlane.f32.xlu0 %v2453
        %v2455 = vpop.xlane.xlu0 %2454
        %v2456 = vsel %vm1004, %v2446, -inf
        %2457 = vmax.xlane.f32.xlu0 %v2456
        %v2458 = vpop.xlane.xlu0 %2457
        %v2459 = vsub.f32 %v2443, %v2449
        %v2460 = vsub.f32 %v2444, %v2452
        %v2461 = vsub.f32 %v2445, %v2455
        %v2462 = vsub.f32 %v2446, %v2458
        %v2463 = vmul.f32 %v2459, 1.442695
        %v2464 = vpow.pop %v2463
        %v2465 = vmul.f32 %v2460, 1.442695
        %v2466 = vpow.pop %v2465
        %v2467 = vmul.f32 %v2461, 1.442695
        %v2468 = vpow.pop %v2467
        %v2469 = vmul.f32 %v2462, 1.442695
        %v2470 = vpow.pop %v2469
        %v2471 = vsel %vm1004, %v2464, 0.0
        %2472 = vadd.xlane.f32.xlu0 %v2471
        %v2473 = vpop.xlane.xlu0 %2472
        %v2474 = vsel %vm1004, %v2466, 0.0
        %2475 = vadd.xlane.f32.xlu0 %v2474
        %v2476 = vpop.xlane.xlu0 %2475
        %v2477 = vsel %vm1004, %v2468, 0.0
        %2478 = vadd.xlane.f32.xlu0 %v2477
        %v2479 = vpop.xlane.xlu0 %2478
        %v2480 = vsel %vm1004, %v2470, 0.0
        %2481 = vadd.xlane.f32.xlu0 %v2480
        %v2482 = vpop.xlane.xlu0 %2481
        %v2483 = vrcp.pop %v2473
        %v2484 = vmul.f32 %v2464, %v2483
        %v2485 = vrcp.pop %v2476
        %v2486 = vmul.f32 %v2466, %v2485
        %v2487 = vrcp.pop %v2479
        %v2488 = vmul.f32 %v2468, %v2487
        %v2489 = vrcp.pop %v2482
        %v2490 = vmul.f32 %v2470, %v2489
        %v2492 = vsel %vm1004, %v2484, 0
        %2494 = vmatprep.subr.mxu0 0.0
        %2495 = vmatpush1.msra.mxu0 %v2245
        %2496 = vmatprep.subr.mxu0 0.0
        %2497 = vmatpush1.msra.mxu0 0.0
        %2498 = vmatprep.subr.mxu0 0.0
        %2499 = vmatpush1.msra.mxu0 0.0
        %2500 = vmatprep.subr.mxu0 0.0
        %2501 = vmatpush1.msra.mxu0 0.0
        %2502 = vmatprep.subr.mxu0 0.0
        %2503 = vmatpush1.msra.mxu0 0.0
        %2504 = vmatprep.subr.mxu0 0.0
        %2505 = vmatpush1.msra.mxu0 0.0
        %2506 = vmatprep.subr.mxu0 0.0
        %2507 = vmatpush1.msra.mxu0 0.0
        %2508 = vmatprep.subr.mxu0 0.0
        %2509 = vmatpush1.msra.mxu0 0.0
        %2510 = vmatprep.subr.mxu0 0.0
        %2511 = vmatpush1.msra.mxu0 0.0
        %2512 = vmatprep.subr.mxu0 0.0
        %2513 = vmatpush1.msra.mxu0 0.0
        %2514 = vmatprep.subr.mxu0 0.0
        %2515 = vmatpush1.msra.mxu0 0.0
        %2516 = vmatprep.subr.mxu0 0.0
        %2517 = vmatpush1.msra.mxu0 0.0
        %2518 = vmatprep.subr.mxu0 0.0
        %2519 = vmatpush1.msra.mxu0 0.0
        %2520 = vmatprep.subr.mxu0 0.0
        %2521 = vmatpush1.msra.mxu0 0.0
        %2522 = vmatprep.subr.mxu0 0.0
        %2523 = vmatpush1.msra.mxu0 0.0
        %2524 = vmatprep.subr.mxu0 0.0
        %2525 = vmatpush1.msra.mxu0 0.0
        %2526 = vmatprep.subr.mxu0 0.0
        %2527 = vmatpush1.msra.mxu0 0.0
        %2528 = vmatprep.subr.mxu0 0.0
        %2529 = vmatpush1.msra.mxu0 0.0
        %2530 = vmatprep.subr.mxu0 0.0
        %2531 = vmatpush1.msra.mxu0 0.0
        %2532 = vmatprep.subr.mxu0 0.0
        %2533 = vmatpush1.msra.mxu0 0.0
        %2534 = vmatprep.subr.mxu0 0.0
        %2535 = vmatpush1.msra.mxu0 0.0
        %2536 = vmatprep.subr.mxu0 0.0
        %2537 = vmatpush1.msra.mxu0 0.0
        %2538 = vmatprep.subr.mxu0 0.0
        %2539 = vmatpush1.msra.mxu0 0.0
        %2540 = vmatprep.subr.mxu0 0.0
        %2541 = vmatpush1.msra.mxu0 0.0
        %2542 = vmatprep.subr.mxu0 0.0
        %2543 = vmatpush1.msra.mxu0 0.0
        %2544 = vmatprep.subr.mxu0 0.0
        %2545 = vmatpush1.msra.mxu0 0.0
        %2546 = vmatprep.subr.mxu0 0.0
        %2547 = vmatpush1.msra.mxu0 0.0
        %2548 = vmatprep.subr.mxu0 0.0
        %2549 = vmatpush1.msra.mxu0 0.0
        %2550 = vmatprep.subr.mxu0 0.0
        %2551 = vmatpush1.msra.mxu0 0.0
        %2552 = vmatprep.subr.mxu0 0.0
        %2553 = vmatpush1.msra.mxu0 0.0
        %2554 = vmatprep.subr.mxu0 0.0
        %2555 = vmatpush1.msra.mxu0 0.0
        %2556 = vmatprep.subr.mxu0 0.0
        %2557 = vmatpush1.msra.mxu0 0.0
        %2558 = vmatprep.mubr.f32.mxu0 0.0
        %2559 = vmatmul.mubr.f32.gmra.mrb[0].mxu0 %v2492
        %v2560 = vpop.f32.mrb[0].mxu0
        %v2561 = vadd.f32 0.0, %v2560
        %v2562 = vpop.f32.mrb[0].mxu0
        %2563 = vdwg.mxu0
        %2564 = vrot.lane.b32.xlu0 %v2245, 112
        %v2565 = vpop.permute.xlu0 %2564
        %v2568 = vsel %vm1004, %v2486, 0
        %2570 = vmatprep.subr.mxu0 0.0
        %2571 = vmatpush1.msra.mxu0 %v2565
        %2572 = vmatprep.subr.mxu0 0.0
        %2573 = vmatpush1.msra.mxu0 0.0
        %2574 = vmatprep.subr.mxu0 0.0
        %2575 = vmatpush1.msra.mxu0 0.0
        %2576 = vmatprep.subr.mxu0 0.0
        %2577 = vmatpush1.msra.mxu0 0.0
        %2578 = vmatprep.subr.mxu0 0.0
        %2579 = vmatpush1.msra.mxu0 0.0
        %2580 = vmatprep.subr.mxu0 0.0
        %2581 = vmatpush1.msra.mxu0 0.0
        %2582 = vmatprep.subr.mxu0 0.0
        %2583 = vmatpush1.msra.mxu0 0.0
        %2584 = vmatprep.subr.mxu0 0.0
        %2585 = vmatpush1.msra.mxu0 0.0
        %2586 = vmatprep.subr.mxu0 0.0
        %2587 = vmatpush1.msra.mxu0 0.0
        %2588 = vmatprep.subr.mxu0 0.0
        %2589 = vmatpush1.msra.mxu0 0.0
        %2590 = vmatprep.subr.mxu0 0.0
        %2591 = vmatpush1.msra.mxu0 0.0
        %2592 = vmatprep.subr.mxu0 0.0
        %2593 = vmatpush1.msra.mxu0 0.0
        %2594 = vmatprep.subr.mxu0 0.0
        %2595 = vmatpush1.msra.mxu0 0.0
        %2596 = vmatprep.subr.mxu0 0.0
        %2597 = vmatpush1.msra.mxu0 0.0
        %2598 = vmatprep.subr.mxu0 0.0
        %2599 = vmatpush1.msra.mxu0 0.0
        %2600 = vmatprep.subr.mxu0 0.0
        %2601 = vmatpush1.msra.mxu0 0.0
        %2602 = vmatprep.subr.mxu0 0.0
        %2603 = vmatpush1.msra.mxu0 0.0
        %2604 = vmatprep.subr.mxu0 0.0
        %2605 = vmatpush1.msra.mxu0 0.0
        %2606 = vmatprep.subr.mxu0 0.0
        %2607 = vmatpush1.msra.mxu0 0.0
        %2608 = vmatprep.subr.mxu0 0.0
        %2609 = vmatpush1.msra.mxu0 0.0
        %2610 = vmatprep.subr.mxu0 0.0
        %2611 = vmatpush1.msra.mxu0 0.0
        %2612 = vmatprep.subr.mxu0 0.0
        %2613 = vmatpush1.msra.mxu0 0.0
        %2614 = vmatprep.subr.mxu0 0.0
        %2615 = vmatpush1.msra.mxu0 0.0
        %2616 = vmatprep.subr.mxu0 0.0
        %2617 = vmatpush1.msra.mxu0 0.0
        %2618 = vmatprep.subr.mxu0 0.0
        %2619 = vmatpush1.msra.mxu0 0.0
        %2620 = vmatprep.subr.mxu0 0.0
        %2621 = vmatpush1.msra.mxu0 0.0
        %2622 = vmatprep.subr.mxu0 0.0
        %2623 = vmatpush1.msra.mxu0 0.0
        %2624 = vmatprep.subr.mxu0 0.0
        %2625 = vmatpush1.msra.mxu0 0.0
        %2626 = vmatprep.subr.mxu0 0.0
        %2627 = vmatpush1.msra.mxu0 0.0
        %2628 = vmatprep.subr.mxu0 0.0
        %2629 = vmatpush1.msra.mxu0 0.0
        %2630 = vmatprep.subr.mxu0 0.0
        %2631 = vmatpush1.msra.mxu0 0.0
        %2632 = vmatprep.subr.mxu0 0.0
        %2633 = vmatpush1.msra.mxu0 0.0
        %2634 = vmatprep.mubr.f32.mxu0 0.0
        %2635 = vmatmul.mubr.f32.gmra.mrb[0].mxu0 %v2568
        %v2636 = vpop.f32.mrb[0].mxu0
        %v2637 = vadd.f32 0.0, %v2636
        %v2638 = vpop.f32.mrb[0].mxu0
        %2639 = vdwg.mxu0
        %2640 = vrot.lane.b32.xlu0 %v2245, 96
        %v2641 = vpop.permute.xlu0 %2640
        %v2644 = vsel %vm1004, %v2488, 0
        %2646 = vmatprep.subr.mxu0 0.0
        %2647 = vmatpush1.msra.mxu0 %v2641
        %2648 = vmatprep.subr.mxu0 0.0
        %2649 = vmatpush1.msra.mxu0 0.0
        %2650 = vmatprep.subr.mxu0 0.0
        %2651 = vmatpush1.msra.mxu0 0.0
        %2652 = vmatprep.subr.mxu0 0.0
        %2653 = vmatpush1.msra.mxu0 0.0
        %2654 = vmatprep.subr.mxu0 0.0
        %2655 = vmatpush1.msra.mxu0 0.0
        %2656 = vmatprep.subr.mxu0 0.0
        %2657 = vmatpush1.msra.mxu0 0.0
        %2658 = vmatprep.subr.mxu0 0.0
        %2659 = vmatpush1.msra.mxu0 0.0
        %2660 = vmatprep.subr.mxu0 0.0
        %2661 = vmatpush1.msra.mxu0 0.0
        %2662 = vmatprep.subr.mxu0 0.0
        %2663 = vmatpush1.msra.mxu0 0.0
        %2664 = vmatprep.subr.mxu0 0.0
        %2665 = vmatpush1.msra.mxu0 0.0
        %2666 = vmatprep.subr.mxu0 0.0
        %2667 = vmatpush1.msra.mxu0 0.0
        %2668 = vmatprep.subr.mxu0 0.0
        %2669 = vmatpush1.msra.mxu0 0.0
        %2670 = vmatprep.subr.mxu0 0.0
        %2671 = vmatpush1.msra.mxu0 0.0
        %2672 = vmatprep.subr.mxu0 0.0
        %2673 = vmatpush1.msra.mxu0 0.0
        %2674 = vmatprep.subr.mxu0 0.0
        %2675 = vmatpush1.msra.mxu0 0.0
        %2676 = vmatprep.subr.mxu0 0.0
        %2677 = vmatpush1.msra.mxu0 0.0
        %2678 = vmatprep.subr.mxu0 0.0
        %2679 = vmatpush1.msra.mxu0 0.0
        %2680 = vmatprep.subr.mxu0 0.0
        %2681 = vmatpush1.msra.mxu0 0.0
        %2682 = vmatprep.subr.mxu0 0.0
        %2683 = vmatpush1.msra.mxu0 0.0
        %2684 = vmatprep.subr.mxu0 0.0
        %2685 = vmatpush1.msra.mxu0 0.0
        %2686 = vmatprep.subr.mxu0 0.0
        %2687 = vmatpush1.msra.mxu0 0.0
        %2688 = vmatprep.subr.mxu0 0.0
        %2689 = vmatpush1.msra.mxu0 0.0
        %2690 = vmatprep.subr.mxu0 0.0
        %2691 = vmatpush1.msra.mxu0 0.0
        %2692 = vmatprep.subr.mxu0 0.0
        %2693 = vmatpush1.msra.mxu0 0.0
        %2694 = vmatprep.subr.mxu0 0.0
        %2695 = vmatpush1.msra.mxu0 0.0
        %2696 = vmatprep.subr.mxu0 0.0
        %2697 = vmatpush1.msra.mxu0 0.0
        %2698 = vmatprep.subr.mxu0 0.0
        %2699 = vmatpush1.msra.mxu0 0.0
        %2700 = vmatprep.subr.mxu0 0.0
        %2701 = vmatpush1.msra.mxu0 0.0
        %2702 = vmatprep.subr.mxu0 0.0
        %2703 = vmatpush1.msra.mxu0 0.0
        %2704 = vmatprep.subr.mxu0 0.0
        %2705 = vmatpush1.msra.mxu0 0.0
        %2706 = vmatprep.subr.mxu0 0.0
        %2707 = vmatpush1.msra.mxu0 0.0
        %2708 = vmatprep.subr.mxu0 0.0
        %2709 = vmatpush1.msra.mxu0 0.0
        %2710 = vmatprep.mubr.f32.mxu0 0.0
        %2711 = vmatmul.mubr.f32.gmra.mrb[0].mxu0 %v2644
        %v2712 = vpop.f32.mrb[0].mxu0
        %v2713 = vadd.f32 0.0, %v2712
        %v2714 = vpop.f32.mrb[0].mxu0
        %2715 = vdwg.mxu0
        %2716 = vrot.lane.b32.xlu0 %v2245, 80
        %v2717 = vpop.permute.xlu0 %2716
        %v2720 = vsel %vm1004, %v2490, 0
        %2722 = vmatprep.subr.mxu0 0.0
        %2723 = vmatpush1.msra.mxu0 %v2717
        %2724 = vmatprep.subr.mxu0 0.0
        %2725 = vmatpush1.msra.mxu0 0.0
        %2726 = vmatprep.subr.mxu0 0.0
        %2727 = vmatpush1.msra.mxu0 0.0
        %2728 = vmatprep.subr.mxu0 0.0
        %2729 = vmatpush1.msra.mxu0 0.0
        %2730 = vmatprep.subr.mxu0 0.0
        %2731 = vmatpush1.msra.mxu0 0.0
        %2732 = vmatprep.subr.mxu0 0.0
        %2733 = vmatpush1.msra.mxu0 0.0
        %2734 = vmatprep.subr.mxu0 0.0
        %2735 = vmatpush1.msra.mxu0 0.0
        %2736 = vmatprep.subr.mxu0 0.0
        %2737 = vmatpush1.msra.mxu0 0.0
        %2738 = vmatprep.subr.mxu0 0.0
        %2739 = vmatpush1.msra.mxu0 0.0
        %2740 = vmatprep.subr.mxu0 0.0
        %2741 = vmatpush1.msra.mxu0 0.0
        %2742 = vmatprep.subr.mxu0 0.0
        %2743 = vmatpush1.msra.mxu0 0.0
        %2744 = vmatprep.subr.mxu0 0.0
        %2745 = vmatpush1.msra.mxu0 0.0
        %2746 = vmatprep.subr.mxu0 0.0
        %2747 = vmatpush1.msra.mxu0 0.0
        %2748 = vmatprep.subr.mxu0 0.0
        %2749 = vmatpush1.msra.mxu0 0.0
        %2750 = vmatprep.subr.mxu0 0.0
        %2751 = vmatpush1.msra.mxu0 0.0
        %2752 = vmatprep.subr.mxu0 0.0
        %2753 = vmatpush1.msra.mxu0 0.0
        %2754 = vmatprep.subr.mxu0 0.0
        %2755 = vmatpush1.msra.mxu0 0.0
        %2756 = vmatprep.subr.mxu0 0.0
        %2757 = vmatpush1.msra.mxu0 0.0
        %2758 = vmatprep.subr.mxu0 0.0
        %2759 = vmatpush1.msra.mxu0 0.0
        %2760 = vmatprep.subr.mxu0 0.0
        %2761 = vmatpush1.msra.mxu0 0.0
        %2762 = vmatprep.subr.mxu0 0.0
        %2763 = vmatpush1.msra.mxu0 0.0
        %2764 = vmatprep.subr.mxu0 0.0
        %2765 = vmatpush1.msra.mxu0 0.0
        %2766 = vmatprep.subr.mxu0 0.0
        %2767 = vmatpush1.msra.mxu0 0.0
        %2768 = vmatprep.subr.mxu0 0.0
        %2769 = vmatpush1.msra.mxu0 0.0
        %2770 = vmatprep.subr.mxu0 0.0
        %2771 = vmatpush1.msra.mxu0 0.0
        %2772 = vmatprep.subr.mxu0 0.0
        %2773 = vmatpush1.msra.mxu0 0.0
        %2774 = vmatprep.subr.mxu0 0.0
        %2775 = vmatpush1.msra.mxu0 0.0
        %2776 = vmatprep.subr.mxu0 0.0
        %2777 = vmatpush1.msra.mxu0 0.0
        %2778 = vmatprep.subr.mxu0 0.0
        %2779 = vmatpush1.msra.mxu0 0.0
        %2780 = vmatprep.subr.mxu0 0.0
        %2781 = vmatpush1.msra.mxu0 0.0
        %2782 = vmatprep.subr.mxu0 0.0
        %2783 = vmatpush1.msra.mxu0 0.0
        %2784 = vmatprep.subr.mxu0 0.0
        %2785 = vmatpush1.msra.mxu0 0.0
        %2786 = vmatprep.mubr.f32.mxu0 0.0
        %2787 = vmatmul.mubr.f32.gmra.mrb[0].mxu0 %v2720
        %v2788 = vpop.f32.mrb[0].mxu0
        %v2789 = vadd.f32 0.0, %v2788
        %v2790 = vpop.f32.mrb[0].mxu0
        %2791 = vdwg.mxu0
        %2793 = vrot.lane.b32.xlu0 %v2637, 16
        %v2794 = vpop.permute.xlu0 %2793
        %2797 = vrot.lane.b32.xlu0 %v2713, 32
        %v2798 = vpop.permute.xlu0 %2797
        %2801 = vrot.lane.b32.xlu0 %v2789, 48
        %v2802 = vpop.permute.xlu0 %2801
        %v2804 = vsel %vm1362, %v2561, %v2794
        %v2805 = vsel %vm1364, %v2804, %v2798
        %v2806 = vsel %vm1366, %v2805, %v2802
        %v2807 = vmul.f32 %v2806, %v2806
        %v2809 = vsel %vm804, %v2807, 0
        %2811 = vmatprep.subr.mxu0 0.0
        %2812 = vmatpush1.msra.mxu0 %v694
        %2813 = vmatprep.subr.mxu0 0.0
        %2814 = vmatpush1.msra.mxu0 %v695
        %2815 = vmatprep.subr.mxu0 0.0
        %2816 = vmatpush1.msra.mxu0 %v696
        %2817 = vmatprep.subr.mxu0 0.0
        %2818 = vmatpush1.msra.mxu0 %v697
        %2819 = vmatprep.subr.mxu0 0.0
        %2820 = vmatpush1.msra.mxu0 %v698
        %2821 = vmatprep.subr.mxu0 0.0
        %2822 = vmatpush1.msra.mxu0 %v699
        %2823 = vmatprep.subr.mxu0 0.0
        %2824 = vmatpush1.msra.mxu0 %v700
        %2825 = vmatprep.subr.mxu0 0.0
        %2826 = vmatpush1.msra.mxu0 %v701
        %2827 = vmatprep.subr.mxu0 0.0
        %2828 = vmatpush1.msra.mxu0 0.0
        %2829 = vmatprep.subr.mxu0 0.0
        %2830 = vmatpush1.msra.mxu0 0.0
        %2831 = vmatprep.subr.mxu0 0.0
        %2832 = vmatpush1.msra.mxu0 0.0
        %2833 = vmatprep.subr.mxu0 0.0
        %2834 = vmatpush1.msra.mxu0 0.0
        %2835 = vmatprep.subr.mxu0 0.0
        %2836 = vmatpush1.msra.mxu0 0.0
        %2837 = vmatprep.subr.mxu0 0.0
        %2838 = vmatpush1.msra.mxu0 0.0
        %2839 = vmatprep.subr.mxu0 0.0
        %2840 = vmatpush1.msra.mxu0 0.0
        %2841 = vmatprep.subr.mxu0 0.0
        %2842 = vmatpush1.msra.mxu0 0.0
        %2843 = vmatprep.subr.mxu0 0.0
        %2844 = vmatpush1.msra.mxu0 0.0
        %2845 = vmatprep.subr.mxu0 0.0
        %2846 = vmatpush1.msra.mxu0 0.0
        %2847 = vmatprep.subr.mxu0 0.0
        %2848 = vmatpush1.msra.mxu0 0.0
        %2849 = vmatprep.subr.mxu0 0.0
        %2850 = vmatpush1.msra.mxu0 0.0
        %2851 = vmatprep.subr.mxu0 0.0
        %2852 = vmatpush1.msra.mxu0 0.0
        %2853 = vmatprep.subr.mxu0 0.0
        %2854 = vmatpush1.msra.mxu0 0.0
        %2855 = vmatprep.subr.mxu0 0.0
        %2856 = vmatpush1.msra.mxu0 0.0
        %2857 = vmatprep.subr.mxu0 0.0
        %2858 = vmatpush1.msra.mxu0 0.0
        %2859 = vmatprep.subr.mxu0 0.0
        %2860 = vmatpush1.msra.mxu0 0.0
        %2861 = vmatprep.subr.mxu0 0.0
        %2862 = vmatpush1.msra.mxu0 0.0
        %2863 = vmatprep.subr.mxu0 0.0
        %2864 = vmatpush1.msra.mxu0 0.0
        %2865 = vmatprep.subr.mxu0 0.0
        %2866 = vmatpush1.msra.mxu0 0.0
        %2867 = vmatprep.subr.mxu0 0.0
        %2868 = vmatpush1.msra.mxu0 0.0
        %2869 = vmatprep.subr.mxu0 0.0
        %2870 = vmatpush1.msra.mxu0 0.0
        %2871 = vmatprep.subr.mxu0 0.0
        %2872 = vmatpush1.msra.mxu0 0.0
        %2873 = vmatprep.subr.mxu0 0.0
        %2874 = vmatpush1.msra.mxu0 0.0
        %2875 = vmatprep.mubr.f32.mxu0 0.0
        %2876 = vmatmul.mubr.f32.gmra.mrb[0].mxu0 %v2809
        %v2877 = vpop.f32.mrb[0].mxu0
        %v2878 = vadd.f32 0.0, %v2877
        %v2879 = vpop.f32.mrb[0].mxu0
        %2880 = vdwg.mxu0
        %v2881 = vrsqrt.pop %v2878
        %v2882 = vmul.f32 %v2878, %v2881
        %vm2883 = vcmp.eq.f32.partialorder %v2878, inf
        %v2884 = vsel %vm2883, %v2878, %v2882
        %vm2885 = vcmp.eq.f32.partialorder %v2878, 0.0
        %v2886 = vand.u32 %v2878, 2147483648
        %v2887 = vsel %vm2885, %v2886, %v2884
        %v2888 = vmax.f32 %v2887, 1e-15
        %vm2889 = vcmp.gt.f32.partialorder %v2888, 0.996
        %v2890 = vrcp.pop %v2888
        %v2891 = vmul.f32 0.996, %v2890
        %v2892 = vsel %vm2889, %v2891, 1.0
        %v2893 = vmin.f32 %v2888, 0.996
        %v2894 = vmax.f32 %v2893, -0.9999999
        %v2895 = vmin.f32 %v2894, 0.9999999
        %v2896 = vadd.f32 %v2895, 1.0
        %v2897 = vlog2.pop %v2896
        %v2898 = vmul.f32 %v2897, 0.6931472
        %v2899 = vsub.f32 1.0, %v2895
        %v2900 = vlog2.pop %v2899
        %v2901 = vmul.f32 %v2900, 0.6931472
        %v2902 = vsub.f32 %v2898, %v2901
        %v2903 = vmul.f32 %v2902, 0.5
        %v2904 = vmul.f32 %v2892, %v2903
        %v2905 = vrcp.pop %v2893
        %v2906 = vmul.f32 %v2904, %v2905
        %v2908 = vsel %vm1468, %v2906, 0
        %2910 = vmatprep.subr.mxu0 0.0
        %2911 = vmatpush1.msra.mxu0 %v1474
        %2912 = vmatprep.subr.mxu0 0.0
        %2913 = vmatpush1.msra.mxu0 0.0
        %2914 = vmatprep.subr.mxu0 0.0
        %2915 = vmatpush1.msra.mxu0 0.0
        %2916 = vmatprep.subr.mxu0 0.0
        %2917 = vmatpush1.msra.mxu0 0.0
        %2918 = vmatprep.subr.mxu0 0.0
        %2919 = vmatpush1.msra.mxu0 0.0
        %2920 = vmatprep.subr.mxu0 0.0
        %2921 = vmatpush1.msra.mxu0 0.0
        %2922 = vmatprep.subr.mxu0 0.0
        %2923 = vmatpush1.msra.mxu0 0.0
        %2924 = vmatprep.subr.mxu0 0.0
        %2925 = vmatpush1.msra.mxu0 0.0
        %2926 = vmatprep.subr.mxu0 0.0
        %2927 = vmatpush1.msra.mxu0 0.0
        %2928 = vmatprep.subr.mxu0 0.0
        %2929 = vmatpush1.msra.mxu0 0.0
        %2930 = vmatprep.subr.mxu0 0.0
        %2931 = vmatpush1.msra.mxu0 0.0
        %2932 = vmatprep.subr.mxu0 0.0
        %2933 = vmatpush1.msra.mxu0 0.0
        %2934 = vmatprep.subr.mxu0 0.0
        %2935 = vmatpush1.msra.mxu0 0.0
        %2936 = vmatprep.subr.mxu0 0.0
        %2937 = vmatpush1.msra.mxu0 0.0
        %2938 = vmatprep.subr.mxu0 0.0
        %2939 = vmatpush1.msra.mxu0 0.0
        %2940 = vmatprep.subr.mxu0 0.0
        %2941 = vmatpush1.msra.mxu0 0.0
        %2942 = vmatprep.subr.mxu0 0.0
        %2943 = vmatpush1.msra.mxu0 0.0
        %2944 = vmatprep.subr.mxu0 0.0
        %2945 = vmatpush1.msra.mxu0 0.0
        %2946 = vmatprep.subr.mxu0 0.0
        %2947 = vmatpush1.msra.mxu0 0.0
        %2948 = vmatprep.subr.mxu0 0.0
        %2949 = vmatpush1.msra.mxu0 0.0
        %2950 = vmatprep.subr.mxu0 0.0
        %2951 = vmatpush1.msra.mxu0 0.0
        %2952 = vmatprep.subr.mxu0 0.0
        %2953 = vmatpush1.msra.mxu0 0.0
        %2954 = vmatprep.subr.mxu0 0.0
        %2955 = vmatpush1.msra.mxu0 0.0
        %2956 = vmatprep.subr.mxu0 0.0
        %2957 = vmatpush1.msra.mxu0 0.0
        %2958 = vmatprep.subr.mxu0 0.0
        %2959 = vmatpush1.msra.mxu0 0.0
        %2960 = vmatprep.subr.mxu0 0.0
        %2961 = vmatpush1.msra.mxu0 0.0
        %2962 = vmatprep.subr.mxu0 0.0
        %2963 = vmatpush1.msra.mxu0 0.0
        %2964 = vmatprep.subr.mxu0 0.0
        %2965 = vmatpush1.msra.mxu0 0.0
        %2966 = vmatprep.subr.mxu0 0.0
        %2967 = vmatpush1.msra.mxu0 0.0
        %2968 = vmatprep.subr.mxu0 0.0
        %2969 = vmatpush1.msra.mxu0 0.0
        %2970 = vmatprep.subr.mxu0 0.0
        %2971 = vmatpush1.msra.mxu0 0.0
        %2972 = vmatprep.subr.mxu0 0.0
        %2973 = vmatpush1.msra.mxu0 0.0
        %2974 = vmatprep.mubr.f32.mxu0 0.0
        %2975 = vmatmul.mubr.f32.gmra.mrb[0].mxu0 %v2908
        %v2976 = vpop.f32.mrb[0].mxu0
        %v2977 = vadd.f32 0.0, %v2976
        %v2978 = vpop.f32.mrb[0].mxu0
        %2979 = vdwg.mxu0
        %v2980 = vmul.f32 %v2806, %v2977
        %vm2981 = vcmp.gt.f32.partialorder %v2980, 0.0
        %v2982 = vmin.f32 %v2980, 0.0
        %v2983 = vmul.f32 %v2982, 1.442695
        %v2984 = vpow.pop %v2983
        %v2985 = vsub.f32 %v2984, 1.0
        %v2986 = vsel %vm2981, %v2980, %v2985
        %v2987 = vadd.f32 %v2980, 0.94247776
        %v2988 = vand.u32 2147483647, %v2987
        %vm2989 = vcmp.le.f32.partialorder %v2988, 0.7853982
        %vm2990 = vcmp.lt.s32.totalorder %v2987, 0
        %v2991 = vand.u32 %v2987, 2139095040
        %v2992 = vshrl.u32 %v2991, 23
        %v2993 = vsub.s32 %v2992, 127
        %v2994 = vand.u32 2147483647, %v2987
        %v2995 = vand.u32 %v2994, 8388607
        %v2996 = vor.u32 %v2995, 8388608
        %v2997 = vsub.s32 0, %v2996
        %v2998 = vadd.s32 %v2993, 1
        %vm2999 = vcmp.gt.s32.totalorder %v2998, 0
        %v3000 = vsel %vm2999, %v2998, 0
        %v3001 = vshrl.u32 %v3000, 5
        %v3002 = vand.u32 %v3000, 31
        %v3003 = vsub.s32 32, %v3002
        %v3004 = vshrl.u32 683565275, %v3003
        %v3005 = vshll.u32 683565275, %v3002
        %v3006 = vshrl.u32 2475754826, %v3003
        %v3007 = vor.u32 %v3005, %v3006
        %v3008 = vshll.u32 2475754826, %v3002
        %v3009 = vshrl.u32 2131351028, %v3003
        %v3010 = vor.u32 %v3008, %v3009
        %v3011 = vshll.u32 2131351028, %v3002
        %v3012 = vshrl.u32 2102212464, %v3003
        %v3013 = vor.u32 %v3011, %v3012
        %v3014 = vshll.u32 2102212464, %v3002
        %v3015 = vshrl.u32 920167782, %v3003
        %v3016 = vor.u32 %v3014, %v3015
        %v3017 = vshll.u32 920167782, %v3002
        %v3018 = vshrl.u32 1326507024, %v3003
        %v3019 = vor.u32 %v3017, %v3018
        %vm3020 = vcmp.lt.s32.totalorder %v3001, 1
        %vm3021 = vcmp.lt.s32.totalorder %v3001, 2
        %vm3022 = vcmp.lt.s32.totalorder %v3001, 3
        %vm3023 = vcmp.lt.s32.totalorder %v3001, 4
        %v3024 = vsel %vm3020, %v3004, %v3007
        %v3025 = vsel %vm3023, %v3013, 2102212464
        %v3026 = vsel %vm3022, %v3010, %v3025
        %v3027 = vsel %vm3021, %v3024, %v3026
        %v3028 = vsel %vm3020, %v3007, %v3010
        %v3029 = vsel %vm3023, %v3016, 920167782
        %v3030 = vsel %vm3022, %v3013, %v3029
        %v3031 = vsel %vm3021, %v3028, %v3030
        %v3032 = vsel %vm3020, %v3010, %v3013
        %v3033 = vsel %vm3023, %v3019, 1326507024
        %v3034 = vsel %vm3022, %v3016, %v3033
        %v3035 = vsel %vm3021, %v3032, %v3034
        %v3036 = vshll.u32 %v2996, 8
        %v3037 = vmul.u32.u64.compose %v3036, %v3035
        %v3038 = vextract.low.u32 %v3037
        %v3039 = vextract.high.u32 %v3037
        %v3040 = vmul.u32.u64.compose %v3036, %v3031
        %v3041 = vextract.low.u32 %v3040
        %v3042 = vextract.high.u32 %v3040
        %v3043 = vmul.u32 %v3036, %v3027
        %v3044 = vadd.s32 %v3039, %v3041
        %vm3045 = vc.u32 %v3039, %v3041
        %v3046 = vadd.s32 %v3042, 1
        %v3047 = vsel %vm3045, %v3046, %v3042
        %v3048 = vadd.s32 %v3043, %v3047
        %v3049 = vadd.s32 %v3048, 536870912
        %v3050 = vshrl.u32 %v3049, 30
        %v3051 = vshll.u32 %v3050, 30
        %v3052 = vsub.s32 %v3048, %v3051
        %vm3053 = vcmp.lt.s32.totalorder %v3052, 0
        %v3054 = vsub.s32 0, %v3052
        %v3055 = vsel %vm3053, %v3054, %v3052
        %v3056 = vclz %v3055
        %v3057 = vsub.s32 %v3056, 2
        %vm3058 = vcmp.gt.s32.totalorder 0, %v3057
        %v3059 = vsel %vm3058, 0, %v3057
        %v3060 = vsub.s32 32, %v3059
        %v3061 = vshll.u32 %v3052, %v3059
        %v3062 = vshrl.u32 %v3044, %v3060
        %v3063 = vor.u32 %v3061, %v3062
        %v3064 = vsub.s32 4294967266, %v3059
        %v3065 = vadd.s32 %v3064, 127
        %v3066 = vshll.u32 %v3065, 23
        %v3067 = vor.u32 4788187, %v3066
        %v3068 = vand.u32 2147483647, %v3067
        %v3070 = vcvt.s32.f32 %v3063
        %v3071 = vmul.f32 %v3070, %v3068
        %v3072 = vxor.u32 %v3071, 2147483648
        %v3073 = vsel %vm2990, %v3072, %v3071
        %v3074 = vsub.s32 4, %v3050
        %v3075 = vsel %vm2990, %v3074, %v3050
        %v3076 = vsel %vm2989, %v2987, %v3073
        %v3077 = vsel %vm2989, 0, %v3075
        %v3078 = vcosq.f32.pop %v3076
        %v3079 = vsinq.f32.pop %v3076
        %vm3080 = vweird.f32 %v2987
        %v3081 = vand.u32 %v3077, 3
        %vm3082 = vcmp.lt.s32.totalorder %v3081, 2
        %vm3083 = vcmp.eq.s32.totalorder %v3081, 0
        %v3084 = vxor.u32 %v3079, 2147483648
        %v3085 = vsel %vm3083, %v3078, %v3084
        %vm3086 = vcmp.eq.s32.totalorder %v3081, 2
        %v3087 = vxor.u32 %v3078, 2147483648
        %v3088 = vsel %vm3086, %v3087, %v3079
        %v3089 = vsel %vm3082, %v3085, %v3088
        %v3090 = vsel %vm3080, nan, %v3089
        %v3091 = vmul.f32 %v3090, 0.5
        %v3092 = vadd.f32 %v2986, %v3091
        %v3094 = vsel %vm804, %v3092, 0
        %3096 = vmatprep.subr.mxu0 0.0
        %3097 = vmatpush1.msra.mxu0 %v2162
        %3098 = vmatprep.subr.mxu0 0.0
        %3099 = vmatpush1.msra.mxu0 %v2163
        %3100 = vmatprep.subr.mxu0 0.0
        %3101 = vmatpush1.msra.mxu0 %v2164
        %3102 = vmatprep.subr.mxu0 0.0
        %3103 = vmatpush1.msra.mxu0 %v2165
        %3104 = vmatprep.subr.mxu0 0.0
        %3105 = vmatpush1.msra.mxu0 %v2166
        %3106 = vmatprep.subr.mxu0 0.0
        %3107 = vmatpush1.msra.mxu0 %v2167
        %3108 = vmatprep.subr.mxu0 0.0
        %3109 = vmatpush1.msra.mxu0 %v2168
        %3110 = vmatprep.subr.mxu0 0.0
        %3111 = vmatpush1.msra.mxu0 %v2169
        %3112 = vmatprep.subr.mxu0 0.0
        %3113 = vmatpush1.msra.mxu0 0.0
        %3114 = vmatprep.subr.mxu0 0.0
        %3115 = vmatpush1.msra.mxu0 0.0
        %3116 = vmatprep.subr.mxu0 0.0
        %3117 = vmatpush1.msra.mxu0 0.0
        %3118 = vmatprep.subr.mxu0 0.0
        %3119 = vmatpush1.msra.mxu0 0.0
        %3120 = vmatprep.subr.mxu0 0.0
        %3121 = vmatpush1.msra.mxu0 0.0
        %3122 = vmatprep.subr.mxu0 0.0
        %3123 = vmatpush1.msra.mxu0 0.0
        %3124 = vmatprep.subr.mxu0 0.0
        %3125 = vmatpush1.msra.mxu0 0.0
        %3126 = vmatprep.subr.mxu0 0.0
        %3127 = vmatpush1.msra.mxu0 0.0
        %3128 = vmatprep.subr.mxu0 0.0
        %3129 = vmatpush1.msra.mxu0 0.0
        %3130 = vmatprep.subr.mxu0 0.0
        %3131 = vmatpush1.msra.mxu0 0.0
        %3132 = vmatprep.subr.mxu0 0.0
        %3133 = vmatpush1.msra.mxu0 0.0
        %3134 = vmatprep.subr.mxu0 0.0
        %3135 = vmatpush1.msra.mxu0 0.0
        %3136 = vmatprep.subr.mxu0 0.0
        %3137 = vmatpush1.msra.mxu0 0.0
        %3138 = vmatprep.subr.mxu0 0.0
        %3139 = vmatpush1.msra.mxu0 0.0
        %3140 = vmatprep.subr.mxu0 0.0
        %3141 = vmatpush1.msra.mxu0 0.0
        %3142 = vmatprep.subr.mxu0 0.0
        %3143 = vmatpush1.msra.mxu0 0.0
        %3144 = vmatprep.subr.mxu0 0.0
        %3145 = vmatpush1.msra.mxu0 0.0
        %3146 = vmatprep.subr.mxu0 0.0
        %3147 = vmatpush1.msra.mxu0 0.0
        %3148 = vmatprep.subr.mxu0 0.0
        %3149 = vmatpush1.msra.mxu0 0.0
        %3150 = vmatprep.subr.mxu0 0.0
        %3151 = vmatpush1.msra.mxu0 0.0
        %3152 = vmatprep.subr.mxu0 0.0
        %3153 = vmatpush1.msra.mxu0 0.0
        %3154 = vmatprep.subr.mxu0 0.0
        %3155 = vmatpush1.msra.mxu0 0.0
        %3156 = vmatprep.subr.mxu0 0.0
        %3157 = vmatpush1.msra.mxu0 0.0
        %3158 = vmatprep.subr.mxu0 0.0
        %3159 = vmatpush1.msra.mxu0 0.0
        %3160 = vmatprep.mubr.f32.mxu0 0.0
        %3161 = vmatmul.mubr.f32.gmra.mrb[0].mxu0 %v3094
        %v3162 = vpop.f32.mrb[0].mxu0
        %v3163 = vadd.f32 0.0, %v3162
        %v3164 = vpop.f32.mrb[0].mxu0
        %3165 = vdwg.mxu0
        %v3167 = vsel %vm1362, %v3163, 0
        %3169 = vmatprep.subr.mxu0 0.0
        %3170 = vmatpush1.msra.mxu0 %v2170
        %3171 = vmatprep.subr.mxu0 0.0
        %3172 = vmatpush1.msra.mxu0 %v2171
        %3173 = vmatprep.subr.mxu0 0.0
        %3174 = vmatpush1.msra.mxu0 0.0
        %3175 = vmatprep.subr.mxu0 0.0
        %3176 = vmatpush1.msra.mxu0 0.0
        %3177 = vmatprep.subr.mxu0 0.0
        %3178 = vmatpush1.msra.mxu0 0.0
        %3179 = vmatprep.subr.mxu0 0.0
        %3180 = vmatpush1.msra.mxu0 0.0
        %3181 = vmatprep.subr.mxu0 0.0
        %3182 = vmatpush1.msra.mxu0 0.0
        %3183 = vmatprep.subr.mxu0 0.0
        %3184 = vmatpush1.msra.mxu0 0.0
        %3185 = vmatprep.subr.mxu0 0.0
        %3186 = vmatpush1.msra.mxu0 0.0
        %3187 = vmatprep.subr.mxu0 0.0
        %3188 = vmatpush1.msra.mxu0 0.0
        %3189 = vmatprep.subr.mxu0 0.0
        %3190 = vmatpush1.msra.mxu0 0.0
        %3191 = vmatprep.subr.mxu0 0.0
        %3192 = vmatpush1.msra.mxu0 0.0
        %3193 = vmatprep.subr.mxu0 0.0
        %3194 = vmatpush1.msra.mxu0 0.0
        %3195 = vmatprep.subr.mxu0 0.0
        %3196 = vmatpush1.msra.mxu0 0.0
        %3197 = vmatprep.subr.mxu0 0.0
        %3198 = vmatpush1.msra.mxu0 0.0
        %3199 = vmatprep.subr.mxu0 0.0
        %3200 = vmatpush1.msra.mxu0 0.0
        %3201 = vmatprep.subr.mxu0 0.0
        %3202 = vmatpush1.msra.mxu0 0.0
        %3203 = vmatprep.subr.mxu0 0.0
        %3204 = vmatpush1.msra.mxu0 0.0
        %3205 = vmatprep.subr.mxu0 0.0
        %3206 = vmatpush1.msra.mxu0 0.0
        %3207 = vmatprep.subr.mxu0 0.0
        %3208 = vmatpush1.msra.mxu0 0.0
        %3209 = vmatprep.subr.mxu0 0.0
        %3210 = vmatpush1.msra.mxu0 0.0
        %3211 = vmatprep.subr.mxu0 0.0
        %3212 = vmatpush1.msra.mxu0 0.0
        %3213 = vmatprep.subr.mxu0 0.0
        %3214 = vmatpush1.msra.mxu0 0.0
        %3215 = vmatprep.subr.mxu0 0.0
        %3216 = vmatpush1.msra.mxu0 0.0
        %3217 = vmatprep.subr.mxu0 0.0
        %3218 = vmatpush1.msra.mxu0 0.0
        %3219 = vmatprep.subr.mxu0 0.0
        %3220 = vmatpush1.msra.mxu0 0.0
        %3221 = vmatprep.subr.mxu0 0.0
        %3222 = vmatpush1.msra.mxu0 0.0
        %3223 = vmatprep.subr.mxu0 0.0
        %3224 = vmatpush1.msra.mxu0 0.0
        %3225 = vmatprep.subr.mxu0 0.0
        %3226 = vmatpush1.msra.mxu0 0.0
        %3227 = vmatprep.subr.mxu0 0.0
        %3228 = vmatpush1.msra.mxu0 0.0
        %3229 = vmatprep.subr.mxu0 0.0
        %3230 = vmatpush1.msra.mxu0 0.0
        %3231 = vmatprep.subr.mxu0 0.0
        %3232 = vmatpush1.msra.mxu0 0.0
        %3233 = vmatprep.mubr.f32.mxu0 0.0
        %3234 = vmatmul.mubr.f32.gmra.mrb[0].mxu0 %v3167
        %v3235 = vpop.f32.mrb[0].mxu0
        %v3236 = vadd.f32 0.0, %v3235
        %v3237 = vpop.f32.mrb[0].mxu0
        %3238 = vdwg.mxu0
        %v3240 = vsel %vm1362, %v2172, 0
        %3242 = vmatprep.subr.mxu0 0.0
        %3243 = vmatpush1.xpose.msra.mxu0 %v3167
        %3244 = vmatprep.subr.mxu0 0.0
        %3245 = vmatpush1.xpose.msra.mxu0 0.0
        %3246 = vmatprep.subr.mxu0 0.0
        %3247 = vmatpush1.xpose.msra.mxu0 0.0
        %3248 = vmatprep.subr.mxu0 0.0
        %3249 = vmatpush1.xpose.msra.mxu0 0.0
        %3250 = vmatprep.subr.mxu0 0.0
        %3251 = vmatpush1.xpose.msra.mxu0 0.0
        %3252 = vmatprep.subr.mxu0 0.0
        %3253 = vmatpush1.xpose.msra.mxu0 0.0
        %3254 = vmatprep.subr.mxu0 0.0
        %3255 = vmatpush1.xpose.msra.mxu0 0.0
        %3256 = vmatprep.subr.mxu0 0.0
        %3257 = vmatpush1.xpose.msra.mxu0 0.0
        %3258 = vmatprep.subr.mxu0 0.0
        %3259 = vmatpush1.xpose.msra.mxu0 0.0
        %3260 = vmatprep.subr.mxu0 0.0
        %3261 = vmatpush1.xpose.msra.mxu0 0.0
        %3262 = vmatprep.subr.mxu0 0.0
        %3263 = vmatpush1.xpose.msra.mxu0 0.0
        %3264 = vmatprep.subr.mxu0 0.0
        %3265 = vmatpush1.xpose.msra.mxu0 0.0
        %3266 = vmatprep.subr.mxu0 0.0
        %3267 = vmatpush1.xpose.msra.mxu0 0.0
        %3268 = vmatprep.subr.mxu0 0.0
        %3269 = vmatpush1.xpose.msra.mxu0 0.0
        %3270 = vmatprep.subr.mxu0 0.0
        %3271 = vmatpush1.xpose.msra.mxu0 0.0
        %3272 = vmatprep.subr.mxu0 0.0
        %3273 = vmatpush1.xpose.msra.mxu0 0.0
        %3274 = vmatprep.subr.mxu0 0.0
        %3275 = vmatpush1.xpose.msra.mxu0 0.0
        %3276 = vmatprep.subr.mxu0 0.0
        %3277 = vmatpush1.xpose.msra.mxu0 0.0
        %3278 = vmatprep.subr.mxu0 0.0
        %3279 = vmatpush1.xpose.msra.mxu0 0.0
        %3280 = vmatprep.subr.mxu0 0.0
        %3281 = vmatpush1.xpose.msra.mxu0 0.0
        %3282 = vmatprep.subr.mxu0 0.0
        %3283 = vmatpush1.xpose.msra.mxu0 0.0
        %3284 = vmatprep.subr.mxu0 0.0
        %3285 = vmatpush1.xpose.msra.mxu0 0.0
        %3286 = vmatprep.subr.mxu0 0.0
        %3287 = vmatpush1.xpose.msra.mxu0 0.0
        %3288 = vmatprep.subr.mxu0 0.0
        %3289 = vmatpush1.xpose.msra.mxu0 0.0
        %3290 = vmatprep.subr.mxu0 0.0
        %3291 = vmatpush1.xpose.msra.mxu0 0.0
        %3292 = vmatprep.subr.mxu0 0.0
        %3293 = vmatpush1.xpose.msra.mxu0 0.0
        %3294 = vmatprep.subr.mxu0 0.0
        %3295 = vmatpush1.xpose.msra.mxu0 0.0
        %3296 = vmatprep.subr.mxu0 0.0
        %3297 = vmatpush1.xpose.msra.mxu0 0.0
        %3298 = vmatprep.subr.mxu0 0.0
        %3299 = vmatpush1.xpose.msra.mxu0 0.0
        %3300 = vmatprep.subr.mxu0 0.0
        %3301 = vmatpush1.xpose.msra.mxu0 0.0
        %3302 = vmatprep.subr.mxu0 0.0
        %3303 = vmatpush1.xpose.msra.mxu0 0.0
        %3304 = vmatprep.subr.mxu0 0.0
        %3305 = vmatpush1.xpose.msra.mxu0 0.0
        %3306 = vmatprep.mubr.f32.mxu0 0.0
        %3307 = vmatmul.mubr.f32.gmra.mrb[0].mxu0 %v3240
        %v3308 = vpop.f32.mrb[0].mxu0
        %v3309 = vadd.f32 0.0, %v3308
        %v3310 = vpop.f32.mrb[0].mxu0
        %3311 = vdwg.mxu0
        %3313 = vset.pattern.permute.xlu0 0
        %3314 = vperm.xlu0 %3313, %v3236
        %v3315 = vpop.permute.xlu0 %3314
        %v3317 = vlaneseq
        %v3318 = vshrl.u32 %v3317, 7
        %v3319 = vsub.s32 0, %v3318
        %v3320 = vrot.slane %v3309, %v3319
        %v3321 = vadd.f32 %v3315, %v3320
        %vm3322 = vcmp.gt.f32.partialorder %v3321, 0.0
        %v3323 = vmul.f32 %v3321, 0.1
        %v3324 = vsel %vm3322, %v3321, %v3323
        %v3325 = vsel %vm2174, %v3324, -9e+15
        %v3326 = vsel %vm1004, %v3325, -inf
        %3327 = vmax.xlane.f32.xlu0 %v3326
        %v3328 = vpop.xlane.xlu0 %3327
        %v3329 = vsub.f32 %v3325, %v3328
        %v3330 = vmul.f32 %v3329, 1.442695
        %v3331 = vpow.pop %v3330
        %v3332 = vsel %vm1004, %v3331, 0.0
        %3333 = vadd.xlane.f32.xlu0 %v3332
        %v3334 = vpop.xlane.xlu0 %3333
        %v3335 = vrcp.pop %v3334
        %v3336 = vmul.f32 %v3331, %v3335
        %v3338 = vsel %vm1004, %v3336, 0
        %3340 = vmatprep.subr.mxu0 0.0
        %3341 = vmatpush1.msra.mxu0 %v3163
        %3342 = vmatprep.subr.mxu0 0.0
        %3343 = vmatpush1.msra.mxu0 0.0
        %3344 = vmatprep.subr.mxu0 0.0
        %3345 = vmatpush1.msra.mxu0 0.0
        %3346 = vmatprep.subr.mxu0 0.0
        %3347 = vmatpush1.msra.mxu0 0.0
        %3348 = vmatprep.subr.mxu0 0.0
        %3349 = vmatpush1.msra.mxu0 0.0
        %3350 = vmatprep.subr.mxu0 0.0
        %3351 = vmatpush1.msra.mxu0 0.0
        %3352 = vmatprep.subr.mxu0 0.0
        %3353 = vmatpush1.msra.mxu0 0.0
        %3354 = vmatprep.subr.mxu0 0.0
        %3355 = vmatpush1.msra.mxu0 0.0
        %3356 = vmatprep.subr.mxu0 0.0
        %3357 = vmatpush1.msra.mxu0 0.0
        %3358 = vmatprep.subr.mxu0 0.0
        %3359 = vmatpush1.msra.mxu0 0.0
        %3360 = vmatprep.subr.mxu0 0.0
        %3361 = vmatpush1.msra.mxu0 0.0
        %3362 = vmatprep.subr.mxu0 0.0
        %3363 = vmatpush1.msra.mxu0 0.0
        %3364 = vmatprep.subr.mxu0 0.0
        %3365 = vmatpush1.msra.mxu0 0.0
        %3366 = vmatprep.subr.mxu0 0.0
        %3367 = vmatpush1.msra.mxu0 0.0
        %3368 = vmatprep.subr.mxu0 0.0
        %3369 = vmatpush1.msra.mxu0 0.0
        %3370 = vmatprep.subr.mxu0 0.0
        %3371 = vmatpush1.msra.mxu0 0.0
        %3372 = vmatprep.subr.mxu0 0.0
        %3373 = vmatpush1.msra.mxu0 0.0
        %3374 = vmatprep.subr.mxu0 0.0
        %3375 = vmatpush1.msra.mxu0 0.0
        %3376 = vmatprep.subr.mxu0 0.0
        %3377 = vmatpush1.msra.mxu0 0.0
        %3378 = vmatprep.subr.mxu0 0.0
        %3379 = vmatpush1.msra.mxu0 0.0
        %3380 = vmatprep.subr.mxu0 0.0
        %3381 = vmatpush1.msra.mxu0 0.0
        %3382 = vmatprep.subr.mxu0 0.0
        %3383 = vmatpush1.msra.mxu0 0.0
        %3384 = vmatprep.subr.mxu0 0.0
        %3385 = vmatpush1.msra.mxu0 0.0
        %3386 = vmatprep.subr.mxu0 0.0
        %3387 = vmatpush1.msra.mxu0 0.0
        %3388 = vmatprep.subr.mxu0 0.0
        %3389 = vmatpush1.msra.mxu0 0.0
        %3390 = vmatprep.subr.mxu0 0.0
        %3391 = vmatpush1.msra.mxu0 0.0
        %3392 = vmatprep.subr.mxu0 0.0
        %3393 = vmatpush1.msra.mxu0 0.0
        %3394 = vmatprep.subr.mxu0 0.0
        %3395 = vmatpush1.msra.mxu0 0.0
        %3396 = vmatprep.subr.mxu0 0.0
        %3397 = vmatpush1.msra.mxu0 0.0
        %3398 = vmatprep.subr.mxu0 0.0
        %3399 = vmatpush1.msra.mxu0 0.0
        %3400 = vmatprep.subr.mxu0 0.0
        %3401 = vmatpush1.msra.mxu0 0.0
        %3402 = vmatprep.subr.mxu0 0.0
        %3403 = vmatpush1.msra.mxu0 0.0
        %3404 = vmatprep.mubr.f32.mxu0 0.0
        %3405 = vmatmul.mubr.f32.gmra.mrb[0].mxu0 %v3338
        %v3406 = vpop.f32.mrb[0].mxu0
        %v3407 = vadd.f32 0.0, %v3406
        %v3408 = vpop.f32.mrb[0].mxu0
        %3409 = vdwg.mxu0
        %v3410 = vmul.f32 %v3407, %v3407
        %v3411 = vsel %vm1362, %v3410, 0.0
        %3412 = vadd.xlane.f32.xlu0 %v3411
        %v3413 = vpop.xlane.xlu0 %3412
        %v3414 = vrsqrt.pop %v3413
        %v3415 = vmul.f32 %v3413, %v3414
        %vm3416 = vcmp.eq.f32.partialorder %v3413, inf
        %v3417 = vsel %vm3416, %v3413, %v3415
        %vm3418 = vcmp.eq.f32.partialorder %v3413, 0.0
        %v3419 = vand.u32 %v3413, 2147483648
        %v3420 = vsel %vm3418, %v3419, %v3417
        %v3421 = vmax.f32 %v3420, 1e-15
        %vm3422 = vcmp.gt.f32.partialorder %v3421, 0.996
        %v3423 = vrcp.pop %v3421
        %v3424 = vmul.f32 0.996, %v3423
        %v3425 = vsel %vm3422, %v3424, 1.0
        %v3426 = vmin.f32 %v3421, 0.996
        %v3427 = vmax.f32 %v3426, -0.9999999
        %v3428 = vmin.f32 %v3427, 0.9999999
        %v3429 = vadd.f32 %v3428, 1.0
        %v3430 = vlog2.pop %v3429
        %v3431 = vmul.f32 %v3430, 0.6931472
        %v3432 = vsub.f32 1.0, %v3428
        %v3433 = vlog2.pop %v3432
        %v3434 = vmul.f32 %v3433, 0.6931472
        %v3435 = vsub.f32 %v3431, %v3434
        %v3436 = vmul.f32 %v3435, 0.5
        %v3437 = vmul.f32 %v3425, %v3436
        %v3438 = vrcp.pop %v3426
        %v3439 = vmul.f32 %v3437, %v3438
        %v3440 = vmul.f32 %v3407, %v3439
        %v3441 = vmul.f32 %v3440, %v3440
        %v3442 = vsel %vm1362, %v3441, 0.0
        %3443 = vadd.xlane.f32.xlu0 %v3442
        %v3444 = vpop.xlane.xlu0 %3443
        %v3445 = vrsqrt.pop %v3444
        %v3446 = vmul.f32 %v3444, %v3445
        %vm3447 = vcmp.eq.f32.partialorder %v3444, inf
        %v3448 = vsel %vm3447, %v3444, %v3446
        %vm3449 = vcmp.eq.f32.partialorder %v3444, 0.0
        %v3450 = vand.u32 %v3444, 2147483648
        %v3451 = vsel %vm3449, %v3450, %v3448
        %v3452 = vmax.f32 %v3451, 1e-15
        %vm3453 = vcmp.gt.f32.partialorder %v3452, 0.996
        %v3454 = vrcp.pop %v3452
        %v3455 = vmul.f32 0.996, %v3454
        %v3456 = vsel %vm3453, %v3455, 1.0
        %v3457 = vmin.f32 %v3452, 0.996
        %v3458 = vmax.f32 %v3457, -0.9999999
        %v3459 = vmin.f32 %v3458, 0.9999999
        %v3460 = vadd.f32 %v3459, 1.0
        %v3461 = vlog2.pop %v3460
        %v3462 = vmul.f32 %v3461, 0.6931472
        %v3463 = vsub.f32 1.0, %v3459
        %v3464 = vlog2.pop %v3463
        %v3465 = vmul.f32 %v3464, 0.6931472
        %v3466 = vsub.f32 %v3462, %v3465
        %v3467 = vmul.f32 %v3466, 0.5
        %v3468 = vmul.f32 %v3456, %v3467
        %v3469 = vrcp.pop %v3457
        %v3470 = vmul.f32 %v3468, %v3469
        %v3471 = vmul.f32 %v3440, %v3470
        %vm3472 = vcmp.gt.f32.partialorder %v3471, 0.0
        %v3473 = vmin.f32 %v3471, 0.0
        %v3474 = vmul.f32 %v3473, 1.442695
        %v3475 = vpow.pop %v3474
        %v3476 = vsub.f32 %v3475, 1.0
        %v3477 = vsel %vm3472, %v3471, %v3476
        %v3478 = vadd.f32 %v3471, 0.94247776
        %v3479 = vand.u32 2147483647, %v3478
        %vm3480 = vcmp.le.f32.partialorder %v3479, 0.7853982
        %vm3481 = vcmp.lt.s32.totalorder %v3478, 0
        %v3482 = vand.u32 %v3478, 2139095040
        %v3483 = vshrl.u32 %v3482, 23
        %v3484 = vsub.s32 %v3483, 127
        %v3485 = vand.u32 2147483647, %v3478
        %v3486 = vand.u32 %v3485, 8388607
        %v3487 = vor.u32 %v3486, 8388608
        %v3488 = vsub.s32 0, %v3487
        %v3489 = vadd.s32 %v3484, 1
        %vm3490 = vcmp.gt.s32.totalorder %v3489, 0
        %v3491 = vsel %vm3490, %v3489, 0
        %v3492 = vshrl.u32 %v3491, 5
        %v3493 = vand.u32 %v3491, 31
        %v3494 = vsub.s32 32, %v3493
        %v3495 = vshrl.u32 683565275, %v3494
        %v3496 = vshll.u32 683565275, %v3493
        %v3497 = vshrl.u32 2475754826, %v3494
        %v3498 = vor.u32 %v3496, %v3497
        %v3499 = vshll.u32 2475754826, %v3493
        %v3500 = vshrl.u32 2131351028, %v3494
        %v3501 = vor.u32 %v3499, %v3500
        %v3502 = vshll.u32 2131351028, %v3493
        %v3503 = vshrl.u32 2102212464, %v3494
        %v3504 = vor.u32 %v3502, %v3503
        %v3505 = vshll.u32 2102212464, %v3493
        %v3506 = vshrl.u32 920167782, %v3494
        %v3507 = vor.u32 %v3505, %v3506
        %v3508 = vshll.u32 920167782, %v3493
        %v3509 = vshrl.u32 1326507024, %v3494
        %v3510 = vor.u32 %v3508, %v3509
        %vm3511 = vcmp.lt.s32.totalorder %v3492, 1
        %vm3512 = vcmp.lt.s32.totalorder %v3492, 2
        %vm3513 = vcmp.lt.s32.totalorder %v3492, 3
        %vm3514 = vcmp.lt.s32.totalorder %v3492, 4
        %v3515 = vsel %vm3511, %v3495, %v3498
        %v3516 = vsel %vm3514, %v3504, 2102212464
        %v3517 = vsel %vm3513, %v3501, %v3516
        %v3518 = vsel %vm3512, %v3515, %v3517
        %v3519 = vsel %vm3511, %v3498, %v3501
        %v3520 = vsel %vm3514, %v3507, 920167782
        %v3521 = vsel %vm3513, %v3504, %v3520
        %v3522 = vsel %vm3512, %v3519, %v3521
        %v3523 = vsel %vm3511, %v3501, %v3504
        %v3524 = vsel %vm3514, %v3510, 1326507024
        %v3525 = vsel %vm3513, %v3507, %v3524
        %v3526 = vsel %vm3512, %v3523, %v3525
        %v3527 = vshll.u32 %v3487, 8
        %v3528 = vmul.u32.u64.compose %v3527, %v3526
        %v3529 = vextract.low.u32 %v3528
        %v3530 = vextract.high.u32 %v3528
        %v3531 = vmul.u32.u64.compose %v3527, %v3522
        %v3532 = vextract.low.u32 %v3531
        %v3533 = vextract.high.u32 %v3531
        %v3534 = vmul.u32 %v3527, %v3518
        %v3535 = vadd.s32 %v3530, %v3532
        %vm3536 = vc.u32 %v3530, %v3532
        %v3537 = vadd.s32 %v3533, 1
        %v3538 = vsel %vm3536, %v3537, %v3533
        %v3539 = vadd.s32 %v3534, %v3538
        %v3540 = vadd.s32 %v3539, 536870912
        %v3541 = vshrl.u32 %v3540, 30
        %v3542 = vshll.u32 %v3541, 30
        %v3543 = vsub.s32 %v3539, %v3542
        %vm3544 = vcmp.lt.s32.totalorder %v3543, 0
        %v3545 = vsub.s32 0, %v3543
        %v3546 = vsel %vm3544, %v3545, %v3543
        %v3547 = vclz %v3546
        %v3548 = vsub.s32 %v3547, 2
        %vm3549 = vcmp.gt.s32.totalorder 0, %v3548
        %v3550 = vsel %vm3549, 0, %v3548
        %v3551 = vsub.s32 32, %v3550
        %v3552 = vshll.u32 %v3543, %v3550
        %v3553 = vshrl.u32 %v3535, %v3551
        %v3554 = vor.u32 %v3552, %v3553
        %v3555 = vsub.s32 4294967266, %v3550
        %v3556 = vadd.s32 %v3555, 127
        %v3557 = vshll.u32 %v3556, 23
        %v3558 = vor.u32 4788187, %v3557
        %v3559 = vand.u32 2147483647, %v3558
        %v3561 = vcvt.s32.f32 %v3554
        %v3562 = vmul.f32 %v3561, %v3559
        %v3563 = vxor.u32 %v3562, 2147483648
        %v3564 = vsel %vm3481, %v3563, %v3562
        %v3565 = vsub.s32 4, %v3541
        %v3566 = vsel %vm3481, %v3565, %v3541
        %v3567 = vsel %vm3480, %v3478, %v3564
        %v3568 = vsel %vm3480, 0, %v3566
        %v3569 = vcosq.f32.pop %v3567
        %v3570 = vsinq.f32.pop %v3567
        %vm3571 = vweird.f32 %v3478
        %v3572 = vand.u32 %v3568, 3
        %vm3573 = vcmp.lt.s32.totalorder %v3572, 2
        %vm3574 = vcmp.eq.s32.totalorder %v3572, 0
        %v3575 = vxor.u32 %v3570, 2147483648
        %v3576 = vsel %vm3574, %v3569, %v3575
        %vm3577 = vcmp.eq.s32.totalorder %v3572, 2
        %v3578 = vxor.u32 %v3569, 2147483648
        %v3579 = vsel %vm3577, %v3578, %v3570
        %v3580 = vsel %vm3573, %v3576, %v3579
        %v3581 = vsel %vm3571, nan, %v3580
        %v3582 = vmul.f32 %v3581, 0.5
        %v3583 = vadd.f32 %v3477, %v3582
        %v3584 = vmul.f32 %v3583, %v3583
        %v3585 = vsel %vm1362, %v3584, 0.0
        %3586 = vadd.xlane.f32.xlu0 %v3585
        %v3587 = vpop.xlane.xlu0 %3586
        %v3588 = vrsqrt.pop %v3587
        %v3589 = vmul.f32 %v3587, %v3588
        %vm3590 = vcmp.eq.f32.partialorder %v3587, inf
        %v3591 = vsel %vm3590, %v3587, %v3589
        %vm3592 = vcmp.eq.f32.partialorder %v3587, 0.0
        %v3593 = vand.u32 %v3587, 2147483648
        %v3594 = vsel %vm3592, %v3593, %v3591
        %v3595 = vadd.f32 %v3594, 1e-07
        %v3596 = vrcp.pop %v3595
        %v3597 = vmul.f32 %v3583, %v3596
        %v3598 = vmul.f32 %v2149, %v2149
        %v3599 = vsel %vm1362, %v3598, 0.0
        %3600 = vadd.xlane.f32.xlu0 %v3599
        %v3601 = vpop.xlane.xlu0 %3600
        %v3602 = vrsqrt.pop %v3601
        %v3603 = vmul.f32 %v3601, %v3602
        %vm3604 = vcmp.eq.f32.partialorder %v3601, inf
        %v3605 = vsel %vm3604, %v3601, %v3603
        %vm3606 = vcmp.eq.f32.partialorder %v3601, 0.0
        %v3607 = vand.u32 %v3601, 2147483648
        %v3608 = vsel %vm3606, %v3607, %v3605
        %v3609 = vadd.f32 %v3608, 1e-07
        %v3610 = vrcp.pop %v3609
        %v3611 = vmul.f32 %v2149, %v3610
        %v3613 = vsel %vm1362, %v3597, 0
        %v3616 = vsel %vm1362, %v3611, 0
        %3618 = vmatprep.subr.mxu0 0.0
        %3619 = vmatpush1.xpose.msra.mxu0 %v3616
        %3620 = vmatprep.subr.mxu0 0.0
        %3621 = vmatpush1.xpose.msra.mxu0 0.0
        %3622 = vmatprep.subr.mxu0 0.0
        %3623 = vmatpush1.xpose.msra.mxu0 0.0
        %3624 = vmatprep.subr.mxu0 0.0
        %3625 = vmatpush1.xpose.msra.mxu0 0.0
        %3626 = vmatprep.subr.mxu0 0.0
        %3627 = vmatpush1.xpose.msra.mxu0 0.0
        %3628 = vmatprep.subr.mxu0 0.0
        %3629 = vmatpush1.xpose.msra.mxu0 0.0
        %3630 = vmatprep.subr.mxu0 0.0
        %3631 = vmatpush1.xpose.msra.mxu0 0.0
        %3632 = vmatprep.subr.mxu0 0.0
        %3633 = vmatpush1.xpose.msra.mxu0 0.0
        %3634 = vmatprep.subr.mxu0 0.0
        %3635 = vmatpush1.xpose.msra.mxu0 0.0
        %3636 = vmatprep.subr.mxu0 0.0
        %3637 = vmatpush1.xpose.msra.mxu0 0.0
        %3638 = vmatprep.subr.mxu0 0.0
        %3639 = vmatpush1.xpose.msra.mxu0 0.0
        %3640 = vmatprep.subr.mxu0 0.0
        %3641 = vmatpush1.xpose.msra.mxu0 0.0
        %3642 = vmatprep.subr.mxu0 0.0
        %3643 = vmatpush1.xpose.msra.mxu0 0.0
        %3644 = vmatprep.subr.mxu0 0.0
        %3645 = vmatpush1.xpose.msra.mxu0 0.0
        %3646 = vmatprep.subr.mxu0 0.0
        %3647 = vmatpush1.xpose.msra.mxu0 0.0
        %3648 = vmatprep.subr.mxu0 0.0
        %3649 = vmatpush1.xpose.msra.mxu0 0.0
        %3650 = vmatprep.subr.mxu0 0.0
        %3651 = vmatpush1.xpose.msra.mxu0 0.0
        %3652 = vmatprep.subr.mxu0 0.0
        %3653 = vmatpush1.xpose.msra.mxu0 0.0
        %3654 = vmatprep.subr.mxu0 0.0
        %3655 = vmatpush1.xpose.msra.mxu0 0.0
        %3656 = vmatprep.subr.mxu0 0.0
        %3657 = vmatpush1.xpose.msra.mxu0 0.0
        %3658 = vmatprep.subr.mxu0 0.0
        %3659 = vmatpush1.xpose.msra.mxu0 0.0
        %3660 = vmatprep.subr.mxu0 0.0
        %3661 = vmatpush1.xpose.msra.mxu0 0.0
        %3662 = vmatprep.subr.mxu0 0.0
        %3663 = vmatpush1.xpose.msra.mxu0 0.0
        %3664 = vmatprep.subr.mxu0 0.0
        %3665 = vmatpush1.xpose.msra.mxu0 0.0
        %3666 = vmatprep.subr.mxu0 0.0
        %3667 = vmatpush1.xpose.msra.mxu0 0.0
        %3668 = vmatprep.subr.mxu0 0.0
        %3669 = vmatpush1.xpose.msra.mxu0 0.0
        %3670 = vmatprep.subr.mxu0 0.0
        %3671 = vmatpush1.xpose.msra.mxu0 0.0
        %3672 = vmatprep.subr.mxu0 0.0
        %3673 = vmatpush1.xpose.msra.mxu0 0.0
        %3674 = vmatprep.subr.mxu0 0.0
        %3675 = vmatpush1.xpose.msra.mxu0 0.0
        %3676 = vmatprep.subr.mxu0 0.0
        %3677 = vmatpush1.xpose.msra.mxu0 0.0
        %3678 = vmatprep.subr.mxu0 0.0
        %3679 = vmatpush1.xpose.msra.mxu0 0.0
        %3680 = vmatprep.subr.mxu0 0.0
        %3681 = vmatpush1.xpose.msra.mxu0 0.0
        %3682 = vmatprep.mubr.f32.mxu0 0.0
        %3683 = vmatmul.mubr.f32.gmra.mrb[0].mxu0 %v3613
        %v3684 = vpop.f32.mrb[0].mxu0
        %v3685 = vadd.f32 0.0, %v3684
        %v3686 = vpop.f32.mrb[0].mxu0
        %3687 = vdwg.mxu0
        %3688 = vst.msk [vmem:[%s663] sm:$0xff] %vm1004, %v3685
        %3689 = vst.msk [vmem:[%s670] sm:$0xff] %vm1362, %v3611
        %3690 = vst.msk [vmem:[%s677] sm:$0xff] %vm1362, %v3597
        %s3691 = sand.u32 %s444, 1
        %s3692 = scalar_lea.sflag [#allocation3], %s3691
        %s3693 = sand.u32 %s444, 1
        %s3694 = smul.addr %s3693, 8
        %s3695 = scalar_lea.vmem [#allocation2], %s3694
        %s3696 = sand.u32 %s38, 1
        %s3697 = scalar_lea.sflag [#allocation5], %s3696
        %s3698 = sand.u32 %s470, 1
        %s3699 = smul.addr %s3698, 8
        %s3700 = scalar_lea.vmem [#allocation4], %s3699
        %s3701 = sand.u32 %s38, 1
        %s3702 = scalar_lea.sflag [#allocation5], %s3701
        %s3703 = sand.u32 %s496, 1
        %s3704 = smul.addr %s3703, 8
        %s3705 = scalar_lea.vmem [#allocation6], %s3704
        // Predicated region
        $region93: #{coupling_forward.1} parent=91 // pred_check
          %p3706 = pneg %p454
        $region94: #{coupling_forward.1} parent=91 // pred_check_branch
          %3708 = sbr.rel (%p3706) target = $region96
        $region95: #{coupling_forward.1} parent=91 // pred_region
          %s3710 = ssub.s32 128, 128
          %3711 = vsyncadd %s3692, %s3710
          %s3712 = smul.addr %s38, 128
          %s3713 = scalar_lea.hbm %s18, %s3712
          %s3715 = sshll.u32 %s3695, 4
          %s3716 = int_to_ptr.vmem [resolvable:$true] %s3715
          %3718 = dma.vmem_to_hbm [thread:$0]  %s3716, 128, %s3713, %s3692
        $region96: #{coupling_forward.1} parent=91 // pred_fallthru
          _
        // Predicated region
        $region97: #{coupling_forward.1} parent=91 // pred_check
          %p3719 = pneg %p480
        $region98: #{coupling_forward.1} parent=91 // pred_check_branch
          %3721 = sbr.rel (%p3719) target = $region100
        $region99: #{coupling_forward.1} parent=91 // pred_region
          %s3723 = ssub.s32 128, 128
          %3724 = vsyncadd %s3697, %s3723
          %s3725 = smul.addr %s38, 128
          %s3726 = scalar_lea.hbm %s19, %s3725
          %s3728 = sshll.u32 %s3700, 4
          %s3729 = int_to_ptr.vmem [resolvable:$true] %s3728
          %3731 = dma.vmem_to_hbm [thread:$0]  %s3729, 128, %s3726, %s3697
        $region100: #{coupling_forward.1} parent=91 // pred_fallthru
          _
        // Predicated region
        $region101: #{coupling_forward.1} parent=91 // pred_check
          %p3732 = pneg %p506
        $region102: #{coupling_forward.1} parent=91 // pred_check_branch
          %3734 = sbr.rel (%p3732) target = $region104
        $region103: #{coupling_forward.1} parent=91 // pred_region
          %s3736 = ssub.s32 128, 128
          %3737 = vsyncadd %s3702, %s3736
          %s3738 = smul.addr %s38, 128
          %s3739 = scalar_lea.hbm %s20, %s3738
          %s3741 = sshll.u32 %s3705, 4
          %s3742 = int_to_ptr.vmem [resolvable:$true] %s3741
          %3744 = dma.vmem_to_hbm [thread:$0]  %s3742, 128, %s3739, %s3702
        $region104: #{coupling_forward.1} parent=91 // pred_fallthru
          _
      $region92: #{coupling_forward.1} parent=5 // pred_fallthru
        _
      %p3745 = scmp.le.s32.totalorder 2, %s33
      // Predicated region
      $region105: #{coupling_forward.1} parent=5 // pred_check
        %p3746 = pneg %p3745
      $region106: #{coupling_forward.1} parent=5 // pred_check_branch
        %3748 = sbr.rel (%p3746) target = $region108
      $region107: #{coupling_forward.1} parent=5 // pred_region
        %s3749 = ssub.s32 %s33, 2
        // Predicated region
        $region109: #{coupling_forward.1} parent=107 // pred_check
          %p3750 = pneg %p460
        $region110: #{coupling_forward.1} parent=107 // pred_check_branch
          %3752 = sbr.rel (%p3750) target = $region112
        $region111: #{coupling_forward.1} parent=107 // pred_region
          %s3753 = sand.u32 %s445, 1
          %s3754 = scalar_lea.sflag [#allocation3], %s3753
          %s3755 = sand.u32 %s445, 1
          %s3756 = smul.addr %s3755, 8
          %s3757 = scalar_lea.vmem [#allocation2], %s3756
          %3758 = dma.done %s3754, 128
        $region112: #{coupling_forward.1} parent=107 // pred_fallthru
          _
        // Predicated region
        $region113: #{coupling_forward.1} parent=107 // pred_check
          %p3759 = pneg %p486
        $region114: #{coupling_forward.1} parent=107 // pred_check_branch
          %3761 = sbr.rel (%p3759) target = $region116
        $region115: #{coupling_forward.1} parent=107 // pred_region
          %s3762 = sand.u32 %s39, 1
          %s3763 = scalar_lea.sflag [#allocation5], %s3762
          %s3764 = sand.u32 %s471, 1
          %s3765 = smul.addr %s3764, 8
          %s3766 = scalar_lea.vmem [#allocation4], %s3765
          %3767 = dma.done %s3763, 128
        $region116: #{coupling_forward.1} parent=107 // pred_fallthru
          _
        // Predicated region
        $region117: #{coupling_forward.1} parent=107 // pred_check
          %p3768 = pneg %p512
        $region118: #{coupling_forward.1} parent=107 // pred_check_branch
          %3770 = sbr.rel (%p3768) target = $region120
        $region119: #{coupling_forward.1} parent=107 // pred_region
          %s3771 = sand.u32 %s39, 1
          %s3772 = scalar_lea.sflag [#allocation5], %s3771
          %s3773 = sand.u32 %s497, 1
          %s3774 = smul.addr %s3773, 8
          %s3775 = scalar_lea.vmem [#allocation6], %s3774
          %3776 = dma.done %s3772, 128
        $region120: #{coupling_forward.1} parent=107 // pred_fallthru
          _
      $region108: #{coupling_forward.1} parent=5 // pred_fallthru
        _
    $region6: #{coupling_forward.1} parent=1 // loop_footer
      %s37 = sadd.s32 1, %s33
    $region7: #{coupling_forward.1} parent=1 // loop_footer_branch
      %32 = sbr.rel target = $region3
    $region8: #{coupling_forward.1} parent=1 // loop_exit
      _
    %3777 = vsyncpa [#allocation3], 1
    %s3778 = scalar_lea.sflag [#allocation3], 1
    %3779 = vsyncpa %s3778, 1
    %3780 = vsyncpa [#allocation5], 1
    %s3781 = scalar_lea.sflag [#allocation5], 1
    %3782 = vsyncpa %s3781, 1

</llo_original>
